<compile_context>
chip_gen: v5e
topology: v5e:2x2
jax: 0.10.0
libtpu: 0.0.40
codegen_flags: <defaults>
</compile_context>

<pallas_src>
import functools
import itertools
import math

import numpy as np
import jax
import jax.numpy as jnp
from jax.experimental import pallas as pl
from jax.experimental.pallas import tpu as pltpu

EPS = 1e-6
SQRT2 = math.sqrt(2.0)


# -----------------------------------------------------------------------------
# Clifford algebra tables for Cl(3,0): blades ordered by grade
#   [1, e1, e2, e3, e12, e13, e23, e123]  -> subspaces (1, 3, 3, 1)
# -----------------------------------------------------------------------------
def _blade_product(a, b, metric):
    arr = list(a) + list(b)
    sign = 1
    changed = True
    while changed:                       # bubble sort, count swaps for the sign
        changed = False
        for i in range(len(arr) - 1):
            if arr[i] > arr[i + 1]:
                arr[i], arr[i + 1] = arr[i + 1], arr[i]
                sign = -sign
                changed = True
    out, i = [], 0
    while i < len(arr):                  # contract repeated generators
        if i + 1 < len(arr) and arr[i] == arr[i + 1]:
            sign *= metric[arr[i] - 1]
            i += 2
        else:
            out.append(arr[i])
            i += 1
    return sign, tuple(out)


def build_algebra(metric):
    d = len(metric)
    blades, subspaces = [()], [1]
    for g in range(1, d + 1):
        combs = list(itertools.combinations(range(1, d + 1), g))
        blades += combs
        subspaces.append(len(combs))
    nb = len(blades)
    index = {b: i for i, b in enumerate(blades)}
    cayley = np.zeros((nb, nb, nb), np.float32)
    for i, bi in enumerate(blades):
        for k, bk in enumerate(blades):
            sign, res = _blade_product(bi, bk, metric)
            cayley[i, index[res], k] = float(sign)     # (x*y)_j = sum x_i C[i,j,k] y_k
    starts = np.cumsum([0] + subspaces)
    nsub = d + 1
    paths = np.zeros((nsub, nsub, nsub), bool)         # geometric_product_paths
    for gi in range(nsub):
        for gj in range(nsub):
            for gk in range(nsub):
                blk = cayley[starts[gi]:starts[gi + 1],
                             starts[gj]:starts[gj + 1],
                             starts[gk]:starts[gk + 1]]
                paths[gi, gj, gk] = bool(np.any(blk != 0))
    onehot = np.zeros((nsub, nb), np.float32)          # grade membership (reference only)
    for g in range(nsub):
        onehot[g, starts[g]:starts[g + 1]] = 1.0
    return cayley, np.array(subspaces), paths, onehot


METRIC = [1.0, 1.0, 1.0]
CAYLEY, SUBSPACES, PRODUCT_PATHS, GRADE_ONEHOT = build_algebra(METRIC)
DIM = len(METRIC)                 # 3
NB = CAYLEY.shape[0]              # 8 blades
NSUB = DIM + 1                    # 4 grades

_STARTS = np.concatenate(([0], np.cumsum(SUBSPACES)))
GRADE_SLICES = tuple((int(_STARTS[g]), int(SUBSPACES[g])) for g in range(NSUB))


def _nonzero_triples(cayley):
    """All (i, j, k) with cayley[i, j, k] != 0 (64 entries for Cl(3,0)), sorted by j."""
    trips = []
    for i in range(cayley.shape[0]):
        for k in range(cayley.shape[2]):
            for j in np.nonzero(cayley[i, :, k])[0]:
                trips.append((i, int(j), k))
    trips.sort(key=lambda t: (t[1], t[0], t[2]))   # group by output blade
    return tuple(trips)


TRIPLES = _nonzero_triples(CAYLEY)
NT = len(TRIPLES)                 # 64


def _terms_by_output():
    """Per output blade j: (t0, ((i,k), ...)) with coefficient rows contiguous at t0."""
    table = []
    for j in range(NB):
        ts = [(t, i, k) for t, (i, jj, k) in enumerate(TRIPLES) if jj == j]
        t0 = ts[0][0]
        assert [t for (t, _, _) in ts] == list(range(t0, t0 + len(ts)))
        table.append((t0, tuple((i, k) for (_, i, k) in ts)))
    return tuple(table)


TERMS_BY_J = _terms_by_output()


def _round_up(x, m):
    return (x + m - 1) // m * m


# -----------------------------------------------------------------------------
# Pallas kernel: one batch tile per grid step, blade-major layout (NB, TB, F).
# -----------------------------------------------------------------------------
def _make_sgp_kernel(TB, F, RB, precision):
    """Working tile layouts:
      x_ref, o_ref : (NB, TB, F)      blade-major, features on lanes
      wf_ref       : (NSUB, F, 2F)    per-grade fused weight [ left/sqrt2 | right ]
      bias_ref     : (1, F)           left bias (scalar blade), /sqrt(2) folded
      sa_ref       : (NSUB, F)        sigmoid(a) gates (hoisted out of the kernel)
      cw_ref       : (NT, F)          sign * product-weight / sqrt(2), grouped by output blade
      y_ref        : (NB, TB, F)      VMEM scratch: normalized linear_right output
    """
    n_chunks = TB // RB

    def kernel(x_ref, wf_ref, bias_ref, sa_ref, cw_ref, o_ref, y_ref):
        # ---- phase 1: fused (left | right) MVLinear per grade + grade-wise norm ----
        for g, (start, size) in enumerate(GRADE_SLICES):
            if size == 1:
                xg = x_ref[start]                                        # (TB, F)
            else:                                                        # fold blades into M
                xg = jnp.concatenate([x_ref[start + b] for b in range(size)], axis=0)
            z = jnp.dot(xg, wf_ref[g], precision=precision,
                        preferred_element_type=jnp.float32)              # (size*TB, 2F)
            left_all = z[:, :F]
            right_all = z[:, F:]
            rights = [right_all[b * TB:(b + 1) * TB, :] for b in range(size)]

            ssq = rights[0] * rights[0]
            for b in range(1, size):
                ssq = ssq + rights[b] * rights[b]
            nv = sa_ref[g:g + 1, :] * (jnp.sqrt(ssq) - 1.0) + 1.0        # (TB, F)
            inv = pl.reciprocal(nv + EPS, approx=False)

            for b in range(size):
                y_ref[start + b] = rights[b] * inv
                lo = left_all[b * TB:(b + 1) * TB, :]
                if start + b == 0:                                       # bias on scalar blade
                    lo = lo + bias_ref[...]
                o_ref[start + b] = lo.astype(o_ref.dtype)

        # ---- phase 2: weighted geometric product, output-blade-major row chunks ----
        def do_chunk(r):
            xs = [x_ref[i, pl.ds(r, RB), :] for i in range(NB)]          # 8 x (RB, F)
            ys = [y_ref[k, pl.ds(r, RB), :] for k in range(NB)]
            for j in range(NB):
                t0, iks = TERMS_BY_J[j]
                cblk = cw_ref[t0:t0 + len(iks), :]                       # dense (8, F) block
                acc = o_ref[j, pl.ds(r, RB), :].astype(jnp.float32)      # left(+bias) staged
                for tl, (i, k) in enumerate(iks):
                    acc = acc + (xs[i] * ys[k]) * cblk[tl:tl + 1, :]
                o_ref[j, pl.ds(r, RB), :] = acc.astype(o_ref.dtype)      # single store per j

        if n_chunks <= 16:
            for c in range(n_chunks):
                do_chunk(c * RB)
        else:                                   # large tiles: keep the IR small, loop visibly
            @pl.loop(0, n_chunks)
            def _(c):
                do_chunk(pl.multiple_of(c * RB, RB))

    return kernel


# -----------------------------------------------------------------------------
# Generation-aware sizing helpers.
# -----------------------------------------------------------------------------
def _vmem_capacity_bytes():
    try:
        return int(pltpu.get_tpu_info().vmem_capacity_bytes)
    except Exception:
        return 64 << 20          # conservative fallback = v7x per-TensorCore VMEM


def _choose_tile_b(B, F, cap_bytes):
    budget = int(0.55 * cap_bytes)
    fixed = 4 * (2 * NSUB * F * 2 * F + 2 * (NT + NSUB + 1) * F)   # weights + tables (dbl buf)
    per_row = 4 * 5 * NB * F                                       # x(2) + out(2) + y(1)
    max_tb = (budget - fixed) // per_row if budget > fixed else 8
    max_tb = int(max(8, min(512, max_tb)))
    max_tb -= max_tb % 8
    B8 = _round_up(max(int(B), 1), 8)
    # >= 2 grid steps whenever possible so both v7x TensorCores get work.
    cap = min(max_tb, B8 // 2) if B8 >= 16 else B8
    cap = max(8, cap - cap % 8)
    tb = 8
    for t in range(cap, 7, -8):                 # prefer a divisor of B8 -> no tail padding
        if B8 % t == 0:
            tb = t
            break
    if tb < min(cap, 64) and B8 > 64:           # rather pad the tail than run tiny tiles
        tb = cap
    return tb


# -----------------------------------------------------------------------------
# Wrappers (pure / jittable; no runtime capability ladders, no device syncs).
# -----------------------------------------------------------------------------
def steerable_geometric_product_blade_major(x_nbf, wf, bias_row, saT, coef, *,
                                            precision=jax.lax.Precision.HIGHEST,
                                            tile_b=None):
    """Canonical blade-major entry point: x_nbf is (NB, B, F); returns (NB, B, F)."""
    nb, B, F = x_nbf.shape
    assert nb == NB
    cap_bytes = _vmem_capacity_bytes()
    if tile_b is None:
        TB = _choose_tile_b(B, F, cap_bytes)
    else:
        TB = max(8, min(_round_up(int(tile_b), 8), _round_up(B, 8)))
    Bp = _round_up(B, TB)
    xt = x_nbf if Bp == B else jnp.pad(x_nbf, ((0, 0), (0, Bp - B), (0, 0)))
    RB = min(8, TB)

    in_specs = [
        pl.BlockSpec((NB, TB, F), lambda b: (0, b, 0)),            # x (batch tiled)
        pl.BlockSpec((NSUB, F, 2 * F), lambda b: (0, 0, 0)),       # fused [left|right] weights
        pl.BlockSpec((1, F), lambda b: (0, 0)),                    # left bias (/sqrt2)
        pl.BlockSpec((NSUB, F), lambda b: (0, 0)),                 # sigmoid(a)
        pl.BlockSpec((NT, F), lambda b: (0, 0)),                   # Cayley coefficients (/sqrt2)
    ]
    out_specs = pl.BlockSpec((NB, TB, F), lambda b: (0, b, 0))

    est = 4 * (5 * NB * TB * F                    # x + out (double buffered) + y scratch
               + 2 * NSUB * F * 2 * F             # fused weights (double buffered, no re-DMA)
               + 2 * (NT + NSUB + 1) * F)         # coefficient tables, gates, bias
    vmem_limit = int(min(max(2 * est + (4 << 20), 32 << 20), int(0.85 * cap_bytes)))

    cost = pl.CostEstimate(
        flops=int(Bp * (4 * NB * F * F + 3 * NT * F + 16 * NB * F)),
        transcendentals=int(2 * Bp * NSUB * F),
        bytes_accessed=int(4 * (2 * NB * Bp * F + 2 * NSUB * F * F + (NT + NSUB + 1) * F)),
    )

    out = pl.pallas_call(
        _make_sgp_kernel(TB, F, RB, precision),
        out_shape=jax.ShapeDtypeStruct((NB, Bp, F), x_nbf.dtype),
        grid_spec=pltpu.PrefetchScalarGridSpec(
            num_scalar_prefetch=0,
            grid=(Bp // TB,),
            in_specs=in_specs,
            out_specs=out_specs,
            scratch_shapes=[pltpu.VMEM((NB, TB, F), jnp.float32)],
        ),
        compiler_params=pltpu.CompilerParams(
            dimension_semantics=("parallel",),   # batch tiles shard across megacore TCs
            vmem_limit_bytes=vmem_limit,
        ),
        cost_estimate=cost,
    )(xt, wf, bias_row, saT, coef)

    if Bp != B:
        out = out[:, :B, :]
    return out


def steerable_geometric_product(x, wf, bias_row, saT, coef, **kwargs):
    """'bni' convenience wrapper matching the PyTorch module: x is (B, F, NB).

    For stacked layers prefer the blade-major entry point above; these two transposes are
    a full HBM pass each on memory-bound shapes.
    """
    xt = jnp.transpose(x, (2, 0, 1))                     # (NB, B, F): features -> lanes
    out = steerable_geometric_product_blade_major(xt, wf, bias_row, saT, coef, **kwargs)
    return jnp.transpose(out, (1, 2, 0))                 # back to (B, F, NB)


# -----------------------------------------------------------------------------
# Parameter construction (mirrors the module's __init__ / _get_weight), host side.
# -----------------------------------------------------------------------------
def init_params(key, features):
    k1, k2, k3, k4, k5 = jax.random.split(key, 5)
    std_lin = 1.0 / math.sqrt(features)
    w_right = jax.random.normal(k1, (features, features, NSUB), jnp.float32) * std_lin
    w_left = jax.random.normal(k2, (features, features, NSUB), jnp.float32) * std_lin
    # Module inits bias/a to zeros; small random values here to exercise those paths.
    bias_left = 0.1 * jax.random.normal(k4, (features,), jnp.float32)
    a = 0.5 * jax.random.normal(k5, (features, NSUB), jnp.float32)
    n_paths = int(PRODUCT_PATHS.sum())
    w_gp = jax.random.normal(k3, (features, n_paths), jnp.float32) / math.sqrt(DIM + 1)
    return w_right, w_left, bias_left, a, w_gp


def expand_params(w_right, w_left, bias_left, a, w_gp):
    """Pack the subspace parameters into the kernel layout (and the reference layout)."""
    F = int(np.asarray(w_right).shape[0])
    rep = SUBSPACES

    # Grade-dedup'd fused MVLinear weight (NSUB, F_in, 2*F_out) = [ left/sqrt2 | right ].
    wl_t = np.transpose(np.asarray(w_left, np.float32), (2, 1, 0))     # (NSUB, F_in, F_out)
    wr_t = np.transpose(np.asarray(w_right, np.float32), (2, 1, 0))
    wf = np.ascontiguousarray(np.concatenate([wl_t / SQRT2, wr_t], axis=-1))

    bias_row = np.asarray(bias_left, np.float32)[None, :] / SQRT2      # (1, F)
    saT = np.ascontiguousarray(
        np.transpose(np.asarray(jax.nn.sigmoid(jnp.asarray(a, jnp.float32)))))  # (NSUB, F)

    # _get_weight(): scatter into product_paths, blade-expand, scale by Cayley signs.
    ii, jj, kk = np.nonzero(PRODUCT_PATHS)
    w_full = np.zeros((F, NSUB, NSUB, NSUB), np.float32)
    w_full[:, ii, jj, kk] = np.asarray(w_gp, np.float32)
    w_full = np.repeat(np.repeat(np.repeat(w_full, rep, axis=1), rep, axis=2), rep, axis=3)
    cw_dense = CAYLEY[None] * w_full                                    # (F, NB, NB, NB)
    coef = np.stack([cw_dense[:, i, j, k] for (i, j, k) in TRIPLES], axis=0) / SQRT2

    kernel_params = (jnp.asarray(wf), jnp.asarray(bias_row), jnp.asarray(saT),
                     jnp.asarray(np.ascontiguousarray(coef.astype(np.float32))))

    # Reference layout (blade-expanded, original einsum formulation).
    wr_blade = np.repeat(np.asarray(w_right, np.float32), rep, axis=-1)
    wl_blade = np.repeat(np.asarray(w_left, np.float32), rep, axis=-1)
    ref_params = (jnp.asarray(wr_blade), jnp.asarray(wl_blade), jnp.asarray(cw_dense))
    return kernel_params, ref_params


# Pure-JAX reference (original einsum formulation, full-precision matmuls).
def reference(x, wr_blade, wl_blade, bias_left, a, cw_dense):
    hp = jax.lax.Precision.HIGHEST
    y = jnp.einsum('bmi,nmi->bni', x, wr_blade, precision=hp)
    G = jnp.asarray(GRADE_ONEHOT)
    nrm = jnp.sqrt(jnp.einsum('bni,gi->bng', y * y, G, precision=hp))
    nv = jax.nn.sigmoid(a)[None] * (nrm - 1.0) + 1.0
    div = jnp.einsum('bng,gi->bni', nv, G, precision=hp) + EPS
    y = y / div
    left = jnp.einsum('bmi,nmi->bni', x, wl_blade, precision=hp)
    left = left.at[:, :, 0].add(bias_left[None, :])
    gp = jnp.einsum('bni,nijk,bnk->bnj', x, cw_dense, y, precision=hp)
    return (left + gp) / SQRT2


if __name__ == "__main__":
    B, F = 16, 32
    key = jax.random.PRNGKey(0)
    kp, kx = jax.random.split(key)

    w_right, w_left, bias_left, a, w_gp = init_params(kp, F)
    (wf, bias_row, saT, coef), (wr_blade, wl_blade, cw_dense) = expand_params(
        w_right, w_left, bias_left, a, w_gp)
    x = jax.random.normal(kx, (B, F, NB), jnp.float32)

    ref = reference(x, wr_blade, wl_blade, bias_left, a, cw_dense)

    # Exact float32 forward (matches the PyTorch module's semantics); tight tolerance.
    # B=16 -> two 8-row grid steps, exercising the batch-tiled pipeline / index maps.
    fwd_exact = jax.jit(functools.partial(steerable_geometric_product,
                                          precision=jax.lax.Precision.HIGHEST))
    out = jax.block_until_ready(fwd_exact(x, wf, bias_row, saT, coef))
    assert out.shape == (B, F, NB)
    np.testing.assert_allclose(np.asarray(out), np.asarray(ref), rtol=1e-4, atol=1e-4)

    # Fast-MXU path recommended for v6e/v7x (single-pass bf16 matmuls, f32 accumulate);
    # looser, documented tolerance.
    fwd_fast = jax.jit(functools.partial(steerable_geometric_product,
                                         precision=jax.lax.Precision.DEFAULT))
    out_fast = jax.block_until_ready(fwd_fast(x, wf, bias_row, saT, coef))
    np.testing.assert_allclose(np.asarray(out_fast), np.asarray(ref), rtol=5e-2, atol=5e-2)

    print("KERNEL_OK")
</pallas_src>

<mosaic_0001>
module attributes {stable_mosaic.version = 11 : i64} {
  func.func @kernel(%arg0: i32, %arg1: memref<8x8x32xf32, #tpu.memory_space<vmem>>, %arg2: memref<4x32x64xf32, #tpu.memory_space<vmem>>, %arg3: memref<1x32xf32, #tpu.memory_space<vmem>>, %arg4: memref<4x32xf32, #tpu.memory_space<vmem>>, %arg5: memref<64x32xf32, #tpu.memory_space<vmem>>, %arg6: memref<8x8x32xf32, #tpu.memory_space<vmem>>, %arg7: memref<8x8x32xf32, #tpu.memory_space<vmem>>) attributes {dimension_semantics = [#tpu.dimension_semantics<parallel>], iteration_bounds = array<i64: 2>, scalar_prefetch = 0 : i64, scratch_operands = 1 : i64, tpu.core_type = #tpu.core_type<tc>, window_params = [{transform_indices = @transform_0, window_bounds = array<i64: 8, 8, 32>}, {pipeline_mode = #tpu.pipeline_mode<synchronous>, transform_indices = @transform_1, window_bounds = array<i64: 4, 32, 64>}, {pipeline_mode = #tpu.pipeline_mode<synchronous>, transform_indices = @transform_2, window_bounds = array<i64: 1, 32>}, {pipeline_mode = #tpu.pipeline_mode<synchronous>, transform_indices = @transform_3, window_bounds = array<i64: 4, 32>}, {pipeline_mode = #tpu.pipeline_mode<synchronous>, transform_indices = @transform_4, window_bounds = array<i64: 64, 32>}, {transform_indices = @transform_5, window_bounds = array<i64: 8, 8, 32>}]} {
    %c0 = arith.constant 0 : index
    %c0_0 = arith.constant 0 : index
    %c0_1 = arith.constant 0 : index
    %0 = vector.load %arg1[%c0, %c0_0, %c0_1] : memref<8x8x32xf32, #tpu.memory_space<vmem>>, vector<1x8x32xf32>
    %1 = vector.shape_cast %0 : vector<1x8x32xf32> to vector<8x32xf32>
    %c0_2 = arith.constant 0 : index
    %c0_3 = arith.constant 0 : index
    %c0_4 = arith.constant 0 : index
    %2 = vector.load %arg2[%c0_2, %c0_3, %c0_4] : memref<4x32x64xf32, #tpu.memory_space<vmem>>, vector<1x32x64xf32>
    %3 = vector.shape_cast %2 : vector<1x32x64xf32> to vector<32x64xf32>
    %cst = arith.constant dense<0.000000e+00> : vector<8x64xf32>
    %4 = tpu.matmul %1, %3, %cst {dimension_numbers = #tpu.dot_dimension_numbers<[1], [0], [0], [1], [0, 0, 1, 1], [], []>, precision = #tpu.contract_precision<fp32>} : vector<8x32xf32>, vector<32x64xf32>, vector<8x64xf32> -> vector<8x64xf32>
    %5 = vector.extract_strided_slice %4 {offsets = [0, 0], sizes = [8, 32], strides = [1, 1]} : vector<8x64xf32> to vector<8x32xf32>
    %6 = vector.extract_strided_slice %4 {offsets = [0, 32], sizes = [8, 32], strides = [1, 1]} : vector<8x64xf32> to vector<8x32xf32>
    %7 = arith.mulf %6, %6 : vector<8x32xf32>
    %c0_5 = arith.constant 0 : index
    %c0_6 = arith.constant 0 : index
    %8 = vector.load %arg4[%c0_5, %c0_6] : memref<4x32xf32, #tpu.memory_space<vmem>>, vector<1x32xf32>
    %9 = math.sqrt %7 : vector<8x32xf32>
    %cst_7 = arith.constant 1.000000e+00 : f32
    %10 = vector.broadcast %cst_7 : f32 to vector<8x32xf32>
    %11 = arith.subf %9, %10 : vector<8x32xf32>
    %12 = vector.broadcast %8 : vector<1x32xf32> to vector<8x32xf32>
    %13 = arith.mulf %12, %11 : vector<8x32xf32>
    %cst_8 = arith.constant 1.000000e+00 : f32
    %14 = vector.broadcast %cst_8 : f32 to vector<8x32xf32>
    %15 = arith.addf %13, %14 : vector<8x32xf32>
    %cst_9 = arith.constant 9.99999997E-7 : f32
    %16 = vector.broadcast %cst_9 : f32 to vector<8x32xf32>
    %17 = arith.addf %15, %16 : vector<8x32xf32>
    %18 = tpu.reciprocal %17 : vector<8x32xf32> -> vector<8x32xf32>
    %19 = arith.mulf %6, %18 : vector<8x32xf32>
    %c0_10 = arith.constant 0 : index
    %c0_11 = arith.constant 0 : index
    %c0_12 = arith.constant 0 : index
    %20 = vector.load %arg7[%c0_10, %c0_11, %c0_12] : memref<8x8x32xf32, #tpu.memory_space<vmem>>, vector<1x8x32xf32>
    %21 = vector.shape_cast %20 : vector<1x8x32xf32> to vector<8x32xf32>
    %22 = vector.shape_cast %19 : vector<8x32xf32> to vector<1x8x32xf32>
    tpu.vector_store %arg7[%c0_10, %c0_11, %c0_12], %22 {strides = array<i32>} : memref<8x8x32xf32, #tpu.memory_space<vmem>>, vector<1x8x32xf32>,
    %c0_13 = arith.constant 0 : index
    %c0_14 = arith.constant 0 : index
    %23 = vector.load %arg3[%c0_13, %c0_14] : memref<1x32xf32, #tpu.memory_space<vmem>>, vector<1x32xf32>
    %24 = vector.broadcast %23 : vector<1x32xf32> to vector<8x32xf32>
    %25 = arith.addf %5, %24 : vector<8x32xf32>
    %c0_15 = arith.constant 0 : index
    %c0_16 = arith.constant 0 : index
    %c0_17 = arith.constant 0 : index
    %26 = vector.load %arg6[%c0_15, %c0_16, %c0_17] : memref<8x8x32xf32, #tpu.memory_space<vmem>>, vector<1x8x32xf32>
    %27 = vector.shape_cast %26 : vector<1x8x32xf32> to vector<8x32xf32>
    %28 = vector.shape_cast %25 : vector<8x32xf32> to vector<1x8x32xf32>
    tpu.vector_store %arg6[%c0_15, %c0_16, %c0_17], %28 {strides = array<i32>} : memref<8x8x32xf32, #tpu.memory_space<vmem>>, vector<1x8x32xf32>,
    %c1 = arith.constant 1 : index
    %c0_18 = arith.constant 0 : index
    %c0_19 = arith.constant 0 : index
    %29 = vector.load %arg1[%c1, %c0_18, %c0_19] : memref<8x8x32xf32, #tpu.memory_space<vmem>>, vector<1x8x32xf32>
    %30 = vector.shape_cast %29 : vector<1x8x32xf32> to vector<8x32xf32>
    %c2 = arith.constant 2 : index
    %c0_20 = arith.constant 0 : index
    %c0_21 = arith.constant 0 : index
    %31 = vector.load %arg1[%c2, %c0_20, %c0_21] : memref<8x8x32xf32, #tpu.memory_space<vmem>>, vector<1x8x32xf32>
    %32 = vector.shape_cast %31 : vector<1x8x32xf32> to vector<8x32xf32>
    %c3 = arith.constant 3 : index
    %c0_22 = arith.constant 0 : index
    %c0_23 = arith.constant 0 : index
    %33 = vector.load %arg1[%c3, %c0_22, %c0_23] : memref<8x8x32xf32, #tpu.memory_space<vmem>>, vector<1x8x32xf32>
    %34 = vector.shape_cast %33 : vector<1x8x32xf32> to vector<8x32xf32>
    %35 = tpu.concatenate %30, %32, %34 in 0 : vector<8x32xf32>, vector<8x32xf32>, vector<8x32xf32> -> vector<24x32xf32>
    %c1_24 = arith.constant 1 : index
    %c0_25 = arith.constant 0 : index
    %c0_26 = arith.constant 0 : index
    %36 = vector.load %arg2[%c1_24, %c0_25, %c0_26] : memref<4x32x64xf32, #tpu.memory_space<vmem>>, vector<1x32x64xf32>
    %37 = vector.shape_cast %36 : vector<1x32x64xf32> to vector<32x64xf32>
    %cst_27 = arith.constant dense<0.000000e+00> : vector<24x64xf32>
    %38 = tpu.matmul %35, %37, %cst_27 {dimension_numbers = #tpu.dot_dimension_numbers<[1], [0], [0], [1], [0, 0, 1, 1], [], []>, precision = #tpu.contract_precision<fp32>} : vector<24x32xf32>, vector<32x64xf32>, vector<24x64xf32> -> vector<24x64xf32>
    %39 = vector.extract_strided_slice %38 {offsets = [0, 0], sizes = [24, 32], strides = [1, 1]} : vector<24x64xf32> to vector<24x32xf32>
    %40 = vector.extract_strided_slice %38 {offsets = [0, 32], sizes = [24, 32], strides = [1, 1]} : vector<24x64xf32> to vector<24x32xf32>
    %41 = vector.extract_strided_slice %40 {offsets = [0, 0], sizes = [8, 32], strides = [1, 1]} : vector<24x32xf32> to vector<8x32xf32>
    %42 = vector.extract_strided_slice %40 {offsets = [8, 0], sizes = [8, 32], strides = [1, 1]} : vector<24x32xf32> to vector<8x32xf32>
    %43 = vector.extract_strided_slice %40 {offsets = [16, 0], sizes = [8, 32], strides = [1, 1]} : vector<24x32xf32> to vector<8x32xf32>
    %44 = arith.mulf %41, %41 : vector<8x32xf32>
    %45 = arith.mulf %42, %42 : vector<8x32xf32>
    %46 = arith.addf %44, %45 : vector<8x32xf32>
    %47 = arith.mulf %43, %43 : vector<8x32xf32>
    %48 = arith.addf %46, %47 : vector<8x32xf32>
    %c1_28 = arith.constant 1 : index
    %c0_29 = arith.constant 0 : index
    %49 = vector.load %arg4[%c1_28, %c0_29] : memref<4x32xf32, #tpu.memory_space<vmem>>, vector<1x32xf32>
    %50 = math.sqrt %48 : vector<8x32xf32>
    %cst_30 = arith.constant 1.000000e+00 : f32
    %51 = vector.broadcast %cst_30 : f32 to vector<8x32xf32>
    %52 = arith.subf %50, %51 : vector<8x32xf32>
    %53 = vector.broadcast %49 : vector<1x32xf32> to vector<8x32xf32>
    %54 = arith.mulf %53, %52 : vector<8x32xf32>
    %cst_31 = arith.constant 1.000000e+00 : f32
    %55 = vector.broadcast %cst_31 : f32 to vector<8x32xf32>
    %56 = arith.addf %54, %55 : vector<8x32xf32>
    %cst_32 = arith.constant 9.99999997E-7 : f32
    %57 = vector.broadcast %cst_32 : f32 to vector<8x32xf32>
    %58 = arith.addf %56, %57 : vector<8x32xf32>
    %59 = tpu.reciprocal %58 : vector<8x32xf32> -> vector<8x32xf32>
    %60 = arith.mulf %41, %59 : vector<8x32xf32>
    %c1_33 = arith.constant 1 : index
    %c0_34 = arith.constant 0 : index
    %c0_35 = arith.constant 0 : index
    %61 = vector.load %arg7[%c1_33, %c0_34, %c0_35] : memref<8x8x32xf32, #tpu.memory_space<vmem>>, vector<1x8x32xf32>
    %62 = vector.shape_cast %61 : vector<1x8x32xf32> to vector<8x32xf32>
    %63 = vector.shape_cast %60 : vector<8x32xf32> to vector<1x8x32xf32>
    tpu.vector_store %arg7[%c1_33, %c0_34, %c0_35], %63 {strides = array<i32>} : memref<8x8x32xf32, #tpu.memory_space<vmem>>, vector<1x8x32xf32>,
    %64 = vector.extract_strided_slice %39 {offsets = [0, 0], sizes = [8, 32], strides = [1, 1]} : vector<24x32xf32> to vector<8x32xf32>
    %c1_36 = arith.constant 1 : index
    %c0_37 = arith.constant 0 : index
    %c0_38 = arith.constant 0 : index
    %65 = vector.load %arg6[%c1_36, %c0_37, %c0_38] : memref<8x8x32xf32, #tpu.memory_space<vmem>>, vector<1x8x32xf32>
    %66 = vector.shape_cast %65 : vector<1x8x32xf32> to vector<8x32xf32>
    %67 = vector.shape_cast %64 : vector<8x32xf32> to vector<1x8x32xf32>
    tpu.vector_store %arg6[%c1_36, %c0_37, %c0_38], %67 {strides = array<i32>} : memref<8x8x32xf32, #tpu.memory_space<vmem>>, vector<1x8x32xf32>,
    %68 = arith.mulf %42, %59 : vector<8x32xf32>
    %c2_39 = arith.constant 2 : index
    %c0_40 = arith.constant 0 : index
    %c0_41 = arith.constant 0 : index
    %69 = vector.load %arg7[%c2_39, %c0_40, %c0_41] : memref<8x8x32xf32, #tpu.memory_space<vmem>>, vector<1x8x32xf32>
    %70 = vector.shape_cast %69 : vector<1x8x32xf32> to vector<8x32xf32>
    %71 = vector.shape_cast %68 : vector<8x32xf32> to vector<1x8x32xf32>
    tpu.vector_store %arg7[%c2_39, %c0_40, %c0_41], %71 {strides = array<i32>} : memref<8x8x32xf32, #tpu.memory_space<vmem>>, vector<1x8x32xf32>,
    %72 = vector.extract_strided_slice %39 {offsets = [8, 0], sizes = [8, 32], strides = [1, 1]} : vector<24x32xf32> to vector<8x32xf32>
    %c2_42 = arith.constant 2 : index
    %c0_43 = arith.constant 0 : index
    %c0_44 = arith.constant 0 : index
    %73 = vector.load %arg6[%c2_42, %c0_43, %c0_44] : memref<8x8x32xf32, #tpu.memory_space<vmem>>, vector<1x8x32xf32>
    %74 = vector.shape_cast %73 : vector<1x8x32xf32> to vector<8x32xf32>
    %75 = vector.shape_cast %72 : vector<8x32xf32> to vector<1x8x32xf32>
    tpu.vector_store %arg6[%c2_42, %c0_43, %c0_44], %75 {strides = array<i32>} : memref<8x8x32xf32, #tpu.memory_space<vmem>>, vector<1x8x32xf32>,
    %76 = arith.mulf %43, %59 : vector<8x32xf32>
    %c3_45 = arith.constant 3 : index
    %c0_46 = arith.constant 0 : index
    %c0_47 = arith.constant 0 : index
    %77 = vector.load %arg7[%c3_45, %c0_46, %c0_47] : memref<8x8x32xf32, #tpu.memory_space<vmem>>, vector<1x8x32xf32>
    %78 = vector.shape_cast %77 : vector<1x8x32xf32> to vector<8x32xf32>
    %79 = vector.shape_cast %76 : vector<8x32xf32> to vector<1x8x32xf32>
    tpu.vector_store %arg7[%c3_45, %c0_46, %c0_47], %79 {strides = array<i32>} : memref<8x8x32xf32, #tpu.memory_space<vmem>>, vector<1x8x32xf32>,
    %80 = vector.extract_strided_slice %39 {offsets = [16, 0], sizes = [8, 32], strides = [1, 1]} : vector<24x32xf32> to vector<8x32xf32>
    %c3_48 = arith.constant 3 : index
    %c0_49 = arith.constant 0 : index
    %c0_50 = arith.constant 0 : index
    %81 = vector.load %arg6[%c3_48, %c0_49, %c0_50] : memref<8x8x32xf32, #tpu.memory_space<vmem>>, vector<1x8x32xf32>
    %82 = vector.shape_cast %81 : vector<1x8x32xf32> to vector<8x32xf32>
    %83 = vector.shape_cast %80 : vector<8x32xf32> to vector<1x8x32xf32>
    tpu.vector_store %arg6[%c3_48, %c0_49, %c0_50], %83 {strides = array<i32>} : memref<8x8x32xf32, #tpu.memory_space<vmem>>, vector<1x8x32xf32>,
    %c4 = arith.constant 4 : index
    %c0_51 = arith.constant 0 : index
    %c0_52 = arith.constant 0 : index
    %84 = vector.load %arg1[%c4, %c0_51, %c0_52] : memref<8x8x32xf32, #tpu.memory_space<vmem>>, vector<1x8x32xf32>
    %85 = vector.shape_cast %84 : vector<1x8x32xf32> to vector<8x32xf32>
    %c5 = arith.constant 5 : index
    %c0_53 = arith.constant 0 : index
    %c0_54 = arith.constant 0 : index
    %86 = vector.load %arg1[%c5, %c0_53, %c0_54] : memref<8x8x32xf32, #tpu.memory_space<vmem>>, vector<1x8x32xf32>
    %87 = vector.shape_cast %86 : vector<1x8x32xf32> to vector<8x32xf32>
    %c6 = arith.constant 6 : index
    %c0_55 = arith.constant 0 : index
    %c0_56 = arith.constant 0 : index
    %88 = vector.load %arg1[%c6, %c0_55, %c0_56] : memref<8x8x32xf32, #tpu.memory_space<vmem>>, vector<1x8x32xf32>
    %89 = vector.shape_cast %88 : vector<1x8x32xf32> to vector<8x32xf32>
    %90 = tpu.concatenate %85, %87, %89 in 0 : vector<8x32xf32>, vector<8x32xf32>, vector<8x32xf32> -> vector<24x32xf32>
    %c2_57 = arith.constant 2 : index
    %c0_58 = arith.constant 0 : index
    %c0_59 = arith.constant 0 : index
    %91 = vector.load %arg2[%c2_57, %c0_58, %c0_59] : memref<4x32x64xf32, #tpu.memory_space<vmem>>, vector<1x32x64xf32>
    %92 = vector.shape_cast %91 : vector<1x32x64xf32> to vector<32x64xf32>
    %cst_60 = arith.constant dense<0.000000e+00> : vector<24x64xf32>
    %93 = tpu.matmul %90, %92, %cst_60 {dimension_numbers = #tpu.dot_dimension_numbers<[1], [0], [0], [1], [0, 0, 1, 1], [], []>, precision = #tpu.contract_precision<fp32>} : vector<24x32xf32>, vector<32x64xf32>, vector<24x64xf32> -> vector<24x64xf32>
    %94 = vector.extract_strided_slice %93 {offsets = [0, 0], sizes = [24, 32], strides = [1, 1]} : vector<24x64xf32> to vector<24x32xf32>
    %95 = vector.extract_strided_slice %93 {offsets = [0, 32], sizes = [24, 32], strides = [1, 1]} : vector<24x64xf32> to vector<24x32xf32>
    %96 = vector.extract_strided_slice %95 {offsets = [0, 0], sizes = [8, 32], strides = [1, 1]} : vector<24x32xf32> to vector<8x32xf32>
    %97 = vector.extract_strided_slice %95 {offsets = [8, 0], sizes = [8, 32], strides = [1, 1]} : vector<24x32xf32> to vector<8x32xf32>
    %98 = vector.extract_strided_slice %95 {offsets = [16, 0], sizes = [8, 32], strides = [1, 1]} : vector<24x32xf32> to vector<8x32xf32>
    %99 = arith.mulf %96, %96 : vector<8x32xf32>
    %100 = arith.mulf %97, %97 : vector<8x32xf32>
    %101 = arith.addf %99, %100 : vector<8x32xf32>
    %102 = arith.mulf %98, %98 : vector<8x32xf32>
    %103 = arith.addf %101, %102 : vector<8x32xf32>
    %c2_61 = arith.constant 2 : index
    %c0_62 = arith.constant 0 : index
    %104 = vector.load %arg4[%c2_61, %c0_62] : memref<4x32xf32, #tpu.memory_space<vmem>>, vector<1x32xf32>
    %105 = math.sqrt %103 : vector<8x32xf32>
    %cst_63 = arith.constant 1.000000e+00 : f32
    %106 = vector.broadcast %cst_63 : f32 to vector<8x32xf32>
    %107 = arith.subf %105, %106 : vector<8x32xf32>
    %108 = vector.broadcast %104 : vector<1x32xf32> to vector<8x32xf32>
    %109 = arith.mulf %108, %107 : vector<8x32xf32>
    %cst_64 = arith.constant 1.000000e+00 : f32
    %110 = vector.broadcast %cst_64 : f32 to vector<8x32xf32>
    %111 = arith.addf %109, %110 : vector<8x32xf32>
    %cst_65 = arith.constant 9.99999997E-7 : f32
    %112 = vector.broadcast %cst_65 : f32 to vector<8x32xf32>
    %113 = arith.addf %111, %112 : vector<8x32xf32>
    %114 = tpu.reciprocal %113 : vector<8x32xf32> -> vector<8x32xf32>
    %115 = arith.mulf %96, %114 : vector<8x32xf32>
    %c4_66 = arith.constant 4 : index
    %c0_67 = arith.constant 0 : index
    %c0_68 = arith.constant 0 : index
    %116 = vector.load %arg7[%c4_66, %c0_67, %c0_68] : memref<8x8x32xf32, #tpu.memory_space<vmem>>, vector<1x8x32xf32>
    %117 = vector.shape_cast %116 : vector<1x8x32xf32> to vector<8x32xf32>
    %118 = vector.shape_cast %115 : vector<8x32xf32> to vector<1x8x32xf32>
    tpu.vector_store %arg7[%c4_66, %c0_67, %c0_68], %118 {strides = array<i32>} : memref<8x8x32xf32, #tpu.memory_space<vmem>>, vector<1x8x32xf32>,
    %119 = vector.extract_strided_slice %94 {offsets = [0, 0], sizes = [8, 32], strides = [1, 1]} : vector<24x32xf32> to vector<8x32xf32>
    %c4_69 = arith.constant 4 : index
    %c0_70 = arith.constant 0 : index
    %c0_71 = arith.constant 0 : index
    %120 = vector.load %arg6[%c4_69, %c0_70, %c0_71] : memref<8x8x32xf32, #tpu.memory_space<vmem>>, vector<1x8x32xf32>
    %121 = vector.shape_cast %120 : vector<1x8x32xf32> to vector<8x32xf32>
    %122 = vector.shape_cast %119 : vector<8x32xf32> to vector<1x8x32xf32>
    tpu.vector_store %arg6[%c4_69, %c0_70, %c0_71], %122 {strides = array<i32>} : memref<8x8x32xf32, #tpu.memory_space<vmem>>, vector<1x8x32xf32>,
    %123 = arith.mulf %97, %114 : vector<8x32xf32>
    %c5_72 = arith.constant 5 : index
    %c0_73 = arith.constant 0 : index
    %c0_74 = arith.constant 0 : index
    %124 = vector.load %arg7[%c5_72, %c0_73, %c0_74] : memref<8x8x32xf32, #tpu.memory_space<vmem>>, vector<1x8x32xf32>
    %125 = vector.shape_cast %124 : vector<1x8x32xf32> to vector<8x32xf32>
    %126 = vector.shape_cast %123 : vector<8x32xf32> to vector<1x8x32xf32>
    tpu.vector_store %arg7[%c5_72, %c0_73, %c0_74], %126 {strides = array<i32>} : memref<8x8x32xf32, #tpu.memory_space<vmem>>, vector<1x8x32xf32>,
    %127 = vector.extract_strided_slice %94 {offsets = [8, 0], sizes = [8, 32], strides = [1, 1]} : vector<24x32xf32> to vector<8x32xf32>
    %c5_75 = arith.constant 5 : index
    %c0_76 = arith.constant 0 : index
    %c0_77 = arith.constant 0 : index
    %128 = vector.load %arg6[%c5_75, %c0_76, %c0_77] : memref<8x8x32xf32, #tpu.memory_space<vmem>>, vector<1x8x32xf32>
    %129 = vector.shape_cast %128 : vector<1x8x32xf32> to vector<8x32xf32>
    %130 = vector.shape_cast %127 : vector<8x32xf32> to vector<1x8x32xf32>
    tpu.vector_store %arg6[%c5_75, %c0_76, %c0_77], %130 {strides = array<i32>} : memref<8x8x32xf32, #tpu.memory_space<vmem>>, vector<1x8x32xf32>,
    %131 = arith.mulf %98, %114 : vector<8x32xf32>
    %c6_78 = arith.constant 6 : index
    %c0_79 = arith.constant 0 : index
    %c0_80 = arith.constant 0 : index
    %132 = vector.load %arg7[%c6_78, %c0_79, %c0_80] : memref<8x8x32xf32, #tpu.memory_space<vmem>>, vector<1x8x32xf32>
    %133 = vector.shape_cast %132 : vector<1x8x32xf32> to vector<8x32xf32>
    %134 = vector.shape_cast %131 : vector<8x32xf32> to vector<1x8x32xf32>
    tpu.vector_store %arg7[%c6_78, %c0_79, %c0_80], %134 {strides = array<i32>} : memref<8x8x32xf32, #tpu.memory_space<vmem>>, vector<1x8x32xf32>,
    %135 = vector.extract_strided_slice %94 {offsets = [16, 0], sizes = [8, 32], strides = [1, 1]} : vector<24x32xf32> to vector<8x32xf32>
    %c6_81 = arith.constant 6 : index
    %c0_82 = arith.constant 0 : index
    %c0_83 = arith.constant 0 : index
    %136 = vector.load %arg6[%c6_81, %c0_82, %c0_83] : memref<8x8x32xf32, #tpu.memory_space<vmem>>, vector<1x8x32xf32>
    %137 = vector.shape_cast %136 : vector<1x8x32xf32> to vector<8x32xf32>
    %138 = vector.shape_cast %135 : vector<8x32xf32> to vector<1x8x32xf32>
    tpu.vector_store %arg6[%c6_81, %c0_82, %c0_83], %138 {strides = array<i32>} : memref<8x8x32xf32, #tpu.memory_space<vmem>>, vector<1x8x32xf32>,
    %c7 = arith.constant 7 : index
    %c0_84 = arith.constant 0 : index
    %c0_85 = arith.constant 0 : index
    %139 = vector.load %arg1[%c7, %c0_84, %c0_85] : memref<8x8x32xf32, #tpu.memory_space<vmem>>, vector<1x8x32xf32>
    %140 = vector.shape_cast %139 : vector<1x8x32xf32> to vector<8x32xf32>
    %c3_86 = arith.constant 3 : index
    %c0_87 = arith.constant 0 : index
    %c0_88 = arith.constant 0 : index
    %141 = vector.load %arg2[%c3_86, %c0_87, %c0_88] : memref<4x32x64xf32, #tpu.memory_space<vmem>>, vector<1x32x64xf32>
    %142 = vector.shape_cast %141 : vector<1x32x64xf32> to vector<32x64xf32>
    %cst_89 = arith.constant dense<0.000000e+00> : vector<8x64xf32>
    %143 = tpu.matmul %140, %142, %cst_89 {dimension_numbers = #tpu.dot_dimension_numbers<[1], [0], [0], [1], [0, 0, 1, 1], [], []>, precision = #tpu.contract_precision<fp32>} : vector<8x32xf32>, vector<32x64xf32>, vector<8x64xf32> -> vector<8x64xf32>
    %144 = vector.extract_strided_slice %143 {offsets = [0, 0], sizes = [8, 32], strides = [1, 1]} : vector<8x64xf32> to vector<8x32xf32>
    %145 = vector.extract_strided_slice %143 {offsets = [0, 32], sizes = [8, 32], strides = [1, 1]} : vector<8x64xf32> to vector<8x32xf32>
    %146 = arith.mulf %145, %145 : vector<8x32xf32>
    %c3_90 = arith.constant 3 : index
    %c0_91 = arith.constant 0 : index
    %147 = vector.load %arg4[%c3_90, %c0_91] : memref<4x32xf32, #tpu.memory_space<vmem>>, vector<1x32xf32>
    %148 = math.sqrt %146 : vector<8x32xf32>
    %cst_92 = arith.constant 1.000000e+00 : f32
    %149 = vector.broadcast %cst_92 : f32 to vector<8x32xf32>
    %150 = arith.subf %148, %149 : vector<8x32xf32>
    %151 = vector.broadcast %147 : vector<1x32xf32> to vector<8x32xf32>
    %152 = arith.mulf %151, %150 : vector<8x32xf32>
    %cst_93 = arith.constant 1.000000e+00 : f32
    %153 = vector.broadcast %cst_93 : f32 to vector<8x32xf32>
    %154 = arith.addf %152, %153 : vector<8x32xf32>
    %cst_94 = arith.constant 9.99999997E-7 : f32
    %155 = vector.broadcast %cst_94 : f32 to vector<8x32xf32>
    %156 = arith.addf %154, %155 : vector<8x32xf32>
    %157 = tpu.reciprocal %156 : vector<8x32xf32> -> vector<8x32xf32>
    %158 = arith.mulf %145, %157 : vector<8x32xf32>
    %c7_95 = arith.constant 7 : index
    %c0_96 = arith.constant 0 : index
    %c0_97 = arith.constant 0 : index
    %159 = vector.load %arg7[%c7_95, %c0_96, %c0_97] : memref<8x8x32xf32, #tpu.memory_space<vmem>>, vector<1x8x32xf32>
    %160 = vector.shape_cast %159 : vector<1x8x32xf32> to vector<8x32xf32>
    %161 = vector.shape_cast %158 : vector<8x32xf32> to vector<1x8x32xf32>
    tpu.vector_store %arg7[%c7_95, %c0_96, %c0_97], %161 {strides = array<i32>} : memref<8x8x32xf32, #tpu.memory_space<vmem>>, vector<1x8x32xf32>,
    %c7_98 = arith.constant 7 : index
    %c0_99 = arith.constant 0 : index
    %c0_100 = arith.constant 0 : index
    %162 = vector.load %arg6[%c7_98, %c0_99, %c0_100] : memref<8x8x32xf32, #tpu.memory_space<vmem>>, vector<1x8x32xf32>
    %163 = vector.shape_cast %162 : vector<1x8x32xf32> to vector<8x32xf32>
    %164 = vector.shape_cast %144 : vector<8x32xf32> to vector<1x8x32xf32>
    tpu.vector_store %arg6[%c7_98, %c0_99, %c0_100], %164 {strides = array<i32>} : memref<8x8x32xf32, #tpu.memory_space<vmem>>, vector<1x8x32xf32>,
    %c0_101 = arith.constant 0 : index
    %c0_102 = arith.constant 0 : index
    %c0_103 = arith.constant 0 : index
    %165 = vector.load %arg1[%c0_101, %c0_102, %c0_103] : memref<8x8x32xf32, #tpu.memory_space<vmem>>, vector<1x8x32xf32>
    %166 = vector.shape_cast %165 : vector<1x8x32xf32> to vector<8x32xf32>
    %c1_104 = arith.constant 1 : index
    %c0_105 = arith.constant 0 : index
    %c0_106 = arith.constant 0 : index
    %167 = vector.load %arg1[%c1_104, %c0_105, %c0_106] : memref<8x8x32xf32, #tpu.memory_space<vmem>>, vector<1x8x32xf32>
    %168 = vector.shape_cast %167 : vector<1x8x32xf32> to vector<8x32xf32>
    %c2_107 = arith.constant 2 : index
    %c0_108 = arith.constant 0 : index
    %c0_109 = arith.constant 0 : index
    %169 = vector.load %arg1[%c2_107, %c0_108, %c0_109] : memref<8x8x32xf32, #tpu.memory_space<vmem>>, vector<1x8x32xf32>
    %170 = vector.shape_cast %169 : vector<1x8x32xf32> to vector<8x32xf32>
    %c3_110 = arith.constant 3 : index
    %c0_111 = arith.constant 0 : index
    %c0_112 = arith.constant 0 : index
    %171 = vector.load %arg1[%c3_110, %c0_111, %c0_112] : memref<8x8x32xf32, #tpu.memory_space<vmem>>, vector<1x8x32xf32>
    %172 = vector.shape_cast %171 : vector<1x8x32xf32> to vector<8x32xf32>
    %c4_113 = arith.constant 4 : index
    %c0_114 = arith.constant 0 : index
    %c0_115 = arith.constant 0 : index
    %173 = vector.load %arg1[%c4_113, %c0_114, %c0_115] : memref<8x8x32xf32, #tpu.memory_space<vmem>>, vector<1x8x32xf32>
    %174 = vector.shape_cast %173 : vector<1x8x32xf32> to vector<8x32xf32>
    %c5_116 = arith.constant 5 : index
    %c0_117 = arith.constant 0 : index
    %c0_118 = arith.constant 0 : index
    %175 = vector.load %arg1[%c5_116, %c0_117, %c0_118] : memref<8x8x32xf32, #tpu.memory_space<vmem>>, vector<1x8x32xf32>
    %176 = vector.shape_cast %175 : vector<1x8x32xf32> to vector<8x32xf32>
    %c6_119 = arith.constant 6 : index
    %c0_120 = arith.constant 0 : index
    %c0_121 = arith.constant 0 : index
    %177 = vector.load %arg1[%c6_119, %c0_120, %c0_121] : memref<8x8x32xf32, #tpu.memory_space<vmem>>, vector<1x8x32xf32>
    %178 = vector.shape_cast %177 : vector<1x8x32xf32> to vector<8x32xf32>
    %c7_122 = arith.constant 7 : index
    %c0_123 = arith.constant 0 : index
    %c0_124 = arith.constant 0 : index
    %179 = vector.load %arg1[%c7_122, %c0_123, %c0_124] : memref<8x8x32xf32, #tpu.memory_space<vmem>>, vector<1x8x32xf32>
    %180 = vector.shape_cast %179 : vector<1x8x32xf32> to vector<8x32xf32>
    %c0_125 = arith.constant 0 : index
    %c0_126 = arith.constant 0 : index
    %c0_127 = arith.constant 0 : index
    %181 = vector.load %arg7[%c0_125, %c0_126, %c0_127] : memref<8x8x32xf32, #tpu.memory_space<vmem>>, vector<1x8x32xf32>
    %182 = vector.shape_cast %181 : vector<1x8x32xf32> to vector<8x32xf32>
    %c1_128 = arith.constant 1 : index
    %c0_129 = arith.constant 0 : index
    %c0_130 = arith.constant 0 : index
    %183 = vector.load %arg7[%c1_128, %c0_129, %c0_130] : memref<8x8x32xf32, #tpu.memory_space<vmem>>, vector<1x8x32xf32>
    %184 = vector.shape_cast %183 : vector<1x8x32xf32> to vector<8x32xf32>
    %c2_131 = arith.constant 2 : index
    %c0_132 = arith.constant 0 : index
    %c0_133 = arith.constant 0 : index
    %185 = vector.load %arg7[%c2_131, %c0_132, %c0_133] : memref<8x8x32xf32, #tpu.memory_space<vmem>>, vector<1x8x32xf32>
    %186 = vector.shape_cast %185 : vector<1x8x32xf32> to vector<8x32xf32>
    %c3_134 = arith.constant 3 : index
    %c0_135 = arith.constant 0 : index
    %c0_136 = arith.constant 0 : index
    %187 = vector.load %arg7[%c3_134, %c0_135, %c0_136] : memref<8x8x32xf32, #tpu.memory_space<vmem>>, vector<1x8x32xf32>
    %188 = vector.shape_cast %187 : vector<1x8x32xf32> to vector<8x32xf32>
    %c4_137 = arith.constant 4 : index
    %c0_138 = arith.constant 0 : index
    %c0_139 = arith.constant 0 : index
    %189 = vector.load %arg7[%c4_137, %c0_138, %c0_139] : memref<8x8x32xf32, #tpu.memory_space<vmem>>, vector<1x8x32xf32>
    %190 = vector.shape_cast %189 : vector<1x8x32xf32> to vector<8x32xf32>
    %c5_140 = arith.constant 5 : index
    %c0_141 = arith.constant 0 : index
    %c0_142 = arith.constant 0 : index
    %191 = vector.load %arg7[%c5_140, %c0_141, %c0_142] : memref<8x8x32xf32, #tpu.memory_space<vmem>>, vector<1x8x32xf32>
    %192 = vector.shape_cast %191 : vector<1x8x32xf32> to vector<8x32xf32>
    %c6_143 = arith.constant 6 : index
    %c0_144 = arith.constant 0 : index
    %c0_145 = arith.constant 0 : index
    %193 = vector.load %arg7[%c6_143, %c0_144, %c0_145] : memref<8x8x32xf32, #tpu.memory_space<vmem>>, vector<1x8x32xf32>
    %194 = vector.shape_cast %193 : vector<1x8x32xf32> to vector<8x32xf32>
    %c7_146 = arith.constant 7 : index
    %c0_147 = arith.constant 0 : index
    %c0_148 = arith.constant 0 : index
    %195 = vector.load %arg7[%c7_146, %c0_147, %c0_148] : memref<8x8x32xf32, #tpu.memory_space<vmem>>, vector<1x8x32xf32>
    %196 = vector.shape_cast %195 : vector<1x8x32xf32> to vector<8x32xf32>
    %c0_149 = arith.constant 0 : index
    %c0_150 = arith.constant 0 : index
    %197 = vector.load %arg5[%c0_149, %c0_150] : memref<64x32xf32, #tpu.memory_space<vmem>>, vector<8x32xf32>
    %c0_151 = arith.constant 0 : index
    %c0_152 = arith.constant 0 : index
    %c0_153 = arith.constant 0 : index
    %198 = vector.load %arg6[%c0_151, %c0_152, %c0_153] : memref<8x8x32xf32, #tpu.memory_space<vmem>>, vector<1x8x32xf32>
    %199 = vector.shape_cast %198 : vector<1x8x32xf32> to vector<8x32xf32>
    %200 = arith.mulf %166, %182 : vector<8x32xf32>
    %201 = vector.extract_strided_slice %197 {offsets = [0, 0], sizes = [1, 32], strides = [1, 1]} : vector<8x32xf32> to vector<1x32xf32>
    %202 = vector.broadcast %201 : vector<1x32xf32> to vector<8x32xf32>
    %203 = arith.mulf %200, %202 : vector<8x32xf32>
    %204 = arith.addf %199, %203 : vector<8x32xf32>
    %205 = arith.mulf %168, %184 : vector<8x32xf32>
    %206 = vector.extract_strided_slice %197 {offsets = [1, 0], sizes = [1, 32], strides = [1, 1]} : vector<8x32xf32> to vector<1x32xf32>
    %207 = vector.broadcast %206 : vector<1x32xf32> to vector<8x32xf32>
    %208 = arith.mulf %205, %207 : vector<8x32xf32>
    %209 = arith.addf %204, %208 : vector<8x32xf32>
    %210 = arith.mulf %170, %186 : vector<8x32xf32>
    %211 = vector.extract_strided_slice %197 {offsets = [2, 0], sizes = [1, 32], strides = [1, 1]} : vector<8x32xf32> to vector<1x32xf32>
    %212 = vector.broadcast %211 : vector<1x32xf32> to vector<8x32xf32>
    %213 = arith.mulf %210, %212 : vector<8x32xf32>
    %214 = arith.addf %209, %213 : vector<8x32xf32>
    %215 = arith.mulf %172, %188 : vector<8x32xf32>
    %216 = vector.extract_strided_slice %197 {offsets = [3, 0], sizes = [1, 32], strides = [1, 1]} : vector<8x32xf32> to vector<1x32xf32>
    %217 = vector.broadcast %216 : vector<1x32xf32> to vector<8x32xf32>
    %218 = arith.mulf %215, %217 : vector<8x32xf32>
    %219 = arith.addf %214, %218 : vector<8x32xf32>
    %220 = arith.mulf %174, %190 : vector<8x32xf32>
    %221 = vector.extract_strided_slice %197 {offsets = [4, 0], sizes = [1, 32], strides = [1, 1]} : vector<8x32xf32> to vector<1x32xf32>
    %222 = vector.broadcast %221 : vector<1x32xf32> to vector<8x32xf32>
    %223 = arith.mulf %220, %222 : vector<8x32xf32>
    %224 = arith.addf %219, %223 : vector<8x32xf32>
    %225 = arith.mulf %176, %192 : vector<8x32xf32>
    %226 = vector.extract_strided_slice %197 {offsets = [5, 0], sizes = [1, 32], strides = [1, 1]} : vector<8x32xf32> to vector<1x32xf32>
    %227 = vector.broadcast %226 : vector<1x32xf32> to vector<8x32xf32>
    %228 = arith.mulf %225, %227 : vector<8x32xf32>
    %229 = arith.addf %224, %228 : vector<8x32xf32>
    %230 = arith.mulf %178, %194 : vector<8x32xf32>
    %231 = vector.extract_strided_slice %197 {offsets = [6, 0], sizes = [1, 32], strides = [1, 1]} : vector<8x32xf32> to vector<1x32xf32>
    %232 = vector.broadcast %231 : vector<1x32xf32> to vector<8x32xf32>
    %233 = arith.mulf %230, %232 : vector<8x32xf32>
    %234 = arith.addf %229, %233 : vector<8x32xf32>
    %235 = arith.mulf %180, %196 : vector<8x32xf32>
    %236 = vector.extract_strided_slice %197 {offsets = [7, 0], sizes = [1, 32], strides = [1, 1]} : vector<8x32xf32> to vector<1x32xf32>
    %237 = vector.broadcast %236 : vector<1x32xf32> to vector<8x32xf32>
    %238 = arith.mulf %235, %237 : vector<8x32xf32>
    %239 = arith.addf %234, %238 : vector<8x32xf32>
    %c0_154 = arith.constant 0 : index
    %c0_155 = arith.constant 0 : index
    %c0_156 = arith.constant 0 : index
    %240 = vector.load %arg6[%c0_154, %c0_155, %c0_156] : memref<8x8x32xf32, #tpu.memory_space<vmem>>, vector<1x8x32xf32>
    %241 = vector.shape_cast %240 : vector<1x8x32xf32> to vector<8x32xf32>
    %242 = vector.shape_cast %239 : vector<8x32xf32> to vector<1x8x32xf32>
    tpu.vector_store %arg6[%c0_154, %c0_155, %c0_156], %242 {strides = array<i32>} : memref<8x8x32xf32, #tpu.memory_space<vmem>>, vector<1x8x32xf32>,
    %c8 = arith.constant 8 : index
    %c0_157 = arith.constant 0 : index
    %243 = vector.load %arg5[%c8, %c0_157] : memref<64x32xf32, #tpu.memory_space<vmem>>, vector<8x32xf32>
    %c1_158 = arith.constant 1 : index
    %c0_159 = arith.constant 0 : index
    %c0_160 = arith.constant 0 : index
    %244 = vector.load %arg6[%c1_158, %c0_159, %c0_160] : memref<8x8x32xf32, #tpu.memory_space<vmem>>, vector<1x8x32xf32>
    %245 = vector.shape_cast %244 : vector<1x8x32xf32> to vector<8x32xf32>
    %246 = arith.mulf %166, %184 : vector<8x32xf32>
    %247 = vector.extract_strided_slice %243 {offsets = [0, 0], sizes = [1, 32], strides = [1, 1]} : vector<8x32xf32> to vector<1x32xf32>
    %248 = vector.broadcast %247 : vector<1x32xf32> to vector<8x32xf32>
    %249 = arith.mulf %246, %248 : vector<8x32xf32>
    %250 = arith.addf %245, %249 : vector<8x32xf32>
    %251 = arith.mulf %168, %182 : vector<8x32xf32>
    %252 = vector.extract_strided_slice %243 {offsets = [1, 0], sizes = [1, 32], strides = [1, 1]} : vector<8x32xf32> to vector<1x32xf32>
    %253 = vector.broadcast %252 : vector<1x32xf32> to vector<8x32xf32>
    %254 = arith.mulf %251, %253 : vector<8x32xf32>
    %255 = arith.addf %250, %254 : vector<8x32xf32>
    %256 = arith.mulf %170, %190 : vector<8x32xf32>
    %257 = vector.extract_strided_slice %243 {offsets = [2, 0], sizes = [1, 32], strides = [1, 1]} : vector<8x32xf32> to vector<1x32xf32>
    %258 = vector.broadcast %257 : vector<1x32xf32> to vector<8x32xf32>
    %259 = arith.mulf %256, %258 : vector<8x32xf32>
    %260 = arith.addf %255, %259 : vector<8x32xf32>
    %261 = arith.mulf %172, %192 : vector<8x32xf32>
    %262 = vector.extract_strided_slice %243 {offsets = [3, 0], sizes = [1, 32], strides = [1, 1]} : vector<8x32xf32> to vector<1x32xf32>
    %263 = vector.broadcast %262 : vector<1x32xf32> to vector<8x32xf32>
    %264 = arith.mulf %261, %263 : vector<8x32xf32>
    %265 = arith.addf %260, %264 : vector<8x32xf32>
    %266 = arith.mulf %174, %186 : vector<8x32xf32>
    %267 = vector.extract_strided_slice %243 {offsets = [4, 0], sizes = [1, 32], strides = [1, 1]} : vector<8x32xf32> to vector<1x32xf32>
    %268 = vector.broadcast %267 : vector<1x32xf32> to vector<8x32xf32>
    %269 = arith.mulf %266, %268 : vector<8x32xf32>
    %270 = arith.addf %265, %269 : vector<8x32xf32>
    %271 = arith.mulf %176, %188 : vector<8x32xf32>
    %272 = vector.extract_strided_slice %243 {offsets = [5, 0], sizes = [1, 32], strides = [1, 1]} : vector<8x32xf32> to vector<1x32xf32>
    %273 = vector.broadcast %272 : vector<1x32xf32> to vector<8x32xf32>
    %274 = arith.mulf %271, %273 : vector<8x32xf32>
    %275 = arith.addf %270, %274 : vector<8x32xf32>
    %276 = arith.mulf %178, %196 : vector<8x32xf32>
    %277 = vector.extract_strided_slice %243 {offsets = [6, 0], sizes = [1, 32], strides = [1, 1]} : vector<8x32xf32> to vector<1x32xf32>
    %278 = vector.broadcast %277 : vector<1x32xf32> to vector<8x32xf32>
    %279 = arith.mulf %276, %278 : vector<8x32xf32>
    %280 = arith.addf %275, %279 : vector<8x32xf32>
    %281 = arith.mulf %180, %194 : vector<8x32xf32>
    %282 = vector.extract_strided_slice %243 {offsets = [7, 0], sizes = [1, 32], strides = [1, 1]} : vector<8x32xf32> to vector<1x32xf32>
    %283 = vector.broadcast %282 : vector<1x32xf32> to vector<8x32xf32>
    %284 = arith.mulf %281, %283 : vector<8x32xf32>
    %285 = arith.addf %280, %284 : vector<8x32xf32>
    %c1_161 = arith.constant 1 : index
    %c0_162 = arith.constant 0 : index
    %c0_163 = arith.constant 0 : index
    %286 = vector.load %arg6[%c1_161, %c0_162, %c0_163] : memref<8x8x32xf32, #tpu.memory_space<vmem>>, vector<1x8x32xf32>
    %287 = vector.shape_cast %286 : vector<1x8x32xf32> to vector<8x32xf32>
    %288 = vector.shape_cast %285 : vector<8x32xf32> to vector<1x8x32xf32>
    tpu.vector_store %arg6[%c1_161, %c0_162, %c0_163], %288 {strides = array<i32>} : memref<8x8x32xf32, #tpu.memory_space<vmem>>, vector<1x8x32xf32>,
    %c16 = arith.constant 16 : index
    %c0_164 = arith.constant 0 : index
    %289 = vector.load %arg5[%c16, %c0_164] : memref<64x32xf32, #tpu.memory_space<vmem>>, vector<8x32xf32>
    %c2_165 = arith.constant 2 : index
    %c0_166 = arith.constant 0 : index
    %c0_167 = arith.constant 0 : index
    %290 = vector.load %arg6[%c2_165, %c0_166, %c0_167] : memref<8x8x32xf32, #tpu.memory_space<vmem>>, vector<1x8x32xf32>
    %291 = vector.shape_cast %290 : vector<1x8x32xf32> to vector<8x32xf32>
    %292 = arith.mulf %166, %186 : vector<8x32xf32>
    %293 = vector.extract_strided_slice %289 {offsets = [0, 0], sizes = [1, 32], strides = [1, 1]} : vector<8x32xf32> to vector<1x32xf32>
    %294 = vector.broadcast %293 : vector<1x32xf32> to vector<8x32xf32>
    %295 = arith.mulf %292, %294 : vector<8x32xf32>
    %296 = arith.addf %291, %295 : vector<8x32xf32>
    %297 = arith.mulf %168, %190 : vector<8x32xf32>
    %298 = vector.extract_strided_slice %289 {offsets = [1, 0], sizes = [1, 32], strides = [1, 1]} : vector<8x32xf32> to vector<1x32xf32>
    %299 = vector.broadcast %298 : vector<1x32xf32> to vector<8x32xf32>
    %300 = arith.mulf %297, %299 : vector<8x32xf32>
    %301 = arith.addf %296, %300 : vector<8x32xf32>
    %302 = arith.mulf %170, %182 : vector<8x32xf32>
    %303 = vector.extract_strided_slice %289 {offsets = [2, 0], sizes = [1, 32], strides = [1, 1]} : vector<8x32xf32> to vector<1x32xf32>
    %304 = vector.broadcast %303 : vector<1x32xf32> to vector<8x32xf32>
    %305 = arith.mulf %302, %304 : vector<8x32xf32>
    %306 = arith.addf %301, %305 : vector<8x32xf32>
    %307 = arith.mulf %172, %194 : vector<8x32xf32>
    %308 = vector.extract_strided_slice %289 {offsets = [3, 0], sizes = [1, 32], strides = [1, 1]} : vector<8x32xf32> to vector<1x32xf32>
    %309 = vector.broadcast %308 : vector<1x32xf32> to vector<8x32xf32>
    %310 = arith.mulf %307, %309 : vector<8x32xf32>
    %311 = arith.addf %306, %310 : vector<8x32xf32>
    %312 = arith.mulf %174, %184 : vector<8x32xf32>
    %313 = vector.extract_strided_slice %289 {offsets = [4, 0], sizes = [1, 32], strides = [1, 1]} : vector<8x32xf32> to vector<1x32xf32>
    %314 = vector.broadcast %313 : vector<1x32xf32> to vector<8x32xf32>
    %315 = arith.mulf %312, %314 : vector<8x32xf32>
    %316 = arith.addf %311, %315 : vector<8x32xf32>
    %317 = arith.mulf %176, %196 : vector<8x32xf32>
    %318 = vector.extract_strided_slice %289 {offsets = [5, 0], sizes = [1, 32], strides = [1, 1]} : vector<8x32xf32> to vector<1x32xf32>
    %319 = vector.broadcast %318 : vector<1x32xf32> to vector<8x32xf32>
    %320 = arith.mulf %317, %319 : vector<8x32xf32>
    %321 = arith.addf %316, %320 : vector<8x32xf32>
    %322 = arith.mulf %178, %188 : vector<8x32xf32>
    %323 = vector.extract_strided_slice %289 {offsets = [6, 0], sizes = [1, 32], strides = [1, 1]} : vector<8x32xf32> to vector<1x32xf32>
    %324 = vector.broadcast %323 : vector<1x32xf32> to vector<8x32xf32>
    %325 = arith.mulf %322, %324 : vector<8x32xf32>
    %326 = arith.addf %321, %325 : vector<8x32xf32>
    %327 = arith.mulf %180, %192 : vector<8x32xf32>
    %328 = vector.extract_strided_slice %289 {offsets = [7, 0], sizes = [1, 32], strides = [1, 1]} : vector<8x32xf32> to vector<1x32xf32>
    %329 = vector.broadcast %328 : vector<1x32xf32> to vector<8x32xf32>
    %330 = arith.mulf %327, %329 : vector<8x32xf32>
    %331 = arith.addf %326, %330 : vector<8x32xf32>
    %c2_168 = arith.constant 2 : index
    %c0_169 = arith.constant 0 : index
    %c0_170 = arith.constant 0 : index
    %332 = vector.load %arg6[%c2_168, %c0_169, %c0_170] : memref<8x8x32xf32, #tpu.memory_space<vmem>>, vector<1x8x32xf32>
    %333 = vector.shape_cast %332 : vector<1x8x32xf32> to vector<8x32xf32>
    %334 = vector.shape_cast %331 : vector<8x32xf32> to vector<1x8x32xf32>
    tpu.vector_store %arg6[%c2_168, %c0_169, %c0_170], %334 {strides = array<i32>} : memref<8x8x32xf32, #tpu.memory_space<vmem>>, vector<1x8x32xf32>,
    %c24 = arith.constant 24 : index
    %c0_171 = arith.constant 0 : index
    %335 = vector.load %arg5[%c24, %c0_171] : memref<64x32xf32, #tpu.memory_space<vmem>>, vector<8x32xf32>
    %c3_172 = arith.constant 3 : index
    %c0_173 = arith.constant 0 : index
    %c0_174 = arith.constant 0 : index
    %336 = vector.load %arg6[%c3_172, %c0_173, %c0_174] : memref<8x8x32xf32, #tpu.memory_space<vmem>>, vector<1x8x32xf32>
    %337 = vector.shape_cast %336 : vector<1x8x32xf32> to vector<8x32xf32>
    %338 = arith.mulf %166, %188 : vector<8x32xf32>
    %339 = vector.extract_strided_slice %335 {offsets = [0, 0], sizes = [1, 32], strides = [1, 1]} : vector<8x32xf32> to vector<1x32xf32>
    %340 = vector.broadcast %339 : vector<1x32xf32> to vector<8x32xf32>
    %341 = arith.mulf %338, %340 : vector<8x32xf32>
    %342 = arith.addf %337, %341 : vector<8x32xf32>
    %343 = arith.mulf %168, %192 : vector<8x32xf32>
    %344 = vector.extract_strided_slice %335 {offsets = [1, 0], sizes = [1, 32], strides = [1, 1]} : vector<8x32xf32> to vector<1x32xf32>
    %345 = vector.broadcast %344 : vector<1x32xf32> to vector<8x32xf32>
    %346 = arith.mulf %343, %345 : vector<8x32xf32>
    %347 = arith.addf %342, %346 : vector<8x32xf32>
    %348 = arith.mulf %170, %194 : vector<8x32xf32>
    %349 = vector.extract_strided_slice %335 {offsets = [2, 0], sizes = [1, 32], strides = [1, 1]} : vector<8x32xf32> to vector<1x32xf32>
    %350 = vector.broadcast %349 : vector<1x32xf32> to vector<8x32xf32>
    %351 = arith.mulf %348, %350 : vector<8x32xf32>
    %352 = arith.addf %347, %351 : vector<8x32xf32>
    %353 = arith.mulf %172, %182 : vector<8x32xf32>
    %354 = vector.extract_strided_slice %335 {offsets = [3, 0], sizes = [1, 32], strides = [1, 1]} : vector<8x32xf32> to vector<1x32xf32>
    %355 = vector.broadcast %354 : vector<1x32xf32> to vector<8x32xf32>
    %356 = arith.mulf %353, %355 : vector<8x32xf32>
    %357 = arith.addf %352, %356 : vector<8x32xf32>
    %358 = arith.mulf %174, %196 : vector<8x32xf32>
    %359 = vector.extract_strided_slice %335 {offsets = [4, 0], sizes = [1, 32], strides = [1, 1]} : vector<8x32xf32> to vector<1x32xf32>
    %360 = vector.broadcast %359 : vector<1x32xf32> to vector<8x32xf32>
    %361 = arith.mulf %358, %360 : vector<8x32xf32>
    %362 = arith.addf %357, %361 : vector<8x32xf32>
    %363 = arith.mulf %176, %184 : vector<8x32xf32>
    %364 = vector.extract_strided_slice %335 {offsets = [5, 0], sizes = [1, 32], strides = [1, 1]} : vector<8x32xf32> to vector<1x32xf32>
    %365 = vector.broadcast %364 : vector<1x32xf32> to vector<8x32xf32>
    %366 = arith.mulf %363, %365 : vector<8x32xf32>
    %367 = arith.addf %362, %366 : vector<8x32xf32>
    %368 = arith.mulf %178, %186 : vector<8x32xf32>
    %369 = vector.extract_strided_slice %335 {offsets = [6, 0], sizes = [1, 32], strides = [1, 1]} : vector<8x32xf32> to vector<1x32xf32>
    %370 = vector.broadcast %369 : vector<1x32xf32> to vector<8x32xf32>
    %371 = arith.mulf %368, %370 : vector<8x32xf32>
    %372 = arith.addf %367, %371 : vector<8x32xf32>
    %373 = arith.mulf %180, %190 : vector<8x32xf32>
    %374 = vector.extract_strided_slice %335 {offsets = [7, 0], sizes = [1, 32], strides = [1, 1]} : vector<8x32xf32> to vector<1x32xf32>
    %375 = vector.broadcast %374 : vector<1x32xf32> to vector<8x32xf32>
    %376 = arith.mulf %373, %375 : vector<8x32xf32>
    %377 = arith.addf %372, %376 : vector<8x32xf32>
    %c3_175 = arith.constant 3 : index
    %c0_176 = arith.constant 0 : index
    %c0_177 = arith.constant 0 : index
    %378 = vector.load %arg6[%c3_175, %c0_176, %c0_177] : memref<8x8x32xf32, #tpu.memory_space<vmem>>, vector<1x8x32xf32>
    %379 = vector.shape_cast %378 : vector<1x8x32xf32> to vector<8x32xf32>
    %380 = vector.shape_cast %377 : vector<8x32xf32> to vector<1x8x32xf32>
    tpu.vector_store %arg6[%c3_175, %c0_176, %c0_177], %380 {strides = array<i32>} : memref<8x8x32xf32, #tpu.memory_space<vmem>>, vector<1x8x32xf32>,
    %c32 = arith.constant 32 : index
    %c0_178 = arith.constant 0 : index
    %381 = vector.load %arg5[%c32, %c0_178] : memref<64x32xf32, #tpu.memory_space<vmem>>, vector<8x32xf32>
    %c4_179 = arith.constant 4 : index
    %c0_180 = arith.constant 0 : index
    %c0_181 = arith.constant 0 : index
    %382 = vector.load %arg6[%c4_179, %c0_180, %c0_181] : memref<8x8x32xf32, #tpu.memory_space<vmem>>, vector<1x8x32xf32>
    %383 = vector.shape_cast %382 : vector<1x8x32xf32> to vector<8x32xf32>
    %384 = arith.mulf %166, %190 : vector<8x32xf32>
    %385 = vector.extract_strided_slice %381 {offsets = [0, 0], sizes = [1, 32], strides = [1, 1]} : vector<8x32xf32> to vector<1x32xf32>
    %386 = vector.broadcast %385 : vector<1x32xf32> to vector<8x32xf32>
    %387 = arith.mulf %384, %386 : vector<8x32xf32>
    %388 = arith.addf %383, %387 : vector<8x32xf32>
    %389 = arith.mulf %168, %186 : vector<8x32xf32>
    %390 = vector.extract_strided_slice %381 {offsets = [1, 0], sizes = [1, 32], strides = [1, 1]} : vector<8x32xf32> to vector<1x32xf32>
    %391 = vector.broadcast %390 : vector<1x32xf32> to vector<8x32xf32>
    %392 = arith.mulf %389, %391 : vector<8x32xf32>
    %393 = arith.addf %388, %392 : vector<8x32xf32>
    %394 = arith.mulf %170, %184 : vector<8x32xf32>
    %395 = vector.extract_strided_slice %381 {offsets = [2, 0], sizes = [1, 32], strides = [1, 1]} : vector<8x32xf32> to vector<1x32xf32>
    %396 = vector.broadcast %395 : vector<1x32xf32> to vector<8x32xf32>
    %397 = arith.mulf %394, %396 : vector<8x32xf32>
    %398 = arith.addf %393, %397 : vector<8x32xf32>
    %399 = arith.mulf %172, %196 : vector<8x32xf32>
    %400 = vector.extract_strided_slice %381 {offsets = [3, 0], sizes = [1, 32], strides = [1, 1]} : vector<8x32xf32> to vector<1x32xf32>
    %401 = vector.broadcast %400 : vector<1x32xf32> to vector<8x32xf32>
    %402 = arith.mulf %399, %401 : vector<8x32xf32>
    %403 = arith.addf %398, %402 : vector<8x32xf32>
    %404 = arith.mulf %174, %182 : vector<8x32xf32>
    %405 = vector.extract_strided_slice %381 {offsets = [4, 0], sizes = [1, 32], strides = [1, 1]} : vector<8x32xf32> to vector<1x32xf32>
    %406 = vector.broadcast %405 : vector<1x32xf32> to vector<8x32xf32>
    %407 = arith.mulf %404, %406 : vector<8x32xf32>
    %408 = arith.addf %403, %407 : vector<8x32xf32>
    %409 = arith.mulf %176, %194 : vector<8x32xf32>
    %410 = vector.extract_strided_slice %381 {offsets = [5, 0], sizes = [1, 32], strides = [1, 1]} : vector<8x32xf32> to vector<1x32xf32>
    %411 = vector.broadcast %410 : vector<1x32xf32> to vector<8x32xf32>
    %412 = arith.mulf %409, %411 : vector<8x32xf32>
    %413 = arith.addf %408, %412 : vector<8x32xf32>
    %414 = arith.mulf %178, %192 : vector<8x32xf32>
    %415 = vector.extract_strided_slice %381 {offsets = [6, 0], sizes = [1, 32], strides = [1, 1]} : vector<8x32xf32> to vector<1x32xf32>
    %416 = vector.broadcast %415 : vector<1x32xf32> to vector<8x32xf32>
    %417 = arith.mulf %414, %416 : vector<8x32xf32>
    %418 = arith.addf %413, %417 : vector<8x32xf32>
    %419 = arith.mulf %180, %188 : vector<8x32xf32>
    %420 = vector.extract_strided_slice %381 {offsets = [7, 0], sizes = [1, 32], strides = [1, 1]} : vector<8x32xf32> to vector<1x32xf32>
    %421 = vector.broadcast %420 : vector<1x32xf32> to vector<8x32xf32>
    %422 = arith.mulf %419, %421 : vector<8x32xf32>
    %423 = arith.addf %418, %422 : vector<8x32xf32>
    %c4_182 = arith.constant 4 : index
    %c0_183 = arith.constant 0 : index
    %c0_184 = arith.constant 0 : index
    %424 = vector.load %arg6[%c4_182, %c0_183, %c0_184] : memref<8x8x32xf32, #tpu.memory_space<vmem>>, vector<1x8x32xf32>
    %425 = vector.shape_cast %424 : vector<1x8x32xf32> to vector<8x32xf32>
    %426 = vector.shape_cast %423 : vector<8x32xf32> to vector<1x8x32xf32>
    tpu.vector_store %arg6[%c4_182, %c0_183, %c0_184], %426 {strides = array<i32>} : memref<8x8x32xf32, #tpu.memory_space<vmem>>, vector<1x8x32xf32>,
    %c40 = arith.constant 40 : index
    %c0_185 = arith.constant 0 : index
    %427 = vector.load %arg5[%c40, %c0_185] : memref<64x32xf32, #tpu.memory_space<vmem>>, vector<8x32xf32>
    %c5_186 = arith.constant 5 : index
    %c0_187 = arith.constant 0 : index
    %c0_188 = arith.constant 0 : index
    %428 = vector.load %arg6[%c5_186, %c0_187, %c0_188] : memref<8x8x32xf32, #tpu.memory_space<vmem>>, vector<1x8x32xf32>
    %429 = vector.shape_cast %428 : vector<1x8x32xf32> to vector<8x32xf32>
    %430 = arith.mulf %166, %192 : vector<8x32xf32>
    %431 = vector.extract_strided_slice %427 {offsets = [0, 0], sizes = [1, 32], strides = [1, 1]} : vector<8x32xf32> to vector<1x32xf32>
    %432 = vector.broadcast %431 : vector<1x32xf32> to vector<8x32xf32>
    %433 = arith.mulf %430, %432 : vector<8x32xf32>
    %434 = arith.addf %429, %433 : vector<8x32xf32>
    %435 = arith.mulf %168, %188 : vector<8x32xf32>
    %436 = vector.extract_strided_slice %427 {offsets = [1, 0], sizes = [1, 32], strides = [1, 1]} : vector<8x32xf32> to vector<1x32xf32>
    %437 = vector.broadcast %436 : vector<1x32xf32> to vector<8x32xf32>
    %438 = arith.mulf %435, %437 : vector<8x32xf32>
    %439 = arith.addf %434, %438 : vector<8x32xf32>
    %440 = arith.mulf %170, %196 : vector<8x32xf32>
    %441 = vector.extract_strided_slice %427 {offsets = [2, 0], sizes = [1, 32], strides = [1, 1]} : vector<8x32xf32> to vector<1x32xf32>
    %442 = vector.broadcast %441 : vector<1x32xf32> to vector<8x32xf32>
    %443 = arith.mulf %440, %442 : vector<8x32xf32>
    %444 = arith.addf %439, %443 : vector<8x32xf32>
    %445 = arith.mulf %172, %184 : vector<8x32xf32>
    %446 = vector.extract_strided_slice %427 {offsets = [3, 0], sizes = [1, 32], strides = [1, 1]} : vector<8x32xf32> to vector<1x32xf32>
    %447 = vector.broadcast %446 : vector<1x32xf32> to vector<8x32xf32>
    %448 = arith.mulf %445, %447 : vector<8x32xf32>
    %449 = arith.addf %444, %448 : vector<8x32xf32>
    %450 = arith.mulf %174, %194 : vector<8x32xf32>
    %451 = vector.extract_strided_slice %427 {offsets = [4, 0], sizes = [1, 32], strides = [1, 1]} : vector<8x32xf32> to vector<1x32xf32>
    %452 = vector.broadcast %451 : vector<1x32xf32> to vector<8x32xf32>
    %453 = arith.mulf %450, %452 : vector<8x32xf32>
    %454 = arith.addf %449, %453 : vector<8x32xf32>
    %455 = arith.mulf %176, %182 : vector<8x32xf32>
    %456 = vector.extract_strided_slice %427 {offsets = [5, 0], sizes = [1, 32], strides = [1, 1]} : vector<8x32xf32> to vector<1x32xf32>
    %457 = vector.broadcast %456 : vector<1x32xf32> to vector<8x32xf32>
    %458 = arith.mulf %455, %457 : vector<8x32xf32>
    %459 = arith.addf %454, %458 : vector<8x32xf32>
    %460 = arith.mulf %178, %190 : vector<8x32xf32>
    %461 = vector.extract_strided_slice %427 {offsets = [6, 0], sizes = [1, 32], strides = [1, 1]} : vector<8x32xf32> to vector<1x32xf32>
    %462 = vector.broadcast %461 : vector<1x32xf32> to vector<8x32xf32>
    %463 = arith.mulf %460, %462 : vector<8x32xf32>
    %464 = arith.addf %459, %463 : vector<8x32xf32>
    %465 = arith.mulf %180, %186 : vector<8x32xf32>
    %466 = vector.extract_strided_slice %427 {offsets = [7, 0], sizes = [1, 32], strides = [1, 1]} : vector<8x32xf32> to vector<1x32xf32>
    %467 = vector.broadcast %466 : vector<1x32xf32> to vector<8x32xf32>
    %468 = arith.mulf %465, %467 : vector<8x32xf32>
    %469 = arith.addf %464, %468 : vector<8x32xf32>
    %c5_189 = arith.constant 5 : index
    %c0_190 = arith.constant 0 : index
    %c0_191 = arith.constant 0 : index
    %470 = vector.load %arg6[%c5_189, %c0_190, %c0_191] : memref<8x8x32xf32, #tpu.memory_space<vmem>>, vector<1x8x32xf32>
    %471 = vector.shape_cast %470 : vector<1x8x32xf32> to vector<8x32xf32>
    %472 = vector.shape_cast %469 : vector<8x32xf32> to vector<1x8x32xf32>
    tpu.vector_store %arg6[%c5_189, %c0_190, %c0_191], %472 {strides = array<i32>} : memref<8x8x32xf32, #tpu.memory_space<vmem>>, vector<1x8x32xf32>,
    %c48 = arith.constant 48 : index
    %c0_192 = arith.constant 0 : index
    %473 = vector.load %arg5[%c48, %c0_192] : memref<64x32xf32, #tpu.memory_space<vmem>>, vector<8x32xf32>
    %c6_193 = arith.constant 6 : index
    %c0_194 = arith.constant 0 : index
    %c0_195 = arith.constant 0 : index
    %474 = vector.load %arg6[%c6_193, %c0_194, %c0_195] : memref<8x8x32xf32, #tpu.memory_space<vmem>>, vector<1x8x32xf32>
    %475 = vector.shape_cast %474 : vector<1x8x32xf32> to vector<8x32xf32>
    %476 = arith.mulf %166, %194 : vector<8x32xf32>
    %477 = vector.extract_strided_slice %473 {offsets = [0, 0], sizes = [1, 32], strides = [1, 1]} : vector<8x32xf32> to vector<1x32xf32>
    %478 = vector.broadcast %477 : vector<1x32xf32> to vector<8x32xf32>
    %479 = arith.mulf %476, %478 : vector<8x32xf32>
    %480 = arith.addf %475, %479 : vector<8x32xf32>
    %481 = arith.mulf %168, %196 : vector<8x32xf32>
    %482 = vector.extract_strided_slice %473 {offsets = [1, 0], sizes = [1, 32], strides = [1, 1]} : vector<8x32xf32> to vector<1x32xf32>
    %483 = vector.broadcast %482 : vector<1x32xf32> to vector<8x32xf32>
    %484 = arith.mulf %481, %483 : vector<8x32xf32>
    %485 = arith.addf %480, %484 : vector<8x32xf32>
    %486 = arith.mulf %170, %188 : vector<8x32xf32>
    %487 = vector.extract_strided_slice %473 {offsets = [2, 0], sizes = [1, 32], strides = [1, 1]} : vector<8x32xf32> to vector<1x32xf32>
    %488 = vector.broadcast %487 : vector<1x32xf32> to vector<8x32xf32>
    %489 = arith.mulf %486, %488 : vector<8x32xf32>
    %490 = arith.addf %485, %489 : vector<8x32xf32>
    %491 = arith.mulf %172, %186 : vector<8x32xf32>
    %492 = vector.extract_strided_slice %473 {offsets = [3, 0], sizes = [1, 32], strides = [1, 1]} : vector<8x32xf32> to vector<1x32xf32>
    %493 = vector.broadcast %492 : vector<1x32xf32> to vector<8x32xf32>
    %494 = arith.mulf %491, %493 : vector<8x32xf32>
    %495 = arith.addf %490, %494 : vector<8x32xf32>
    %496 = arith.mulf %174, %192 : vector<8x32xf32>
    %497 = vector.extract_strided_slice %473 {offsets = [4, 0], sizes = [1, 32], strides = [1, 1]} : vector<8x32xf32> to vector<1x32xf32>
    %498 = vector.broadcast %497 : vector<1x32xf32> to vector<8x32xf32>
    %499 = arith.mulf %496, %498 : vector<8x32xf32>
    %500 = arith.addf %495, %499 : vector<8x32xf32>
    %501 = arith.mulf %176, %190 : vector<8x32xf32>
    %502 = vector.extract_strided_slice %473 {offsets = [5, 0], sizes = [1, 32], strides = [1, 1]} : vector<8x32xf32> to vector<1x32xf32>
    %503 = vector.broadcast %502 : vector<1x32xf32> to vector<8x32xf32>
    %504 = arith.mulf %501, %503 : vector<8x32xf32>
    %505 = arith.addf %500, %504 : vector<8x32xf32>
    %506 = arith.mulf %178, %182 : vector<8x32xf32>
    %507 = vector.extract_strided_slice %473 {offsets = [6, 0], sizes = [1, 32], strides = [1, 1]} : vector<8x32xf32> to vector<1x32xf32>
    %508 = vector.broadcast %507 : vector<1x32xf32> to vector<8x32xf32>
    %509 = arith.mulf %506, %508 : vector<8x32xf32>
    %510 = arith.addf %505, %509 : vector<8x32xf32>
    %511 = arith.mulf %180, %184 : vector<8x32xf32>
    %512 = vector.extract_strided_slice %473 {offsets = [7, 0], sizes = [1, 32], strides = [1, 1]} : vector<8x32xf32> to vector<1x32xf32>
    %513 = vector.broadcast %512 : vector<1x32xf32> to vector<8x32xf32>
    %514 = arith.mulf %511, %513 : vector<8x32xf32>
    %515 = arith.addf %510, %514 : vector<8x32xf32>
    %c6_196 = arith.constant 6 : index
    %c0_197 = arith.constant 0 : index
    %c0_198 = arith.constant 0 : index
    %516 = vector.load %arg6[%c6_196, %c0_197, %c0_198] : memref<8x8x32xf32, #tpu.memory_space<vmem>>, vector<1x8x32xf32>
    %517 = vector.shape_cast %516 : vector<1x8x32xf32> to vector<8x32xf32>
    %518 = vector.shape_cast %515 : vector<8x32xf32> to vector<1x8x32xf32>
    tpu.vector_store %arg6[%c6_196, %c0_197, %c0_198], %518 {strides = array<i32>} : memref<8x8x32xf32, #tpu.memory_space<vmem>>, vector<1x8x32xf32>,
    %c56 = arith.constant 56 : index
    %c0_199 = arith.constant 0 : index
    %519 = vector.load %arg5[%c56, %c0_199] : memref<64x32xf32, #tpu.memory_space<vmem>>, vector<8x32xf32>
    %c7_200 = arith.constant 7 : index
    %c0_201 = arith.constant 0 : index
    %c0_202 = arith.constant 0 : index
    %520 = vector.load %arg6[%c7_200, %c0_201, %c0_202] : memref<8x8x32xf32, #tpu.memory_space<vmem>>, vector<1x8x32xf32>
    %521 = vector.shape_cast %520 : vector<1x8x32xf32> to vector<8x32xf32>
    %522 = arith.mulf %166, %196 : vector<8x32xf32>
    %523 = vector.extract_strided_slice %519 {offsets = [0, 0], sizes = [1, 32], strides = [1, 1]} : vector<8x32xf32> to vector<1x32xf32>
    %524 = vector.broadcast %523 : vector<1x32xf32> to vector<8x32xf32>
    %525 = arith.mulf %522, %524 : vector<8x32xf32>
    %526 = arith.addf %521, %525 : vector<8x32xf32>
    %527 = arith.mulf %168, %194 : vector<8x32xf32>
    %528 = vector.extract_strided_slice %519 {offsets = [1, 0], sizes = [1, 32], strides = [1, 1]} : vector<8x32xf32> to vector<1x32xf32>
    %529 = vector.broadcast %528 : vector<1x32xf32> to vector<8x32xf32>
    %530 = arith.mulf %527, %529 : vector<8x32xf32>
    %531 = arith.addf %526, %530 : vector<8x32xf32>
    %532 = arith.mulf %170, %192 : vector<8x32xf32>
    %533 = vector.extract_strided_slice %519 {offsets = [2, 0], sizes = [1, 32], strides = [1, 1]} : vector<8x32xf32> to vector<1x32xf32>
    %534 = vector.broadcast %533 : vector<1x32xf32> to vector<8x32xf32>
    %535 = arith.mulf %532, %534 : vector<8x32xf32>
    %536 = arith.addf %531, %535 : vector<8x32xf32>
    %537 = arith.mulf %172, %190 : vector<8x32xf32>
    %538 = vector.extract_strided_slice %519 {offsets = [3, 0], sizes = [1, 32], strides = [1, 1]} : vector<8x32xf32> to vector<1x32xf32>
    %539 = vector.broadcast %538 : vector<1x32xf32> to vector<8x32xf32>
    %540 = arith.mulf %537, %539 : vector<8x32xf32>
    %541 = arith.addf %536, %540 : vector<8x32xf32>
    %542 = arith.mulf %174, %188 : vector<8x32xf32>
    %543 = vector.extract_strided_slice %519 {offsets = [4, 0], sizes = [1, 32], strides = [1, 1]} : vector<8x32xf32> to vector<1x32xf32>
    %544 = vector.broadcast %543 : vector<1x32xf32> to vector<8x32xf32>
    %545 = arith.mulf %542, %544 : vector<8x32xf32>
    %546 = arith.addf %541, %545 : vector<8x32xf32>
    %547 = arith.mulf %176, %186 : vector<8x32xf32>
    %548 = vector.extract_strided_slice %519 {offsets = [5, 0], sizes = [1, 32], strides = [1, 1]} : vector<8x32xf32> to vector<1x32xf32>
    %549 = vector.broadcast %548 : vector<1x32xf32> to vector<8x32xf32>
    %550 = arith.mulf %547, %549 : vector<8x32xf32>
    %551 = arith.addf %546, %550 : vector<8x32xf32>
    %552 = arith.mulf %178, %184 : vector<8x32xf32>
    %553 = vector.extract_strided_slice %519 {offsets = [6, 0], sizes = [1, 32], strides = [1, 1]} : vector<8x32xf32> to vector<1x32xf32>
    %554 = vector.broadcast %553 : vector<1x32xf32> to vector<8x32xf32>
    %555 = arith.mulf %552, %554 : vector<8x32xf32>
    %556 = arith.addf %551, %555 : vector<8x32xf32>
    %557 = arith.mulf %180, %182 : vector<8x32xf32>
    %558 = vector.extract_strided_slice %519 {offsets = [7, 0], sizes = [1, 32], strides = [1, 1]} : vector<8x32xf32> to vector<1x32xf32>
    %559 = vector.broadcast %558 : vector<1x32xf32> to vector<8x32xf32>
    %560 = arith.mulf %557, %559 : vector<8x32xf32>
    %561 = arith.addf %556, %560 : vector<8x32xf32>
    %c7_203 = arith.constant 7 : index
    %c0_204 = arith.constant 0 : index
    %c0_205 = arith.constant 0 : index
    %562 = vector.load %arg6[%c7_203, %c0_204, %c0_205] : memref<8x8x32xf32, #tpu.memory_space<vmem>>, vector<1x8x32xf32>
    %563 = vector.shape_cast %562 : vector<1x8x32xf32> to vector<8x32xf32>
    %564 = vector.shape_cast %561 : vector<8x32xf32> to vector<1x8x32xf32>
    tpu.vector_store %arg6[%c7_203, %c0_204, %c0_205], %564 {strides = array<i32>} : memref<8x8x32xf32, #tpu.memory_space<vmem>>, vector<1x8x32xf32>,
    return
  }
  func.func @transform_0(%arg0: i32) -> (i32, i32, i32) {
    %c0_i32 = arith.constant 0 : i32
    %c0_i32_0 = arith.constant 0 : i32
    %c0_i32_1 = arith.constant 0 : i32
    return %c0_i32, %arg0, %c0_i32_0 : i32, i32, i32
  }
  func.func @transform_1(%arg0: i32) -> (i32, i32, i32) {
    %c0_i32 = arith.constant 0 : i32
    %c0_i32_0 = arith.constant 0 : i32
    %c0_i32_1 = arith.constant 0 : i32
    %c0_i32_2 = arith.constant 0 : i32
    return %c0_i32, %c0_i32_0, %c0_i32_1 : i32, i32, i32
  }
  func.func @transform_2(%arg0: i32) -> (i32, i32) {
    %c0_i32 = arith.constant 0 : i32
    %c0_i32_0 = arith.constant 0 : i32
    %c0_i32_1 = arith.constant 0 : i32
    return %c0_i32, %c0_i32_0 : i32, i32
  }
  func.func @transform_3(%arg0: i32) -> (i32, i32) {
    %c0_i32 = arith.constant 0 : i32
    %c0_i32_0 = arith.constant 0 : i32
    %c0_i32_1 = arith.constant 0 : i32
    return %c0_i32, %c0_i32_0 : i32, i32
  }
  func.func @transform_4(%arg0: i32) -> (i32, i32) {
    %c0_i32 = arith.constant 0 : i32
    %c0_i32_0 = arith.constant 0 : i32
    %c0_i32_1 = arith.constant 0 : i32
    return %c0_i32, %c0_i32_0 : i32, i32
  }
  func.func @transform_5(%arg0: i32) -> (i32, i32, i32) {
    %c0_i32 = arith.constant 0 : i32
    %c0_i32_0 = arith.constant 0 : i32
    %c0_i32_1 = arith.constant 0 : i32
    return %c0_i32, %arg0, %c0_i32_0 : i32, i32, i32
  }
}

</mosaic_0001>

<llo_original>
// kernel: steerable_geometric_product.1
$region0: #{steerable_geometric_product.1}
  #allocation0 [shape = 'u32[]', space=smem, size = 0x4, offset = 0x4, fixed_abs, tag = 'smem constant byte address 0x4 - core index']
  #allocation1 [shape = 'u32[72,128]{1,0:T(1,128)}', space=vmem, size = 0x9000, scoped, tag = 'internal scratch']
  #allocation2 [shape = 'f32[8,8,32]{2,1,0:T(8,128)}', space=vmem, size = 0x8000, scoped, tag = 'scratch operand']
  %s0 = inlined_call_operand.vmem [shape: f32[8,16,32], index: 0, kind: input, shape index: {}]
  %s1 = inlined_call_operand.vmem [shape: f32[4,32,64], index: 1, kind: input, shape index: {}]
  %s2 = inlined_call_operand.vmem [shape: f32[1,32], index: 2, kind: input, shape index: {}]
  %s3 = inlined_call_operand.vmem [shape: f32[4,32], index: 3, kind: input, shape index: {}]
  %s4 = inlined_call_operand.vmem [shape: f32[64,32], index: 4, kind: input, shape index: {}]
  %s5 = inlined_call_operand.vmem [shape: f32[8,16,32], index: 5, kind: output, shape index: {}]
  %s6 = sld [smem:[#allocation0]]
  $region125: #{steerable_geometric_product.1} parent=0
    _
  %s8 = ssub.s32 1, %s6
  %s9 = scalar_select 0, %s8, %s6
  $region1: #{steerable_geometric_product.1} parent=0
    #allocation3 [shape = 'u8[65536]{0}', space=vmem, size = 0x10000, scoped, tag = 'input window, operand 0']
    #allocation4 [shape = 'u8[65536]{0}', space=vmem, size = 0x10000, scoped, tag = 'output window, operand 0']
    loop: start=0, step=1, limit=4
    $region2: #{steerable_geometric_product.1} parent=1 // loop_pre_header
      _
    $region3: #{steerable_geometric_product.1} parent=1 // loop_header
      %s11 = sphi 0, %s15
      %p12 = scmp.ge.s32.totalorder %s11, 4
      %s21 = sphi 0, %s23
      %s24 = sphi 0, %s21
      %s25 = sphi 0, %s24
      %s41 = sphi 0, %s25
      %s45 = sphi 0, %s45
      %s47 = sphi 0, %s45
      %s48 = sphi 0, %s47
      %s62 = sphi 0, %s48
      %s66 = sphi 0, %s66
      %s68 = sphi 0, %s66
      %s69 = sphi 0, %s68
      %s83 = sphi 0, %s69
      %s87 = sphi 0, %s87
      %s89 = sphi 0, %s87
      %s90 = sphi 0, %s89
      %s104 = sphi 0, %s90
      %s108 = sphi 0, %s108
      %s110 = sphi 0, %s108
      %s111 = sphi 0, %s110
      %s125 = sphi 0, %s111
      %s131 = sphi 0, %s133
      %s134 = sphi 0, %s131
      %s135 = sphi 0, %s134
      %s151 = sphi 0, %s135
    $region4: #{steerable_geometric_product.1} parent=1 // loop_header_branch
      %14 = sbr.rel (%p12) target = $region8
    $region5: #{steerable_geometric_product.1} parent=1 // loop_body
      %s16 = ssub.s32 %s11, 1
      %s17 = ssub.s32 %s11, 2
      %s18 = sadd.s32 %s11, 1
      %s19 = ssub.s32 %s11, %s18
      %p20 = scmp.eq.s32.totalorder %s19, 0
      %s22 = sadd.s32 %s21, 1
      %s23 = scalar_select %p20, %s21, %s22
      %p26 = pneg %p20
      %p27 = scmp.eq.s32.totalorder %s11, 1
      %p28 = por %p26, %p27
      %p29 = scmp.ne.s32.totalorder %s21, %s24
      %p30 = scmp.eq.s32.totalorder %s11, 0
      %p31 = por %p29, %p30
      %p32 = scmp.ne.s32.totalorder %s21, %s24
      %p33 = scmp.eq.s32.totalorder %s16, 1
      %p34 = por %p32, %p33
      %p35 = scmp.ne.s32.totalorder %s24, %s25
      %p36 = scmp.eq.s32.totalorder %s16, 0
      %p37 = por %p35, %p36
      %p38 = scmp.ne.s32.totalorder %s24, %s25
      %p39 = scmp.eq.s32.totalorder %s17, 1
      %p40 = por %p38, %p39
      %p42 = scmp.ne.s32.totalorder %s25, %s41
      %p43 = scmp.eq.s32.totalorder %s17, 0
      %p44 = por %p42, %p43
      %s46 = sadd.s32 %s45, 1
      %p49 = scmp.eq.s32.totalorder %s11, 1
      %p50 = scmp.ne.s32.totalorder %s45, %s47
      %p51 = scmp.eq.s32.totalorder %s11, 0
      %p52 = por %p50, %p51
      %p53 = scmp.ne.s32.totalorder %s45, %s47
      %p54 = scmp.eq.s32.totalorder %s16, 1
      %p55 = por %p53, %p54
      %p56 = scmp.ne.s32.totalorder %s47, %s48
      %p57 = scmp.eq.s32.totalorder %s16, 0
      %p58 = por %p56, %p57
      %p59 = scmp.ne.s32.totalorder %s47, %s48
      %p60 = scmp.eq.s32.totalorder %s17, 1
      %p61 = por %p59, %p60
      %p63 = scmp.ne.s32.totalorder %s48, %s62
      %p64 = scmp.eq.s32.totalorder %s17, 0
      %p65 = por %p63, %p64
      %s67 = sadd.s32 %s66, 1
      %p70 = scmp.eq.s32.totalorder %s11, 1
      %p71 = scmp.ne.s32.totalorder %s66, %s68
      %p72 = scmp.eq.s32.totalorder %s11, 0
      %p73 = por %p71, %p72
      %p74 = scmp.ne.s32.totalorder %s66, %s68
      %p75 = scmp.eq.s32.totalorder %s16, 1
      %p76 = por %p74, %p75
      %p77 = scmp.ne.s32.totalorder %s68, %s69
      %p78 = scmp.eq.s32.totalorder %s16, 0
      %p79 = por %p77, %p78
      %p80 = scmp.ne.s32.totalorder %s68, %s69
      %p81 = scmp.eq.s32.totalorder %s17, 1
      %p82 = por %p80, %p81
      %p84 = scmp.ne.s32.totalorder %s69, %s83
      %p85 = scmp.eq.s32.totalorder %s17, 0
      %p86 = por %p84, %p85
      %s88 = sadd.s32 %s87, 1
      %p91 = scmp.eq.s32.totalorder %s11, 1
      %p92 = scmp.ne.s32.totalorder %s87, %s89
      %p93 = scmp.eq.s32.totalorder %s11, 0
      %p94 = por %p92, %p93
      %p95 = scmp.ne.s32.totalorder %s87, %s89
      %p96 = scmp.eq.s32.totalorder %s16, 1
      %p97 = por %p95, %p96
      %p98 = scmp.ne.s32.totalorder %s89, %s90
      %p99 = scmp.eq.s32.totalorder %s16, 0
      %p100 = por %p98, %p99
      %p101 = scmp.ne.s32.totalorder %s89, %s90
      %p102 = scmp.eq.s32.totalorder %s17, 1
      %p103 = por %p101, %p102
      %p105 = scmp.ne.s32.totalorder %s90, %s104
      %p106 = scmp.eq.s32.totalorder %s17, 0
      %p107 = por %p105, %p106
      %s109 = sadd.s32 %s108, 1
      %p112 = scmp.eq.s32.totalorder %s11, 1
      %p113 = scmp.ne.s32.totalorder %s108, %s110
      %p114 = scmp.eq.s32.totalorder %s11, 0
      %p115 = por %p113, %p114
      %p116 = scmp.ne.s32.totalorder %s108, %s110
      %p117 = scmp.eq.s32.totalorder %s16, 1
      %p118 = por %p116, %p117
      %p119 = scmp.ne.s32.totalorder %s110, %s111
      %p120 = scmp.eq.s32.totalorder %s16, 0
      %p121 = por %p119, %p120
      %p122 = scmp.ne.s32.totalorder %s110, %s111
      %p123 = scmp.eq.s32.totalorder %s17, 1
      %p124 = por %p122, %p123
      %p126 = scmp.ne.s32.totalorder %s111, %s125
      %p127 = scmp.eq.s32.totalorder %s17, 0
      %p128 = por %p126, %p127
      %s129 = ssub.s32 %s11, %s18
      %p130 = scmp.eq.s32.totalorder %s129, 0
      %s132 = sadd.s32 %s131, 1
      %s133 = scalar_select %p130, %s131, %s132
      %p136 = pneg %p130
      %p137 = scmp.eq.s32.totalorder %s11, 1
      %p138 = por %p136, %p137
      %p139 = scmp.ne.s32.totalorder %s131, %s134
      %p140 = scmp.eq.s32.totalorder %s11, 0
      %p141 = por %p139, %p140
      %p142 = scmp.ne.s32.totalorder %s131, %s134
      %p143 = scmp.eq.s32.totalorder %s16, 1
      %p144 = por %p142, %p143
      %p145 = scmp.ne.s32.totalorder %s134, %s135
      %p146 = scmp.eq.s32.totalorder %s16, 0
      %p147 = por %p145, %p146
      %p148 = scmp.ne.s32.totalorder %s134, %s135
      %p149 = scmp.eq.s32.totalorder %s17, 1
      %p150 = por %p148, %p149
      %p152 = scmp.ne.s32.totalorder %s135, %s151
      %p153 = scmp.eq.s32.totalorder %s17, 0
      %p154 = por %p152, %p153
      %p155 = scmp.le.s32.totalorder 1, %s11
      %p156 = scmp.lt.s32.totalorder %s11, 3
      %p157 = pnand %p155, %p156
      %p158 = pneg %p157
      // Predicated region
      $region9: #{steerable_geometric_product.1} parent=5 // pred_check
        _
      $region10: #{steerable_geometric_product.1} parent=5 // pred_check_branch
        %160 = sbr.rel (%p157) target = $region12
      $region11: #{steerable_geometric_product.1} parent=5 // pred_region
        %s161 = ssub.s32 %s11, 1
        // Predicated region
        $region13: #{steerable_geometric_product.1} parent=11 // pred_check
          %p162 = pneg %p58
        $region14: #{steerable_geometric_product.1} parent=11 // pred_check_branch
          %164 = sbr.rel (%p162) target = $region16
        $region15: #{steerable_geometric_product.1} parent=11 // pred_region
          _
        $region16: #{steerable_geometric_product.1} parent=11 // pred_fallthru
          _
        // Predicated region
        $region17: #{steerable_geometric_product.1} parent=11 // pred_check
          %p165 = pneg %p79
        $region18: #{steerable_geometric_product.1} parent=11 // pred_check_branch
          %167 = sbr.rel (%p165) target = $region20
        $region19: #{steerable_geometric_product.1} parent=11 // pred_region
          _
        $region20: #{steerable_geometric_product.1} parent=11 // pred_fallthru
          _
        // Predicated region
        $region21: #{steerable_geometric_product.1} parent=11 // pred_check
          %p168 = pneg %p100
        $region22: #{steerable_geometric_product.1} parent=11 // pred_check_branch
          %170 = sbr.rel (%p168) target = $region24
        $region23: #{steerable_geometric_product.1} parent=11 // pred_region
          _
        $region24: #{steerable_geometric_product.1} parent=11 // pred_fallthru
          _
        // Predicated region
        $region25: #{steerable_geometric_product.1} parent=11 // pred_check
          %p171 = pneg %p121
        $region26: #{steerable_geometric_product.1} parent=11 // pred_check_branch
          %173 = sbr.rel (%p171) target = $region28
        $region27: #{steerable_geometric_product.1} parent=11 // pred_region
          _
        $region28: #{steerable_geometric_product.1} parent=11 // pred_fallthru
          _
      $region12: #{steerable_geometric_product.1} parent=5 // pred_fallthru
        _
      %p174 = scmp.lt.s32.totalorder %s11, 2
      // Predicated region
      $region29: #{steerable_geometric_product.1} parent=5 // pred_check
        %p175 = pneg %p174
      $region30: #{steerable_geometric_product.1} parent=5 // pred_check_branch
        %177 = sbr.rel (%p175) target = $region32
      $region31: #{steerable_geometric_product.1} parent=5 // pred_region
        // Predicated region
        $region33: #{steerable_geometric_product.1} parent=31 // pred_check
          %p178 = pneg %p31
        $region34: #{steerable_geometric_product.1} parent=31 // pred_check_branch
          %180 = sbr.rel (%p178) target = $region36
        $region35: #{steerable_geometric_product.1} parent=31 // pred_region
          %s181 = sand.u32 %s21, 1
          %s182 = sand.u32 %s21, 1
          %s183 = smul.addr %s182, 64
          %s184 = scalar_lea.vmem [#allocation3], %s183
          %s185 = smul.addr %s11, 8
          %s186 = scalar_lea.vmem %s0, %s185
          // Predicated region
          $region37: #{steerable_geometric_product.1} parent=35 // pred_check
            _
          $region38: #{steerable_geometric_product.1} parent=35 // pred_check_branch
            %188 = sbr.rel (0) target = $region40
          $region39: #{steerable_geometric_product.1} parent=35 // pred_region
            // Predicated region
            $region41: #{steerable_geometric_product.1} parent=39 // pred_check
              _
            $region42: #{steerable_geometric_product.1} parent=39 // pred_check_branch
              %190 = sbr.rel (0) target = $region44
            $region43: #{steerable_geometric_product.1} parent=39 // pred_region
              // Predicated region
              $region56: #{steerable_geometric_product.1} parent=43 // pred_check
                _
              $region57: #{steerable_geometric_product.1} parent=43 // pred_check_branch
                %220 = sbr.rel (0) target = $region59
              $region58: #{steerable_geometric_product.1} parent=43 // pred_region
                loop: start=0, step=1, limit=1
                $region60: #{steerable_geometric_product.1} parent=58 // loop_pre_header
                  _
                $region61: #{steerable_geometric_product.1} parent=58 // loop_header
                  %s222 = sphi 0, %s226
                  %p223 = scmp.ge.s32.totalorder %s222, 1
                  %s227 = sphi %s186, %s186
                  %s228 = sphi %s184, %s184
                $region62: #{steerable_geometric_product.1} parent=58 // loop_header_branch
                  %225 = sbr.rel (%p223) target = $region66
                $region63: #{steerable_geometric_product.1} parent=58 // loop_body
                  %v229 = vld [vmem:[%s227] sm:$0xff]
                  %230 = vst [vmem:[%s228] sm:$0xff] %v229
                  %v231 = vld [vmem:[%s227 + $0x10] sm:$0xff]
                  %232 = vst [vmem:[%s228 + $0x8] sm:$0xff] %v231
                  %v233 = vld [vmem:[%s227 + $0x20] sm:$0xff]
                  %234 = vst [vmem:[%s228 + $0x10] sm:$0xff] %v233
                  %v235 = vld [vmem:[%s227 + $0x30] sm:$0xff]
                  %236 = vst [vmem:[%s228 + $0x18] sm:$0xff] %v235
                  %v237 = vld [vmem:[%s227 + $0x40] sm:$0xff]
                  %238 = vst [vmem:[%s228 + $0x20] sm:$0xff] %v237
                  %v239 = vld [vmem:[%s227 + $0x50] sm:$0xff]
                  %240 = vst [vmem:[%s228 + $0x28] sm:$0xff] %v239
                  %v241 = vld [vmem:[%s227 + $0x60] sm:$0xff]
                  %242 = vst [vmem:[%s228 + $0x30] sm:$0xff] %v241
                  %v243 = vld [vmem:[%s227 + $0x70] sm:$0xff]
                  %244 = vst [vmem:[%s228 + $0x38] sm:$0xff] %v243
                $region64: #{steerable_geometric_product.1} parent=58 // loop_footer
                  %s226 = sadd.s32 1, %s222
                $region65: #{steerable_geometric_product.1} parent=58 // loop_footer_branch
                  %221 = sbr.rel target = $region61
                $region66: #{steerable_geometric_product.1} parent=58 // loop_exit
                  _
              $region59: #{steerable_geometric_product.1} parent=43 // pred_fallthru
                _
              // Predicated region
              $region67: #{steerable_geometric_product.1} parent=43 // pred_check
                _
              $region68: #{steerable_geometric_product.1} parent=43 // pred_check_branch
                %246 = sbr.rel target = $region70
              $region69: #{steerable_geometric_product.1} parent=43 // pred_region
                _
              $region70: #{steerable_geometric_product.1} parent=43 // pred_fallthru
                _
            $region44: #{steerable_geometric_product.1} parent=39 // pred_fallthru
              _
            // Predicated region
            $region45: #{steerable_geometric_product.1} parent=39 // pred_check
              _
            $region46: #{steerable_geometric_product.1} parent=39 // pred_check_branch
              %192 = sbr.rel target = $region48
            $region47: #{steerable_geometric_product.1} parent=39 // pred_region
              %s194 = ssub.s32 256, 1
              loop: start=0, step=1, limit=1
              $region49: #{steerable_geometric_product.1} parent=47 // loop_pre_header
                _
              $region50: #{steerable_geometric_product.1} parent=47 // loop_header
                %s196 = sphi 0, %s200
                %p197 = scmp.ge.s32.totalorder %s196, 1
                %s201 = sphi %s186, %s186
                %s202 = sphi %s184, %s184
              $region51: #{steerable_geometric_product.1} parent=47 // loop_header_branch
                %199 = sbr.rel (%p197) target = $region55
              $region52: #{steerable_geometric_product.1} parent=47 // loop_body
                %v203 = vld [vmem:[%s201] sm:%s194]
                %204 = vst [vmem:[%s202] sm:%s194] %v203
                %v205 = vld [vmem:[%s201 + $0x10] sm:%s194]
                %206 = vst [vmem:[%s202 + $0x8] sm:%s194] %v205
                %v207 = vld [vmem:[%s201 + $0x20] sm:%s194]
                %208 = vst [vmem:[%s202 + $0x10] sm:%s194] %v207
                %v209 = vld [vmem:[%s201 + $0x30] sm:%s194]
                %210 = vst [vmem:[%s202 + $0x18] sm:%s194] %v209
                %v211 = vld [vmem:[%s201 + $0x40] sm:%s194]
                %212 = vst [vmem:[%s202 + $0x20] sm:%s194] %v211
                %v213 = vld [vmem:[%s201 + $0x50] sm:%s194]
                %214 = vst [vmem:[%s202 + $0x28] sm:%s194] %v213
                %v215 = vld [vmem:[%s201 + $0x60] sm:%s194]
                %216 = vst [vmem:[%s202 + $0x30] sm:%s194] %v215
                %v217 = vld [vmem:[%s201 + $0x70] sm:%s194]
                %218 = vst [vmem:[%s202 + $0x38] sm:%s194] %v217
              $region53: #{steerable_geometric_product.1} parent=47 // loop_footer
                %s200 = sadd.s32 1, %s196
              $region54: #{steerable_geometric_product.1} parent=47 // loop_footer_branch
                %195 = sbr.rel target = $region50
              $region55: #{steerable_geometric_product.1} parent=47 // loop_exit
                _
            $region48: #{steerable_geometric_product.1} parent=39 // pred_fallthru
              _
          $region40: #{steerable_geometric_product.1} parent=35 // pred_fallthru
            _
          %247 = vnop
        $region36: #{steerable_geometric_product.1} parent=31 // pred_fallthru
          _
      $region32: #{steerable_geometric_product.1} parent=5 // pred_fallthru
        _
      %p248 = scmp.le.s32.totalorder 1, %s11
      %p249 = scmp.lt.s32.totalorder %s11, 3
      %p250 = pnand %p248, %p249
      %p251 = pneg %p250
      // Predicated region
      $region71: #{steerable_geometric_product.1} parent=5 // pred_check
        _
      $region72: #{steerable_geometric_product.1} parent=5 // pred_check_branch
        %253 = sbr.rel (%p250) target = $region74
      $region73: #{steerable_geometric_product.1} parent=5 // pred_region
        %s254 = ssub.s32 %s11, 1
        %s255 = sand.u32 %s24, 1
        %s256 = sand.u32 %s24, 1
        %s257 = smul.addr %s256, 64
        %s258 = scalar_lea.vmem [#allocation3], %s257
        // Predicated region
        $region75: #{steerable_geometric_product.1} parent=73 // pred_check
          %p259 = pneg %p37
        $region76: #{steerable_geometric_product.1} parent=73 // pred_check_branch
          %261 = sbr.rel (%p259) target = $region78
        $region77: #{steerable_geometric_product.1} parent=73 // pred_region
          _
        $region78: #{steerable_geometric_product.1} parent=73 // pred_fallthru
          _
        %s262 = sand.u32 %s24, 1
        %s263 = sand.u32 %s24, 1
        %s264 = smul.addr %s263, 64
        %s265 = scalar_lea.vmem [#allocation3], %s264
        %p266 = pneg %p37
        %p267 = pneg %p34
        %p268 = pneg %p58
        %p269 = pneg %p55
        %p270 = pneg %p79
        %p271 = pneg %p76
        %p272 = pneg %p100
        %p273 = pneg %p97
        %p274 = pneg %p121
        %p275 = pneg %p118
        %p276 = pneg %p147
        %p277 = pneg %p144
        %s278 = sand.u32 %s134, 1
        %s279 = sand.u32 %s134, 1
        %s280 = smul.addr %s279, 64
        %s281 = scalar_lea.vmem [#allocation4], %s280
        %v282 = vld [vmem:[%s258] sm:$0xff]
        %v283 = vld [vmem:[%s1] sm:$0xff]
        %v284 = vld [vmem:[%s1 + $0x8] sm:$0xff]
        %v285 = vld [vmem:[%s1 + $0x10] sm:$0xff]
        %v286 = vld [vmem:[%s1 + $0x18] sm:$0xff]
        %vm287 = vcmask 261120
        %v289 = vsel %vm287, %v282, 0
        %291 = vmatpush.msra.mxu0 0.0
        %292 = vmatpush.msra.mxu0 0.0
        %293 = vmatpush.msra.mxu0 0.0
        %294 = vmatpush.msra.mxu0 0.0
        %295 = vmatpush.msra.mxu0 0.0
        %296 = vmatpush.msra.mxu0 0.0
        %297 = vmatpush.msra.mxu0 0.0
        %298 = vmatpush.msra.mxu0 0.0
        %299 = vmatpush.msra.mxu0 0.0
        %300 = vmatpush.msra.mxu0 0.0
        %301 = vmatpush.msra.mxu0 0.0
        %302 = vmatpush.msra.mxu0 0.0
        %v303 = vand.u32 %v286, 4294901760
        %304 = vmatpush.msra.mxu0 %v303
        %v305 = vand.u32 %v285, 4294901760
        %306 = vmatpush.msra.mxu0 %v305
        %v307 = vand.u32 %v284, 4294901760
        %308 = vmatpush.msra.mxu0 %v307
        %v309 = vand.u32 %v283, 4294901760
        %310 = vmatpush.msra.mxu0 %v309
        %v311 = vand.u32 %v289, 4294901760
        %v312 = vsub.f32 %v289, %v311
        %v313 = vand.u32 %v312, 4294901760
        %v314 = vsub.f32 %v312, %v313
        %v315 = vand.u32 %v314, 4294901760
        %316 = vmatmul.f32.gmra.mxu0 %v315
        %v317 = vpop.f32.mrf.mxu0
        %v318 = vadd.f32 0.0, %v317
        %319 = vdwg.mxu0
        %320 = vmatpush.msra.mxu0 0.0
        %321 = vmatpush.msra.mxu0 0.0
        %322 = vmatpush.msra.mxu0 0.0
        %323 = vmatpush.msra.mxu0 0.0
        %324 = vmatpush.msra.mxu0 0.0
        %325 = vmatpush.msra.mxu0 0.0
        %326 = vmatpush.msra.mxu0 0.0
        %327 = vmatpush.msra.mxu0 0.0
        %328 = vmatpush.msra.mxu0 0.0
        %329 = vmatpush.msra.mxu0 0.0
        %330 = vmatpush.msra.mxu0 0.0
        %331 = vmatpush.msra.mxu0 0.0
        %v332 = vand.u32 %v286, 4294901760
        %v333 = vsub.f32 %v286, %v332
        %v334 = vand.u32 %v333, 4294901760
        %v335 = vsub.f32 %v333, %v334
        %v336 = vand.u32 %v335, 4294901760
        %337 = vmatpush.msra.mxu0 %v336
        %v338 = vand.u32 %v285, 4294901760
        %v339 = vsub.f32 %v285, %v338
        %v340 = vand.u32 %v339, 4294901760
        %v341 = vsub.f32 %v339, %v340
        %v342 = vand.u32 %v341, 4294901760
        %343 = vmatpush.msra.mxu0 %v342
        %v344 = vand.u32 %v284, 4294901760
        %v345 = vsub.f32 %v284, %v344
        %v346 = vand.u32 %v345, 4294901760
        %v347 = vsub.f32 %v345, %v346
        %v348 = vand.u32 %v347, 4294901760
        %349 = vmatpush.msra.mxu0 %v348
        %v350 = vand.u32 %v283, 4294901760
        %v351 = vsub.f32 %v283, %v350
        %v352 = vand.u32 %v351, 4294901760
        %v353 = vsub.f32 %v351, %v352
        %v354 = vand.u32 %v353, 4294901760
        %355 = vmatpush.msra.mxu0 %v354
        %v356 = vand.u32 %v289, 4294901760
        %357 = vmatmul.f32.gmra.mxu0 %v356
        %v358 = vpop.f32.mrf.mxu0
        %v359 = vadd.f32 %v318, %v358
        %360 = vdwg.mxu0
        %361 = vmatpush.msra.mxu0 0.0
        %362 = vmatpush.msra.mxu0 0.0
        %363 = vmatpush.msra.mxu0 0.0
        %364 = vmatpush.msra.mxu0 0.0
        %365 = vmatpush.msra.mxu0 0.0
        %366 = vmatpush.msra.mxu0 0.0
        %367 = vmatpush.msra.mxu0 0.0
        %368 = vmatpush.msra.mxu0 0.0
        %369 = vmatpush.msra.mxu0 0.0
        %370 = vmatpush.msra.mxu0 0.0
        %371 = vmatpush.msra.mxu0 0.0
        %372 = vmatpush.msra.mxu0 0.0
        %v373 = vand.u32 %v286, 4294901760
        %v374 = vsub.f32 %v286, %v373
        %375 = vmatpush.msra.mxu0 %v374
        %v376 = vand.u32 %v285, 4294901760
        %v377 = vsub.f32 %v285, %v376
        %378 = vmatpush.msra.mxu0 %v377
        %v379 = vand.u32 %v284, 4294901760
        %v380 = vsub.f32 %v284, %v379
        %381 = vmatpush.msra.mxu0 %v380
        %v382 = vand.u32 %v283, 4294901760
        %v383 = vsub.f32 %v283, %v382
        %384 = vmatpush.msra.mxu0 %v383
        %v385 = vand.u32 %v289, 4294901760
        %v386 = vsub.f32 %v289, %v385
        %387 = vmatmul.f32.gmra.mxu0 %v386
        %v388 = vpop.f32.mrf.mxu0
        %v389 = vadd.f32 %v359, %v388
        %390 = vdwg.mxu0
        %391 = vmatpush.msra.mxu0 0.0
        %392 = vmatpush.msra.mxu0 0.0
        %393 = vmatpush.msra.mxu0 0.0
        %394 = vmatpush.msra.mxu0 0.0
        %395 = vmatpush.msra.mxu0 0.0
        %396 = vmatpush.msra.mxu0 0.0
        %397 = vmatpush.msra.mxu0 0.0
        %398 = vmatpush.msra.mxu0 0.0
        %399 = vmatpush.msra.mxu0 0.0
        %400 = vmatpush.msra.mxu0 0.0
        %401 = vmatpush.msra.mxu0 0.0
        %402 = vmatpush.msra.mxu0 0.0
        %v403 = vand.u32 %v286, 4294901760
        %404 = vmatpush.msra.mxu0 %v403
        %v405 = vand.u32 %v285, 4294901760
        %406 = vmatpush.msra.mxu0 %v405
        %v407 = vand.u32 %v284, 4294901760
        %408 = vmatpush.msra.mxu0 %v407
        %v409 = vand.u32 %v283, 4294901760
        %410 = vmatpush.msra.mxu0 %v409
        %v411 = vand.u32 %v289, 4294901760
        %v412 = vsub.f32 %v289, %v411
        %v413 = vand.u32 %v412, 4294901760
        %414 = vmatmul.f32.gmra.mxu0 %v413
        %v415 = vpop.f32.mrf.mxu0
        %v416 = vadd.f32 %v389, %v415
        %417 = vdwg.mxu0
        %418 = vmatpush.msra.mxu0 0.0
        %419 = vmatpush.msra.mxu0 0.0
        %420 = vmatpush.msra.mxu0 0.0
        %421 = vmatpush.msra.mxu0 0.0
        %422 = vmatpush.msra.mxu0 0.0
        %423 = vmatpush.msra.mxu0 0.0
        %424 = vmatpush.msra.mxu0 0.0
        %425 = vmatpush.msra.mxu0 0.0
        %426 = vmatpush.msra.mxu0 0.0
        %427 = vmatpush.msra.mxu0 0.0
        %428 = vmatpush.msra.mxu0 0.0
        %429 = vmatpush.msra.mxu0 0.0
        %v430 = vand.u32 %v286, 4294901760
        %v431 = vsub.f32 %v286, %v430
        %v432 = vand.u32 %v431, 4294901760
        %433 = vmatpush.msra.mxu0 %v432
        %v434 = vand.u32 %v285, 4294901760
        %v435 = vsub.f32 %v285, %v434
        %v436 = vand.u32 %v435, 4294901760
        %437 = vmatpush.msra.mxu0 %v436
        %v438 = vand.u32 %v284, 4294901760
        %v439 = vsub.f32 %v284, %v438
        %v440 = vand.u32 %v439, 4294901760
        %441 = vmatpush.msra.mxu0 %v440
        %v442 = vand.u32 %v283, 4294901760
        %v443 = vsub.f32 %v283, %v442
        %v444 = vand.u32 %v443, 4294901760
        %445 = vmatpush.msra.mxu0 %v444
        %v446 = vand.u32 %v289, 4294901760
        %447 = vmatmul.f32.gmra.mxu0 %v446
        %v448 = vpop.f32.mrf.mxu0
        %v449 = vadd.f32 %v416, %v448
        %450 = vdwg.mxu0
        %451 = vmatpush.msra.mxu0 0.0
        %452 = vmatpush.msra.mxu0 0.0
        %453 = vmatpush.msra.mxu0 0.0
        %454 = vmatpush.msra.mxu0 0.0
        %455 = vmatpush.msra.mxu0 0.0
        %456 = vmatpush.msra.mxu0 0.0
        %457 = vmatpush.msra.mxu0 0.0
        %458 = vmatpush.msra.mxu0 0.0
        %459 = vmatpush.msra.mxu0 0.0
        %460 = vmatpush.msra.mxu0 0.0
        %461 = vmatpush.msra.mxu0 0.0
        %462 = vmatpush.msra.mxu0 0.0
        %v463 = vand.u32 %v286, 4294901760
        %464 = vmatpush.msra.mxu0 %v463
        %v465 = vand.u32 %v285, 4294901760
        %466 = vmatpush.msra.mxu0 %v465
        %v467 = vand.u32 %v284, 4294901760
        %468 = vmatpush.msra.mxu0 %v467
        %v469 = vand.u32 %v283, 4294901760
        %470 = vmatpush.msra.mxu0 %v469
        %v471 = vand.u32 %v289, 4294901760
        %472 = vmatmul.f32.gmra.mxu0 %v471
        %v473 = vpop.f32.mrf.mxu0
        %v474 = vadd.f32 %v449, %v473
        %475 = vdwg.mxu0
        %v476 = vmul.f32 %v474, %v474
        %v477 = vld [vmem:[%s3] sm:$0x1]
        %v478 = vrsqrt.pop %v476
        %v479 = vmul.f32 %v478, %v476
        %v480 = vmul.f32 %v479, %v478
        %v481 = vmul.f32 0.5, %v480
        %v482 = vsub.f32 1.5, %v481
        %v483 = vmul.f32 %v478, %v482
        %v484 = vmul.f32 %v476, %v483
        %vm485 = vcmp.eq.f32.partialorder %v476, inf
        %v486 = vsel %vm485, %v476, %v484
        %vm487 = vcmp.eq.f32.partialorder %v476, 0.0
        %v488 = vand.u32 %v476, 2147483648
        %v489 = vsel %vm487, %v488, %v486
        %v490 = vsub.f32 %v489, 1.0
        %v491 = vperm.slane %v477, 0
        %493 = vrot.lane.b32.xlu0 %v490, 96
        %v494 = vpop.permute.xlu0 %493
        %v496 = vmul.f32 %v491, %v494
        %v497 = vadd.f32 %v496, 1.0
        %v498 = vadd.f32 %v497, 1e-06
        %v499 = vrcp.pop %v498
        %v500 = vmul.f32 %v498, %v499
        %v501 = vsub.f32 1.0, %v500
        %v502 = vmul.f32 %v499, %v501
        %v503 = vadd.f32 %v499, %v502
        %vm504 = vweird.f32 %v498
        %vm505 = vweird.f32 %v499
        %vm506 = vmor %vm504, %vm505
        %v507 = vsel %vm506, %v499, %v503
        %v508 = vand.u32 2147483647, %v498
        %vm509 = vcmp.eq.f32.partialorder %v508, 8.507059e+37
        %v510 = vand.u32 %v498, 2147483648
        %v511 = vor.u32 1.1754944e-38, %v510
        %v512 = vsel %vm509, %v511, %v507
        %514 = vrot.lane.b32.xlu0 %v512, 32
        %v515 = vpop.permute.xlu0 %514
        %v517 = vmul.f32 %v474, %v515
        %519 = vrot.lane.b32.xlu0 %v517, 96
        %v520 = vpop.permute.xlu0 %519
        %522 = vst.msk [vmem:[#allocation2] sm:$0xff] %vm287, %v520
        %v523 = vld [vmem:[%s2] sm:$0x1]
        %v525 = vperm.slane %v523, 0
        %v527 = vadd.f32 %v474, %v525
        %528 = vst.msk [vmem:[%s281] sm:$0xff] %vm287, %v527
        %s529 = scalar_lea.vmem %s258, 8 [#allocation3]
        %v530 = vld [vmem:[%s529] sm:$0xff]
        %s531 = scalar_lea.vmem %s258, 16 [#allocation3]
        %v532 = vld [vmem:[%s531] sm:$0xff]
        %s533 = scalar_lea.vmem %s258, 24 [#allocation3]
        %v534 = vld [vmem:[%s533] sm:$0xff]
        %s535 = scalar_lea.vmem %s1, 32
        %v536 = vld [vmem:[%s535] sm:$0xff]
        %v537 = vld [vmem:[%s535 + $0x8] sm:$0xff]
        %v538 = vld [vmem:[%s535 + $0x10] sm:$0xff]
        %v539 = vld [vmem:[%s535 + $0x18] sm:$0xff]
        %v541 = vsel %vm287, %v530, 0
        %v544 = vsel %vm287, %v532, 0
        %v547 = vsel %vm287, %v534, 0
        %549 = vmatpush.msra.mxu0 0.0
        %550 = vmatpush.msra.mxu0 0.0
        %551 = vmatpush.msra.mxu0 0.0
        %552 = vmatpush.msra.mxu0 0.0
        %553 = vmatpush.msra.mxu0 0.0
        %554 = vmatpush.msra.mxu0 0.0
        %555 = vmatpush.msra.mxu0 0.0
        %556 = vmatpush.msra.mxu0 0.0
        %557 = vmatpush.msra.mxu0 0.0
        %558 = vmatpush.msra.mxu0 0.0
        %559 = vmatpush.msra.mxu0 0.0
        %560 = vmatpush.msra.mxu0 0.0
        %v561 = vand.u32 %v539, 4294901760
        %562 = vmatpush.msra.mxu0 %v561
        %v563 = vand.u32 %v538, 4294901760
        %564 = vmatpush.msra.mxu0 %v563
        %v565 = vand.u32 %v537, 4294901760
        %566 = vmatpush.msra.mxu0 %v565
        %v567 = vand.u32 %v536, 4294901760
        %568 = vmatpush.msra.mxu0 %v567
        %v569 = vand.u32 %v541, 4294901760
        %v570 = vsub.f32 %v541, %v569
        %v571 = vand.u32 %v570, 4294901760
        %v572 = vsub.f32 %v570, %v571
        %v573 = vand.u32 %v572, 4294901760
        %574 = vmatmul.f32.gmra.mxu0 %v573
        %v575 = vpop.f32.mrf.mxu0
        %v576 = vadd.f32 0.0, %v575
        %v577 = vand.u32 %v544, 4294901760
        %v578 = vsub.f32 %v544, %v577
        %v579 = vand.u32 %v578, 4294901760
        %v580 = vsub.f32 %v578, %v579
        %v581 = vand.u32 %v580, 4294901760
        %582 = vmatmul.f32.gmra.mxu0 %v581
        %v583 = vpop.f32.mrf.mxu0
        %v584 = vadd.f32 0.0, %v583
        %v585 = vand.u32 %v547, 4294901760
        %v586 = vsub.f32 %v547, %v585
        %v587 = vand.u32 %v586, 4294901760
        %v588 = vsub.f32 %v586, %v587
        %v589 = vand.u32 %v588, 4294901760
        %590 = vmatmul.f32.gmra.mxu0 %v589
        %v591 = vpop.f32.mrf.mxu0
        %v592 = vadd.f32 0.0, %v591
        %593 = vdwg.mxu0
        %594 = vmatpush.msra.mxu0 0.0
        %595 = vmatpush.msra.mxu0 0.0
        %596 = vmatpush.msra.mxu0 0.0
        %597 = vmatpush.msra.mxu0 0.0
        %598 = vmatpush.msra.mxu0 0.0
        %599 = vmatpush.msra.mxu0 0.0
        %600 = vmatpush.msra.mxu0 0.0
        %601 = vmatpush.msra.mxu0 0.0
        %602 = vmatpush.msra.mxu0 0.0
        %603 = vmatpush.msra.mxu0 0.0
        %604 = vmatpush.msra.mxu0 0.0
        %605 = vmatpush.msra.mxu0 0.0
        %v606 = vand.u32 %v539, 4294901760
        %v607 = vsub.f32 %v539, %v606
        %v608 = vand.u32 %v607, 4294901760
        %v609 = vsub.f32 %v607, %v608
        %v610 = vand.u32 %v609, 4294901760
        %611 = vmatpush.msra.mxu0 %v610
        %v612 = vand.u32 %v538, 4294901760
        %v613 = vsub.f32 %v538, %v612
        %v614 = vand.u32 %v613, 4294901760
        %v615 = vsub.f32 %v613, %v614
        %v616 = vand.u32 %v615, 4294901760
        %617 = vmatpush.msra.mxu0 %v616
        %v618 = vand.u32 %v537, 4294901760
        %v619 = vsub.f32 %v537, %v618
        %v620 = vand.u32 %v619, 4294901760
        %v621 = vsub.f32 %v619, %v620
        %v622 = vand.u32 %v621, 4294901760
        %623 = vmatpush.msra.mxu0 %v622
        %v624 = vand.u32 %v536, 4294901760
        %v625 = vsub.f32 %v536, %v624
        %v626 = vand.u32 %v625, 4294901760
        %v627 = vsub.f32 %v625, %v626
        %v628 = vand.u32 %v627, 4294901760
        %629 = vmatpush.msra.mxu0 %v628
        %v630 = vand.u32 %v541, 4294901760
        %631 = vmatmul.f32.gmra.mxu0 %v630
        %v632 = vpop.f32.mrf.mxu0
        %v633 = vadd.f32 %v576, %v632
        %v634 = vand.u32 %v544, 4294901760
        %635 = vmatmul.f32.gmra.mxu0 %v634
        %v636 = vpop.f32.mrf.mxu0
        %v637 = vadd.f32 %v584, %v636
        %v638 = vand.u32 %v547, 4294901760
        %639 = vmatmul.f32.gmra.mxu0 %v638
        %v640 = vpop.f32.mrf.mxu0
        %v641 = vadd.f32 %v592, %v640
        %642 = vdwg.mxu0
        %643 = vmatpush.msra.mxu0 0.0
        %644 = vmatpush.msra.mxu0 0.0
        %645 = vmatpush.msra.mxu0 0.0
        %646 = vmatpush.msra.mxu0 0.0
        %647 = vmatpush.msra.mxu0 0.0
        %648 = vmatpush.msra.mxu0 0.0
        %649 = vmatpush.msra.mxu0 0.0
        %650 = vmatpush.msra.mxu0 0.0
        %651 = vmatpush.msra.mxu0 0.0
        %652 = vmatpush.msra.mxu0 0.0
        %653 = vmatpush.msra.mxu0 0.0
        %654 = vmatpush.msra.mxu0 0.0
        %v655 = vand.u32 %v539, 4294901760
        %v656 = vsub.f32 %v539, %v655
        %657 = vmatpush.msra.mxu0 %v656
        %v658 = vand.u32 %v538, 4294901760
        %v659 = vsub.f32 %v538, %v658
        %660 = vmatpush.msra.mxu0 %v659
        %v661 = vand.u32 %v537, 4294901760
        %v662 = vsub.f32 %v537, %v661
        %663 = vmatpush.msra.mxu0 %v662
        %v664 = vand.u32 %v536, 4294901760
        %v665 = vsub.f32 %v536, %v664
        %666 = vmatpush.msra.mxu0 %v665
        %v667 = vand.u32 %v541, 4294901760
        %v668 = vsub.f32 %v541, %v667
        %669 = vmatmul.f32.gmra.mxu0 %v668
        %v670 = vpop.f32.mrf.mxu0
        %v671 = vadd.f32 %v633, %v670
        %v672 = vand.u32 %v544, 4294901760
        %v673 = vsub.f32 %v544, %v672
        %674 = vmatmul.f32.gmra.mxu0 %v673
        %v675 = vpop.f32.mrf.mxu0
        %v676 = vadd.f32 %v637, %v675
        %v677 = vand.u32 %v547, 4294901760
        %v678 = vsub.f32 %v547, %v677
        %679 = vmatmul.f32.gmra.mxu0 %v678
        %v680 = vpop.f32.mrf.mxu0
        %v681 = vadd.f32 %v641, %v680
        %682 = vdwg.mxu0
        %683 = vmatpush.msra.mxu0 0.0
        %684 = vmatpush.msra.mxu0 0.0
        %685 = vmatpush.msra.mxu0 0.0
        %686 = vmatpush.msra.mxu0 0.0
        %687 = vmatpush.msra.mxu0 0.0
        %688 = vmatpush.msra.mxu0 0.0
        %689 = vmatpush.msra.mxu0 0.0
        %690 = vmatpush.msra.mxu0 0.0
        %691 = vmatpush.msra.mxu0 0.0
        %692 = vmatpush.msra.mxu0 0.0
        %693 = vmatpush.msra.mxu0 0.0
        %694 = vmatpush.msra.mxu0 0.0
        %v695 = vand.u32 %v539, 4294901760
        %696 = vmatpush.msra.mxu0 %v695
        %v697 = vand.u32 %v538, 4294901760
        %698 = vmatpush.msra.mxu0 %v697
        %v699 = vand.u32 %v537, 4294901760
        %700 = vmatpush.msra.mxu0 %v699
        %v701 = vand.u32 %v536, 4294901760
        %702 = vmatpush.msra.mxu0 %v701
        %v703 = vand.u32 %v541, 4294901760
        %v704 = vsub.f32 %v541, %v703
        %v705 = vand.u32 %v704, 4294901760
        %706 = vmatmul.f32.gmra.mxu0 %v705
        %v707 = vpop.f32.mrf.mxu0
        %v708 = vadd.f32 %v671, %v707
        %v709 = vand.u32 %v544, 4294901760
        %v710 = vsub.f32 %v544, %v709
        %v711 = vand.u32 %v710, 4294901760
        %712 = vmatmul.f32.gmra.mxu0 %v711
        %v713 = vpop.f32.mrf.mxu0
        %v714 = vadd.f32 %v676, %v713
        %v715 = vand.u32 %v547, 4294901760
        %v716 = vsub.f32 %v547, %v715
        %v717 = vand.u32 %v716, 4294901760
        %718 = vmatmul.f32.gmra.mxu0 %v717
        %v719 = vpop.f32.mrf.mxu0
        %v720 = vadd.f32 %v681, %v719
        %721 = vdwg.mxu0
        %722 = vmatpush.msra.mxu0 0.0
        %723 = vmatpush.msra.mxu0 0.0
        %724 = vmatpush.msra.mxu0 0.0
        %725 = vmatpush.msra.mxu0 0.0
        %726 = vmatpush.msra.mxu0 0.0
        %727 = vmatpush.msra.mxu0 0.0
        %728 = vmatpush.msra.mxu0 0.0
        %729 = vmatpush.msra.mxu0 0.0
        %730 = vmatpush.msra.mxu0 0.0
        %731 = vmatpush.msra.mxu0 0.0
        %732 = vmatpush.msra.mxu0 0.0
        %733 = vmatpush.msra.mxu0 0.0
        %v734 = vand.u32 %v539, 4294901760
        %v735 = vsub.f32 %v539, %v734
        %v736 = vand.u32 %v735, 4294901760
        %737 = vmatpush.msra.mxu0 %v736
        %v738 = vand.u32 %v538, 4294901760
        %v739 = vsub.f32 %v538, %v738
        %v740 = vand.u32 %v739, 4294901760
        %741 = vmatpush.msra.mxu0 %v740
        %v742 = vand.u32 %v537, 4294901760
        %v743 = vsub.f32 %v537, %v742
        %v744 = vand.u32 %v743, 4294901760
        %745 = vmatpush.msra.mxu0 %v744
        %v746 = vand.u32 %v536, 4294901760
        %v747 = vsub.f32 %v536, %v746
        %v748 = vand.u32 %v747, 4294901760
        %749 = vmatpush.msra.mxu0 %v748
        %v750 = vand.u32 %v541, 4294901760
        %751 = vmatmul.f32.gmra.mxu0 %v750
        %v752 = vpop.f32.mrf.mxu0
        %v753 = vadd.f32 %v708, %v752
        %v754 = vand.u32 %v544, 4294901760
        %755 = vmatmul.f32.gmra.mxu0 %v754
        %v756 = vpop.f32.mrf.mxu0
        %v757 = vadd.f32 %v714, %v756
        %v758 = vand.u32 %v547, 4294901760
        %759 = vmatmul.f32.gmra.mxu0 %v758
        %v760 = vpop.f32.mrf.mxu0
        %v761 = vadd.f32 %v720, %v760
        %762 = vdwg.mxu0
        %763 = vmatpush.msra.mxu0 0.0
        %764 = vmatpush.msra.mxu0 0.0
        %765 = vmatpush.msra.mxu0 0.0
        %766 = vmatpush.msra.mxu0 0.0
        %767 = vmatpush.msra.mxu0 0.0
        %768 = vmatpush.msra.mxu0 0.0
        %769 = vmatpush.msra.mxu0 0.0
        %770 = vmatpush.msra.mxu0 0.0
        %771 = vmatpush.msra.mxu0 0.0
        %772 = vmatpush.msra.mxu0 0.0
        %773 = vmatpush.msra.mxu0 0.0
        %774 = vmatpush.msra.mxu0 0.0
        %v775 = vand.u32 %v539, 4294901760
        %776 = vmatpush.msra.mxu0 %v775
        %v777 = vand.u32 %v538, 4294901760
        %778 = vmatpush.msra.mxu0 %v777
        %v779 = vand.u32 %v537, 4294901760
        %780 = vmatpush.msra.mxu0 %v779
        %v781 = vand.u32 %v536, 4294901760
        %782 = vmatpush.msra.mxu0 %v781
        %v783 = vand.u32 %v541, 4294901760
        %784 = vmatmul.f32.gmra.mxu0 %v783
        %v785 = vpop.f32.mrf.mxu0
        %v786 = vadd.f32 %v753, %v785
        %v787 = vand.u32 %v544, 4294901760
        %788 = vmatmul.f32.gmra.mxu0 %v787
        %v789 = vpop.f32.mrf.mxu0
        %v790 = vadd.f32 %v757, %v789
        %v791 = vand.u32 %v547, 4294901760
        %792 = vmatmul.f32.gmra.mxu0 %v791
        %v793 = vpop.f32.mrf.mxu0
        %v794 = vadd.f32 %v761, %v793
        %795 = vdwg.mxu0
        %v796 = vmul.f32 %v786, %v786
        %v797 = vmul.f32 %v790, %v790
        %v798 = vadd.f32 %v796, %v797
        %v799 = vmul.f32 %v794, %v794
        %v800 = vadd.f32 %v798, %v799
        %v801 = vld [vmem:[%s3 + $0x1] sm:$0x1]
        %v802 = vrsqrt.pop %v800
        %v803 = vmul.f32 %v802, %v800
        %v804 = vmul.f32 %v803, %v802
        %v805 = vmul.f32 0.5, %v804
        %v806 = vsub.f32 1.5, %v805
        %v807 = vmul.f32 %v802, %v806
        %v808 = vmul.f32 %v800, %v807
        %vm809 = vcmp.eq.f32.partialorder %v800, inf
        %v810 = vsel %vm809, %v800, %v808
        %vm811 = vcmp.eq.f32.partialorder %v800, 0.0
        %v812 = vand.u32 %v800, 2147483648
        %v813 = vsel %vm811, %v812, %v810
        %v814 = vsub.f32 %v813, 1.0
        %v815 = vperm.slane %v801, 0
        %817 = vrot.lane.b32.xlu0 %v814, 96
        %v818 = vpop.permute.xlu0 %817
        %v820 = vmul.f32 %v815, %v818
        %v821 = vadd.f32 %v820, 1.0
        %v822 = vadd.f32 %v821, 1e-06
        %v823 = vrcp.pop %v822
        %v824 = vmul.f32 %v822, %v823
        %v825 = vsub.f32 1.0, %v824
        %v826 = vmul.f32 %v823, %v825
        %v827 = vadd.f32 %v823, %v826
        %vm828 = vweird.f32 %v822
        %vm829 = vweird.f32 %v823
        %vm830 = vmor %vm828, %vm829
        %v831 = vsel %vm830, %v823, %v827
        %v832 = vand.u32 2147483647, %v822
        %vm833 = vcmp.eq.f32.partialorder %v832, 8.507059e+37
        %v834 = vand.u32 %v822, 2147483648
        %v835 = vor.u32 1.1754944e-38, %v834
        %v836 = vsel %vm833, %v835, %v831
        %838 = vrot.lane.b32.xlu0 %v836, 32
        %v839 = vpop.permute.xlu0 %838
        %v841 = vmul.f32 %v786, %v839
        %843 = vrot.lane.b32.xlu0 %v841, 96
        %v844 = vpop.permute.xlu0 %843
        %s846 = scalar_lea.vmem [#allocation2], 8
        %847 = vst.msk [vmem:[%s846] sm:$0xff] %vm287, %v844
        %s848 = scalar_lea.vmem %s281, 8 [#allocation4]
        %849 = vst.msk [vmem:[%s848] sm:$0xff] %vm287, %v786
        %v850 = vmul.f32 %v790, %v839
        %852 = vrot.lane.b32.xlu0 %v850, 96
        %v853 = vpop.permute.xlu0 %852
        %s855 = scalar_lea.vmem [#allocation2], 16
        %856 = vst.msk [vmem:[%s855] sm:$0xff] %vm287, %v853
        %s857 = scalar_lea.vmem %s281, 16 [#allocation4]
        %858 = vst.msk [vmem:[%s857] sm:$0xff] %vm287, %v790
        %v859 = vmul.f32 %v794, %v839
        %861 = vrot.lane.b32.xlu0 %v859, 96
        %v862 = vpop.permute.xlu0 %861
        %s864 = scalar_lea.vmem [#allocation2], 24
        %865 = vst.msk [vmem:[%s864] sm:$0xff] %vm287, %v862
        %s866 = scalar_lea.vmem %s281, 24 [#allocation4]
        %867 = vst.msk [vmem:[%s866] sm:$0xff] %vm287, %v794
        %s868 = scalar_lea.vmem %s258, 32 [#allocation3]
        %v869 = vld [vmem:[%s868] sm:$0xff]
        %s870 = scalar_lea.vmem %s258, 40 [#allocation3]
        %v871 = vld [vmem:[%s870] sm:$0xff]
        %s872 = scalar_lea.vmem %s258, 48 [#allocation3]
        %v873 = vld [vmem:[%s872] sm:$0xff]
        %s874 = scalar_lea.vmem %s1, 64
        %v875 = vld [vmem:[%s874] sm:$0xff]
        %v876 = vld [vmem:[%s874 + $0x8] sm:$0xff]
        %v877 = vld [vmem:[%s874 + $0x10] sm:$0xff]
        %v878 = vld [vmem:[%s874 + $0x18] sm:$0xff]
        %v880 = vsel %vm287, %v869, 0
        %v883 = vsel %vm287, %v871, 0
        %v886 = vsel %vm287, %v873, 0
        %888 = vmatpush.msra.mxu0 0.0
        %889 = vmatpush.msra.mxu0 0.0
        %890 = vmatpush.msra.mxu0 0.0
        %891 = vmatpush.msra.mxu0 0.0
        %892 = vmatpush.msra.mxu0 0.0
        %893 = vmatpush.msra.mxu0 0.0
        %894 = vmatpush.msra.mxu0 0.0
        %895 = vmatpush.msra.mxu0 0.0
        %896 = vmatpush.msra.mxu0 0.0
        %897 = vmatpush.msra.mxu0 0.0
        %898 = vmatpush.msra.mxu0 0.0
        %899 = vmatpush.msra.mxu0 0.0
        %v900 = vand.u32 %v878, 4294901760
        %901 = vmatpush.msra.mxu0 %v900
        %v902 = vand.u32 %v877, 4294901760
        %903 = vmatpush.msra.mxu0 %v902
        %v904 = vand.u32 %v876, 4294901760
        %905 = vmatpush.msra.mxu0 %v904
        %v906 = vand.u32 %v875, 4294901760
        %907 = vmatpush.msra.mxu0 %v906
        %v908 = vand.u32 %v880, 4294901760
        %v909 = vsub.f32 %v880, %v908
        %v910 = vand.u32 %v909, 4294901760
        %v911 = vsub.f32 %v909, %v910
        %v912 = vand.u32 %v911, 4294901760
        %913 = vmatmul.f32.gmra.mxu0 %v912
        %v914 = vpop.f32.mrf.mxu0
        %v915 = vadd.f32 0.0, %v914
        %v916 = vand.u32 %v883, 4294901760
        %v917 = vsub.f32 %v883, %v916
        %v918 = vand.u32 %v917, 4294901760
        %v919 = vsub.f32 %v917, %v918
        %v920 = vand.u32 %v919, 4294901760
        %921 = vmatmul.f32.gmra.mxu0 %v920
        %v922 = vpop.f32.mrf.mxu0
        %v923 = vadd.f32 0.0, %v922
        %v924 = vand.u32 %v886, 4294901760
        %v925 = vsub.f32 %v886, %v924
        %v926 = vand.u32 %v925, 4294901760
        %v927 = vsub.f32 %v925, %v926
        %v928 = vand.u32 %v927, 4294901760
        %929 = vmatmul.f32.gmra.mxu0 %v928
        %v930 = vpop.f32.mrf.mxu0
        %v931 = vadd.f32 0.0, %v930
        %932 = vdwg.mxu0
        %933 = vmatpush.msra.mxu0 0.0
        %934 = vmatpush.msra.mxu0 0.0
        %935 = vmatpush.msra.mxu0 0.0
        %936 = vmatpush.msra.mxu0 0.0
        %937 = vmatpush.msra.mxu0 0.0
        %938 = vmatpush.msra.mxu0 0.0
        %939 = vmatpush.msra.mxu0 0.0
        %940 = vmatpush.msra.mxu0 0.0
        %941 = vmatpush.msra.mxu0 0.0
        %942 = vmatpush.msra.mxu0 0.0
        %943 = vmatpush.msra.mxu0 0.0
        %944 = vmatpush.msra.mxu0 0.0
        %v945 = vand.u32 %v878, 4294901760
        %v946 = vsub.f32 %v878, %v945
        %v947 = vand.u32 %v946, 4294901760
        %v948 = vsub.f32 %v946, %v947
        %v949 = vand.u32 %v948, 4294901760
        %950 = vmatpush.msra.mxu0 %v949
        %v951 = vand.u32 %v877, 4294901760
        %v952 = vsub.f32 %v877, %v951
        %v953 = vand.u32 %v952, 4294901760
        %v954 = vsub.f32 %v952, %v953
        %v955 = vand.u32 %v954, 4294901760
        %956 = vmatpush.msra.mxu0 %v955
        %v957 = vand.u32 %v876, 4294901760
        %v958 = vsub.f32 %v876, %v957
        %v959 = vand.u32 %v958, 4294901760
        %v960 = vsub.f32 %v958, %v959
        %v961 = vand.u32 %v960, 4294901760
        %962 = vmatpush.msra.mxu0 %v961
        %v963 = vand.u32 %v875, 4294901760
        %v964 = vsub.f32 %v875, %v963
        %v965 = vand.u32 %v964, 4294901760
        %v966 = vsub.f32 %v964, %v965
        %v967 = vand.u32 %v966, 4294901760
        %968 = vmatpush.msra.mxu0 %v967
        %v969 = vand.u32 %v880, 4294901760
        %970 = vmatmul.f32.gmra.mxu0 %v969
        %v971 = vpop.f32.mrf.mxu0
        %v972 = vadd.f32 %v915, %v971
        %v973 = vand.u32 %v883, 4294901760
        %974 = vmatmul.f32.gmra.mxu0 %v973
        %v975 = vpop.f32.mrf.mxu0
        %v976 = vadd.f32 %v923, %v975
        %v977 = vand.u32 %v886, 4294901760
        %978 = vmatmul.f32.gmra.mxu0 %v977
        %v979 = vpop.f32.mrf.mxu0
        %v980 = vadd.f32 %v931, %v979
        %981 = vdwg.mxu0
        %982 = vmatpush.msra.mxu0 0.0
        %983 = vmatpush.msra.mxu0 0.0
        %984 = vmatpush.msra.mxu0 0.0
        %985 = vmatpush.msra.mxu0 0.0
        %986 = vmatpush.msra.mxu0 0.0
        %987 = vmatpush.msra.mxu0 0.0
        %988 = vmatpush.msra.mxu0 0.0
        %989 = vmatpush.msra.mxu0 0.0
        %990 = vmatpush.msra.mxu0 0.0
        %991 = vmatpush.msra.mxu0 0.0
        %992 = vmatpush.msra.mxu0 0.0
        %993 = vmatpush.msra.mxu0 0.0
        %v994 = vand.u32 %v878, 4294901760
        %v995 = vsub.f32 %v878, %v994
        %996 = vmatpush.msra.mxu0 %v995
        %v997 = vand.u32 %v877, 4294901760
        %v998 = vsub.f32 %v877, %v997
        %999 = vmatpush.msra.mxu0 %v998
        %v1000 = vand.u32 %v876, 4294901760
        %v1001 = vsub.f32 %v876, %v1000
        %1002 = vmatpush.msra.mxu0 %v1001
        %v1003 = vand.u32 %v875, 4294901760
        %v1004 = vsub.f32 %v875, %v1003
        %1005 = vmatpush.msra.mxu0 %v1004
        %v1006 = vand.u32 %v880, 4294901760
        %v1007 = vsub.f32 %v880, %v1006
        %1008 = vmatmul.f32.gmra.mxu0 %v1007
        %v1009 = vpop.f32.mrf.mxu0
        %v1010 = vadd.f32 %v972, %v1009
        %v1011 = vand.u32 %v883, 4294901760
        %v1012 = vsub.f32 %v883, %v1011
        %1013 = vmatmul.f32.gmra.mxu0 %v1012
        %v1014 = vpop.f32.mrf.mxu0
        %v1015 = vadd.f32 %v976, %v1014
        %v1016 = vand.u32 %v886, 4294901760
        %v1017 = vsub.f32 %v886, %v1016
        %1018 = vmatmul.f32.gmra.mxu0 %v1017
        %v1019 = vpop.f32.mrf.mxu0
        %v1020 = vadd.f32 %v980, %v1019
        %1021 = vdwg.mxu0
        %1022 = vmatpush.msra.mxu0 0.0
        %1023 = vmatpush.msra.mxu0 0.0
        %1024 = vmatpush.msra.mxu0 0.0
        %1025 = vmatpush.msra.mxu0 0.0
        %1026 = vmatpush.msra.mxu0 0.0
        %1027 = vmatpush.msra.mxu0 0.0
        %1028 = vmatpush.msra.mxu0 0.0
        %1029 = vmatpush.msra.mxu0 0.0
        %1030 = vmatpush.msra.mxu0 0.0
        %1031 = vmatpush.msra.mxu0 0.0
        %1032 = vmatpush.msra.mxu0 0.0
        %1033 = vmatpush.msra.mxu0 0.0
        %v1034 = vand.u32 %v878, 4294901760
        %1035 = vmatpush.msra.mxu0 %v1034
        %v1036 = vand.u32 %v877, 4294901760
        %1037 = vmatpush.msra.mxu0 %v1036
        %v1038 = vand.u32 %v876, 4294901760
        %1039 = vmatpush.msra.mxu0 %v1038
        %v1040 = vand.u32 %v875, 4294901760
        %1041 = vmatpush.msra.mxu0 %v1040
        %v1042 = vand.u32 %v880, 4294901760
        %v1043 = vsub.f32 %v880, %v1042
        %v1044 = vand.u32 %v1043, 4294901760
        %1045 = vmatmul.f32.gmra.mxu0 %v1044
        %v1046 = vpop.f32.mrf.mxu0
        %v1047 = vadd.f32 %v1010, %v1046
        %v1048 = vand.u32 %v883, 4294901760
        %v1049 = vsub.f32 %v883, %v1048
        %v1050 = vand.u32 %v1049, 4294901760
        %1051 = vmatmul.f32.gmra.mxu0 %v1050
        %v1052 = vpop.f32.mrf.mxu0
        %v1053 = vadd.f32 %v1015, %v1052
        %v1054 = vand.u32 %v886, 4294901760
        %v1055 = vsub.f32 %v886, %v1054
        %v1056 = vand.u32 %v1055, 4294901760
        %1057 = vmatmul.f32.gmra.mxu0 %v1056
        %v1058 = vpop.f32.mrf.mxu0
        %v1059 = vadd.f32 %v1020, %v1058
        %1060 = vdwg.mxu0
        %1061 = vmatpush.msra.mxu0 0.0
        %1062 = vmatpush.msra.mxu0 0.0
        %1063 = vmatpush.msra.mxu0 0.0
        %1064 = vmatpush.msra.mxu0 0.0
        %1065 = vmatpush.msra.mxu0 0.0
        %1066 = vmatpush.msra.mxu0 0.0
        %1067 = vmatpush.msra.mxu0 0.0
        %1068 = vmatpush.msra.mxu0 0.0
        %1069 = vmatpush.msra.mxu0 0.0
        %1070 = vmatpush.msra.mxu0 0.0
        %1071 = vmatpush.msra.mxu0 0.0
        %1072 = vmatpush.msra.mxu0 0.0
        %v1073 = vand.u32 %v878, 4294901760
        %v1074 = vsub.f32 %v878, %v1073
        %v1075 = vand.u32 %v1074, 4294901760
        %1076 = vmatpush.msra.mxu0 %v1075
        %v1077 = vand.u32 %v877, 4294901760
        %v1078 = vsub.f32 %v877, %v1077
        %v1079 = vand.u32 %v1078, 4294901760
        %1080 = vmatpush.msra.mxu0 %v1079
        %v1081 = vand.u32 %v876, 4294901760
        %v1082 = vsub.f32 %v876, %v1081
        %v1083 = vand.u32 %v1082, 4294901760
        %1084 = vmatpush.msra.mxu0 %v1083
        %v1085 = vand.u32 %v875, 4294901760
        %v1086 = vsub.f32 %v875, %v1085
        %v1087 = vand.u32 %v1086, 4294901760
        %1088 = vmatpush.msra.mxu0 %v1087
        %v1089 = vand.u32 %v880, 4294901760
        %1090 = vmatmul.f32.gmra.mxu0 %v1089
        %v1091 = vpop.f32.mrf.mxu0
        %v1092 = vadd.f32 %v1047, %v1091
        %v1093 = vand.u32 %v883, 4294901760
        %1094 = vmatmul.f32.gmra.mxu0 %v1093
        %v1095 = vpop.f32.mrf.mxu0
        %v1096 = vadd.f32 %v1053, %v1095
        %v1097 = vand.u32 %v886, 4294901760
        %1098 = vmatmul.f32.gmra.mxu0 %v1097
        %v1099 = vpop.f32.mrf.mxu0
        %v1100 = vadd.f32 %v1059, %v1099
        %1101 = vdwg.mxu0
        %1102 = vmatpush.msra.mxu0 0.0
        %1103 = vmatpush.msra.mxu0 0.0
        %1104 = vmatpush.msra.mxu0 0.0
        %1105 = vmatpush.msra.mxu0 0.0
        %1106 = vmatpush.msra.mxu0 0.0
        %1107 = vmatpush.msra.mxu0 0.0
        %1108 = vmatpush.msra.mxu0 0.0
        %1109 = vmatpush.msra.mxu0 0.0
        %1110 = vmatpush.msra.mxu0 0.0
        %1111 = vmatpush.msra.mxu0 0.0
        %1112 = vmatpush.msra.mxu0 0.0
        %1113 = vmatpush.msra.mxu0 0.0
        %v1114 = vand.u32 %v878, 4294901760
        %1115 = vmatpush.msra.mxu0 %v1114
        %v1116 = vand.u32 %v877, 4294901760
        %1117 = vmatpush.msra.mxu0 %v1116
        %v1118 = vand.u32 %v876, 4294901760
        %1119 = vmatpush.msra.mxu0 %v1118
        %v1120 = vand.u32 %v875, 4294901760
        %1121 = vmatpush.msra.mxu0 %v1120
        %v1122 = vand.u32 %v880, 4294901760
        %1123 = vmatmul.f32.gmra.mxu0 %v1122
        %v1124 = vpop.f32.mrf.mxu0
        %v1125 = vadd.f32 %v1092, %v1124
        %v1126 = vand.u32 %v883, 4294901760
        %1127 = vmatmul.f32.gmra.mxu0 %v1126
        %v1128 = vpop.f32.mrf.mxu0
        %v1129 = vadd.f32 %v1096, %v1128
        %v1130 = vand.u32 %v886, 4294901760
        %1131 = vmatmul.f32.gmra.mxu0 %v1130
        %v1132 = vpop.f32.mrf.mxu0
        %v1133 = vadd.f32 %v1100, %v1132
        %1134 = vdwg.mxu0
        %v1135 = vmul.f32 %v1125, %v1125
        %v1136 = vmul.f32 %v1129, %v1129
        %v1137 = vadd.f32 %v1135, %v1136
        %v1138 = vmul.f32 %v1133, %v1133
        %v1139 = vadd.f32 %v1137, %v1138
        %v1140 = vld [vmem:[%s3 + $0x2] sm:$0x1]
        %v1141 = vrsqrt.pop %v1139
        %v1142 = vmul.f32 %v1141, %v1139
        %v1143 = vmul.f32 %v1142, %v1141
        %v1144 = vmul.f32 0.5, %v1143
        %v1145 = vsub.f32 1.5, %v1144
        %v1146 = vmul.f32 %v1141, %v1145
        %v1147 = vmul.f32 %v1139, %v1146
        %vm1148 = vcmp.eq.f32.partialorder %v1139, inf
        %v1149 = vsel %vm1148, %v1139, %v1147
        %vm1150 = vcmp.eq.f32.partialorder %v1139, 0.0
        %v1151 = vand.u32 %v1139, 2147483648
        %v1152 = vsel %vm1150, %v1151, %v1149
        %v1153 = vsub.f32 %v1152, 1.0
        %v1154 = vperm.slane %v1140, 0
        %1156 = vrot.lane.b32.xlu0 %v1153, 96
        %v1157 = vpop.permute.xlu0 %1156
        %v1159 = vmul.f32 %v1154, %v1157
        %v1160 = vadd.f32 %v1159, 1.0
        %v1161 = vadd.f32 %v1160, 1e-06
        %v1162 = vrcp.pop %v1161
        %v1163 = vmul.f32 %v1161, %v1162
        %v1164 = vsub.f32 1.0, %v1163
        %v1165 = vmul.f32 %v1162, %v1164
        %v1166 = vadd.f32 %v1162, %v1165
        %vm1167 = vweird.f32 %v1161
        %vm1168 = vweird.f32 %v1162
        %vm1169 = vmor %vm1167, %vm1168
        %v1170 = vsel %vm1169, %v1162, %v1166
        %v1171 = vand.u32 2147483647, %v1161
        %vm1172 = vcmp.eq.f32.partialorder %v1171, 8.507059e+37
        %v1173 = vand.u32 %v1161, 2147483648
        %v1174 = vor.u32 1.1754944e-38, %v1173
        %v1175 = vsel %vm1172, %v1174, %v1170
        %1177 = vrot.lane.b32.xlu0 %v1175, 32
        %v1178 = vpop.permute.xlu0 %1177
        %v1180 = vmul.f32 %v1125, %v1178
        %1182 = vrot.lane.b32.xlu0 %v1180, 96
        %v1183 = vpop.permute.xlu0 %1182
        %s1185 = scalar_lea.vmem [#allocation2], 32
        %1186 = vst.msk [vmem:[%s1185] sm:$0xff] %vm287, %v1183
        %s1187 = scalar_lea.vmem %s281, 32 [#allocation4]
        %1188 = vst.msk [vmem:[%s1187] sm:$0xff] %vm287, %v1125
        %v1189 = vmul.f32 %v1129, %v1178
        %1191 = vrot.lane.b32.xlu0 %v1189, 96
        %v1192 = vpop.permute.xlu0 %1191
        %s1194 = scalar_lea.vmem [#allocation2], 40
        %1195 = vst.msk [vmem:[%s1194] sm:$0xff] %vm287, %v1192
        %s1196 = scalar_lea.vmem %s281, 40 [#allocation4]
        %1197 = vst.msk [vmem:[%s1196] sm:$0xff] %vm287, %v1129
        %v1198 = vmul.f32 %v1133, %v1178
        %1200 = vrot.lane.b32.xlu0 %v1198, 96
        %v1201 = vpop.permute.xlu0 %1200
        %s1203 = scalar_lea.vmem [#allocation2], 48
        %1204 = vst.msk [vmem:[%s1203] sm:$0xff] %vm287, %v1201
        %s1205 = scalar_lea.vmem %s281, 48 [#allocation4]
        %1206 = vst.msk [vmem:[%s1205] sm:$0xff] %vm287, %v1133
        %s1207 = scalar_lea.vmem %s258, 56 [#allocation3]
        %v1208 = vld [vmem:[%s1207] sm:$0xff]
        %s1209 = scalar_lea.vmem %s1, 96
        %v1210 = vld [vmem:[%s1209] sm:$0xff]
        %v1211 = vld [vmem:[%s1209 + $0x8] sm:$0xff]
        %v1212 = vld [vmem:[%s1209 + $0x10] sm:$0xff]
        %v1213 = vld [vmem:[%s1209 + $0x18] sm:$0xff]
        %v1215 = vsel %vm287, %v1208, 0
        %1217 = vmatpush.msra.mxu0 0.0
        %1218 = vmatpush.msra.mxu0 0.0
        %1219 = vmatpush.msra.mxu0 0.0
        %1220 = vmatpush.msra.mxu0 0.0
        %1221 = vmatpush.msra.mxu0 0.0
        %1222 = vmatpush.msra.mxu0 0.0
        %1223 = vmatpush.msra.mxu0 0.0
        %1224 = vmatpush.msra.mxu0 0.0
        %1225 = vmatpush.msra.mxu0 0.0
        %1226 = vmatpush.msra.mxu0 0.0
        %1227 = vmatpush.msra.mxu0 0.0
        %1228 = vmatpush.msra.mxu0 0.0
        %v1229 = vand.u32 %v1213, 4294901760
        %1230 = vmatpush.msra.mxu0 %v1229
        %v1231 = vand.u32 %v1212, 4294901760
        %1232 = vmatpush.msra.mxu0 %v1231
        %v1233 = vand.u32 %v1211, 4294901760
        %1234 = vmatpush.msra.mxu0 %v1233
        %v1235 = vand.u32 %v1210, 4294901760
        %1236 = vmatpush.msra.mxu0 %v1235
        %v1237 = vand.u32 %v1215, 4294901760
        %v1238 = vsub.f32 %v1215, %v1237
        %v1239 = vand.u32 %v1238, 4294901760
        %v1240 = vsub.f32 %v1238, %v1239
        %v1241 = vand.u32 %v1240, 4294901760
        %1242 = vmatmul.f32.gmra.mxu0 %v1241
        %v1243 = vpop.f32.mrf.mxu0
        %v1244 = vadd.f32 0.0, %v1243
        %1245 = vdwg.mxu0
        %1246 = vmatpush.msra.mxu0 0.0
        %1247 = vmatpush.msra.mxu0 0.0
        %1248 = vmatpush.msra.mxu0 0.0
        %1249 = vmatpush.msra.mxu0 0.0
        %1250 = vmatpush.msra.mxu0 0.0
        %1251 = vmatpush.msra.mxu0 0.0
        %1252 = vmatpush.msra.mxu0 0.0
        %1253 = vmatpush.msra.mxu0 0.0
        %1254 = vmatpush.msra.mxu0 0.0
        %1255 = vmatpush.msra.mxu0 0.0
        %1256 = vmatpush.msra.mxu0 0.0
        %1257 = vmatpush.msra.mxu0 0.0
        %v1258 = vand.u32 %v1213, 4294901760
        %v1259 = vsub.f32 %v1213, %v1258
        %v1260 = vand.u32 %v1259, 4294901760
        %v1261 = vsub.f32 %v1259, %v1260
        %v1262 = vand.u32 %v1261, 4294901760
        %1263 = vmatpush.msra.mxu0 %v1262
        %v1264 = vand.u32 %v1212, 4294901760
        %v1265 = vsub.f32 %v1212, %v1264
        %v1266 = vand.u32 %v1265, 4294901760
        %v1267 = vsub.f32 %v1265, %v1266
        %v1268 = vand.u32 %v1267, 4294901760
        %1269 = vmatpush.msra.mxu0 %v1268
        %v1270 = vand.u32 %v1211, 4294901760
        %v1271 = vsub.f32 %v1211, %v1270
        %v1272 = vand.u32 %v1271, 4294901760
        %v1273 = vsub.f32 %v1271, %v1272
        %v1274 = vand.u32 %v1273, 4294901760
        %1275 = vmatpush.msra.mxu0 %v1274
        %v1276 = vand.u32 %v1210, 4294901760
        %v1277 = vsub.f32 %v1210, %v1276
        %v1278 = vand.u32 %v1277, 4294901760
        %v1279 = vsub.f32 %v1277, %v1278
        %v1280 = vand.u32 %v1279, 4294901760
        %1281 = vmatpush.msra.mxu0 %v1280
        %v1282 = vand.u32 %v1215, 4294901760
        %1283 = vmatmul.f32.gmra.mxu0 %v1282
        %v1284 = vpop.f32.mrf.mxu0
        %v1285 = vadd.f32 %v1244, %v1284
        %1286 = vdwg.mxu0
        %1287 = vmatpush.msra.mxu0 0.0
        %1288 = vmatpush.msra.mxu0 0.0
        %1289 = vmatpush.msra.mxu0 0.0
        %1290 = vmatpush.msra.mxu0 0.0
        %1291 = vmatpush.msra.mxu0 0.0
        %1292 = vmatpush.msra.mxu0 0.0
        %1293 = vmatpush.msra.mxu0 0.0
        %1294 = vmatpush.msra.mxu0 0.0
        %1295 = vmatpush.msra.mxu0 0.0
        %1296 = vmatpush.msra.mxu0 0.0
        %1297 = vmatpush.msra.mxu0 0.0
        %1298 = vmatpush.msra.mxu0 0.0
        %v1299 = vand.u32 %v1213, 4294901760
        %v1300 = vsub.f32 %v1213, %v1299
        %1301 = vmatpush.msra.mxu0 %v1300
        %v1302 = vand.u32 %v1212, 4294901760
        %v1303 = vsub.f32 %v1212, %v1302
        %1304 = vmatpush.msra.mxu0 %v1303
        %v1305 = vand.u32 %v1211, 4294901760
        %v1306 = vsub.f32 %v1211, %v1305
        %1307 = vmatpush.msra.mxu0 %v1306
        %v1308 = vand.u32 %v1210, 4294901760
        %v1309 = vsub.f32 %v1210, %v1308
        %1310 = vmatpush.msra.mxu0 %v1309
        %v1311 = vand.u32 %v1215, 4294901760
        %v1312 = vsub.f32 %v1215, %v1311
        %1313 = vmatmul.f32.gmra.mxu0 %v1312
        %v1314 = vpop.f32.mrf.mxu0
        %v1315 = vadd.f32 %v1285, %v1314
        %1316 = vdwg.mxu0
        %1317 = vmatpush.msra.mxu0 0.0
        %1318 = vmatpush.msra.mxu0 0.0
        %1319 = vmatpush.msra.mxu0 0.0
        %1320 = vmatpush.msra.mxu0 0.0
        %1321 = vmatpush.msra.mxu0 0.0
        %1322 = vmatpush.msra.mxu0 0.0
        %1323 = vmatpush.msra.mxu0 0.0
        %1324 = vmatpush.msra.mxu0 0.0
        %1325 = vmatpush.msra.mxu0 0.0
        %1326 = vmatpush.msra.mxu0 0.0
        %1327 = vmatpush.msra.mxu0 0.0
        %1328 = vmatpush.msra.mxu0 0.0
        %v1329 = vand.u32 %v1213, 4294901760
        %1330 = vmatpush.msra.mxu0 %v1329
        %v1331 = vand.u32 %v1212, 4294901760
        %1332 = vmatpush.msra.mxu0 %v1331
        %v1333 = vand.u32 %v1211, 4294901760
        %1334 = vmatpush.msra.mxu0 %v1333
        %v1335 = vand.u32 %v1210, 4294901760
        %1336 = vmatpush.msra.mxu0 %v1335
        %v1337 = vand.u32 %v1215, 4294901760
        %v1338 = vsub.f32 %v1215, %v1337
        %v1339 = vand.u32 %v1338, 4294901760
        %1340 = vmatmul.f32.gmra.mxu0 %v1339
        %v1341 = vpop.f32.mrf.mxu0
        %v1342 = vadd.f32 %v1315, %v1341
        %1343 = vdwg.mxu0
        %1344 = vmatpush.msra.mxu0 0.0
        %1345 = vmatpush.msra.mxu0 0.0
        %1346 = vmatpush.msra.mxu0 0.0
        %1347 = vmatpush.msra.mxu0 0.0
        %1348 = vmatpush.msra.mxu0 0.0
        %1349 = vmatpush.msra.mxu0 0.0
        %1350 = vmatpush.msra.mxu0 0.0
        %1351 = vmatpush.msra.mxu0 0.0
        %1352 = vmatpush.msra.mxu0 0.0
        %1353 = vmatpush.msra.mxu0 0.0
        %1354 = vmatpush.msra.mxu0 0.0
        %1355 = vmatpush.msra.mxu0 0.0
        %v1356 = vand.u32 %v1213, 4294901760
        %v1357 = vsub.f32 %v1213, %v1356
        %v1358 = vand.u32 %v1357, 4294901760
        %1359 = vmatpush.msra.mxu0 %v1358
        %v1360 = vand.u32 %v1212, 4294901760
        %v1361 = vsub.f32 %v1212, %v1360
        %v1362 = vand.u32 %v1361, 4294901760
        %1363 = vmatpush.msra.mxu0 %v1362
        %v1364 = vand.u32 %v1211, 4294901760
        %v1365 = vsub.f32 %v1211, %v1364
        %v1366 = vand.u32 %v1365, 4294901760
        %1367 = vmatpush.msra.mxu0 %v1366
        %v1368 = vand.u32 %v1210, 4294901760
        %v1369 = vsub.f32 %v1210, %v1368
        %v1370 = vand.u32 %v1369, 4294901760
        %1371 = vmatpush.msra.mxu0 %v1370
        %v1372 = vand.u32 %v1215, 4294901760
        %1373 = vmatmul.f32.gmra.mxu0 %v1372
        %v1374 = vpop.f32.mrf.mxu0
        %v1375 = vadd.f32 %v1342, %v1374
        %1376 = vdwg.mxu0
        %1377 = vmatpush.msra.mxu0 0.0
        %1378 = vmatpush.msra.mxu0 0.0
        %1379 = vmatpush.msra.mxu0 0.0
        %1380 = vmatpush.msra.mxu0 0.0
        %1381 = vmatpush.msra.mxu0 0.0
        %1382 = vmatpush.msra.mxu0 0.0
        %1383 = vmatpush.msra.mxu0 0.0
        %1384 = vmatpush.msra.mxu0 0.0
        %1385 = vmatpush.msra.mxu0 0.0
        %1386 = vmatpush.msra.mxu0 0.0
        %1387 = vmatpush.msra.mxu0 0.0
        %1388 = vmatpush.msra.mxu0 0.0
        %v1389 = vand.u32 %v1213, 4294901760
        %1390 = vmatpush.msra.mxu0 %v1389
        %v1391 = vand.u32 %v1212, 4294901760
        %1392 = vmatpush.msra.mxu0 %v1391
        %v1393 = vand.u32 %v1211, 4294901760
        %1394 = vmatpush.msra.mxu0 %v1393
        %v1395 = vand.u32 %v1210, 4294901760
        %1396 = vmatpush.msra.mxu0 %v1395
        %v1397 = vand.u32 %v1215, 4294901760
        %1398 = vmatmul.f32.gmra.mxu0 %v1397
        %v1399 = vpop.f32.mrf.mxu0
        %v1400 = vadd.f32 %v1375, %v1399
        %1401 = vdwg.mxu0
        %v1402 = vmul.f32 %v1400, %v1400
        %v1403 = vld [vmem:[%s3 + $0x3] sm:$0x1]
        %v1404 = vrsqrt.pop %v1402
        %v1405 = vmul.f32 %v1404, %v1402
        %v1406 = vmul.f32 %v1405, %v1404
        %v1407 = vmul.f32 0.5, %v1406
        %v1408 = vsub.f32 1.5, %v1407
        %v1409 = vmul.f32 %v1404, %v1408
        %v1410 = vmul.f32 %v1402, %v1409
        %vm1411 = vcmp.eq.f32.partialorder %v1402, inf
        %v1412 = vsel %vm1411, %v1402, %v1410
        %vm1413 = vcmp.eq.f32.partialorder %v1402, 0.0
        %v1414 = vand.u32 %v1402, 2147483648
        %v1415 = vsel %vm1413, %v1414, %v1412
        %v1416 = vsub.f32 %v1415, 1.0
        %v1417 = vperm.slane %v1403, 0
        %1419 = vrot.lane.b32.xlu0 %v1416, 96
        %v1420 = vpop.permute.xlu0 %1419
        %v1422 = vmul.f32 %v1417, %v1420
        %v1423 = vadd.f32 %v1422, 1.0
        %v1424 = vadd.f32 %v1423, 1e-06
        %v1425 = vrcp.pop %v1424
        %v1426 = vmul.f32 %v1424, %v1425
        %v1427 = vsub.f32 1.0, %v1426
        %v1428 = vmul.f32 %v1425, %v1427
        %v1429 = vadd.f32 %v1425, %v1428
        %vm1430 = vweird.f32 %v1424
        %vm1431 = vweird.f32 %v1425
        %vm1432 = vmor %vm1430, %vm1431
        %v1433 = vsel %vm1432, %v1425, %v1429
        %v1434 = vand.u32 2147483647, %v1424
        %vm1435 = vcmp.eq.f32.partialorder %v1434, 8.507059e+37
        %v1436 = vand.u32 %v1424, 2147483648
        %v1437 = vor.u32 1.1754944e-38, %v1436
        %v1438 = vsel %vm1435, %v1437, %v1433
        %1440 = vrot.lane.b32.xlu0 %v1438, 32
        %v1441 = vpop.permute.xlu0 %1440
        %v1443 = vmul.f32 %v1400, %v1441
        %1445 = vrot.lane.b32.xlu0 %v1443, 96
        %v1446 = vpop.permute.xlu0 %1445
        %s1448 = scalar_lea.vmem [#allocation2], 56
        %1449 = vst.msk [vmem:[%s1448] sm:$0xff] %vm287, %v1446
        %s1450 = scalar_lea.vmem %s281, 56 [#allocation4]
        %1451 = vst.msk [vmem:[%s1450] sm:$0xff] %vm287, %v1400
        %v1452 = vld [vmem:[%s258] sm:$0xff]
        %v1453 = vld [vmem:[%s529] sm:$0xff]
        %v1454 = vld [vmem:[%s531] sm:$0xff]
        %v1455 = vld [vmem:[%s533] sm:$0xff]
        %v1456 = vld [vmem:[%s868] sm:$0xff]
        %v1457 = vld [vmem:[%s870] sm:$0xff]
        %v1458 = vld [vmem:[%s872] sm:$0xff]
        %v1459 = vld [vmem:[%s1207] sm:$0xff]
        %v1460 = vld [vmem:[#allocation2] sm:$0xff]
        %v1461 = vld [vmem:[%s846] sm:$0xff]
        %v1462 = vld [vmem:[%s855] sm:$0xff]
        %v1463 = vld [vmem:[%s864] sm:$0xff]
        %v1464 = vld [vmem:[%s1185] sm:$0xff]
        %v1465 = vld [vmem:[%s1194] sm:$0xff]
        %v1466 = vld [vmem:[%s1203] sm:$0xff]
        %v1467 = vld [vmem:[%s1448] sm:$0xff]
        %v1468 = vld [vmem:[%s4] sm:$0xff]
        %v1469 = vld [vmem:[%s281] sm:$0xff]
        %v1470 = vmul.f32 %v1452, %v1460
        %v1471 = vperm.slane %v1468, 0
        %v1472 = vmul.f32 %v1470, %v1471
        %v1473 = vadd.f32 %v1469, %v1472
        %v1474 = vmul.f32 %v1453, %v1461
        %v1475 = vperm.slane %v1468, 1
        %v1476 = vmul.f32 %v1474, %v1475
        %v1477 = vadd.f32 %v1473, %v1476
        %v1478 = vmul.f32 %v1454, %v1462
        %v1479 = vperm.slane %v1468, 2
        %v1480 = vmul.f32 %v1478, %v1479
        %v1481 = vadd.f32 %v1477, %v1480
        %v1482 = vmul.f32 %v1455, %v1463
        %v1483 = vperm.slane %v1468, 3
        %v1484 = vmul.f32 %v1482, %v1483
        %v1485 = vadd.f32 %v1481, %v1484
        %v1486 = vmul.f32 %v1456, %v1464
        %v1487 = vperm.slane %v1468, 4
        %v1488 = vmul.f32 %v1486, %v1487
        %v1489 = vadd.f32 %v1485, %v1488
        %v1490 = vmul.f32 %v1457, %v1465
        %v1491 = vperm.slane %v1468, 5
        %v1492 = vmul.f32 %v1490, %v1491
        %v1493 = vadd.f32 %v1489, %v1492
        %v1494 = vmul.f32 %v1458, %v1466
        %v1495 = vperm.slane %v1468, 6
        %v1496 = vmul.f32 %v1494, %v1495
        %v1497 = vadd.f32 %v1493, %v1496
        %v1498 = vmul.f32 %v1459, %v1467
        %v1499 = vperm.slane %v1468, 7
        %v1500 = vmul.f32 %v1498, %v1499
        %v1501 = vadd.f32 %v1497, %v1500
        %1502 = vst.msk [vmem:[%s281] sm:$0xff] %vm287, %v1501
        %v1503 = vld [vmem:[%s4 + $0x8] sm:$0xff]
        %v1504 = vld [vmem:[%s848] sm:$0xff]
        %v1505 = vmul.f32 %v1452, %v1461
        %v1506 = vperm.slane %v1503, 0
        %v1507 = vmul.f32 %v1505, %v1506
        %v1508 = vadd.f32 %v1504, %v1507
        %v1509 = vmul.f32 %v1453, %v1460
        %v1510 = vperm.slane %v1503, 1
        %v1511 = vmul.f32 %v1509, %v1510
        %v1512 = vadd.f32 %v1508, %v1511
        %v1513 = vmul.f32 %v1454, %v1464
        %v1514 = vperm.slane %v1503, 2
        %v1515 = vmul.f32 %v1513, %v1514
        %v1516 = vadd.f32 %v1512, %v1515
        %v1517 = vmul.f32 %v1455, %v1465
        %v1518 = vperm.slane %v1503, 3
        %v1519 = vmul.f32 %v1517, %v1518
        %v1520 = vadd.f32 %v1516, %v1519
        %v1521 = vmul.f32 %v1456, %v1462
        %v1522 = vperm.slane %v1503, 4
        %v1523 = vmul.f32 %v1521, %v1522
        %v1524 = vadd.f32 %v1520, %v1523
        %v1525 = vmul.f32 %v1457, %v1463
        %v1526 = vperm.slane %v1503, 5
        %v1527 = vmul.f32 %v1525, %v1526
        %v1528 = vadd.f32 %v1524, %v1527
        %v1529 = vmul.f32 %v1458, %v1467
        %v1530 = vperm.slane %v1503, 6
        %v1531 = vmul.f32 %v1529, %v1530
        %v1532 = vadd.f32 %v1528, %v1531
        %v1533 = vmul.f32 %v1459, %v1466
        %v1534 = vperm.slane %v1503, 7
        %v1535 = vmul.f32 %v1533, %v1534
        %v1536 = vadd.f32 %v1532, %v1535
        %1537 = vst.msk [vmem:[%s848] sm:$0xff] %vm287, %v1536
        %v1538 = vld [vmem:[%s4 + $0x10] sm:$0xff]
        %v1539 = vld [vmem:[%s857] sm:$0xff]
        %v1540 = vmul.f32 %v1452, %v1462
        %v1541 = vperm.slane %v1538, 0
        %v1542 = vmul.f32 %v1540, %v1541
        %v1543 = vadd.f32 %v1539, %v1542
        %v1544 = vmul.f32 %v1453, %v1464
        %v1545 = vperm.slane %v1538, 1
        %v1546 = vmul.f32 %v1544, %v1545
        %v1547 = vadd.f32 %v1543, %v1546
        %v1548 = vmul.f32 %v1454, %v1460
        %v1549 = vperm.slane %v1538, 2
        %v1550 = vmul.f32 %v1548, %v1549
        %v1551 = vadd.f32 %v1547, %v1550
        %v1552 = vmul.f32 %v1455, %v1466
        %v1553 = vperm.slane %v1538, 3
        %v1554 = vmul.f32 %v1552, %v1553
        %v1555 = vadd.f32 %v1551, %v1554
        %v1556 = vmul.f32 %v1456, %v1461
        %v1557 = vperm.slane %v1538, 4
        %v1558 = vmul.f32 %v1556, %v1557
        %v1559 = vadd.f32 %v1555, %v1558
        %v1560 = vmul.f32 %v1457, %v1467
        %v1561 = vperm.slane %v1538, 5
        %v1562 = vmul.f32 %v1560, %v1561
        %v1563 = vadd.f32 %v1559, %v1562
        %v1564 = vmul.f32 %v1458, %v1463
        %v1565 = vperm.slane %v1538, 6
        %v1566 = vmul.f32 %v1564, %v1565
        %v1567 = vadd.f32 %v1563, %v1566
        %v1568 = vmul.f32 %v1459, %v1465
        %v1569 = vperm.slane %v1538, 7
        %v1570 = vmul.f32 %v1568, %v1569
        %v1571 = vadd.f32 %v1567, %v1570
        %1572 = vst.msk [vmem:[%s857] sm:$0xff] %vm287, %v1571
        %v1573 = vld [vmem:[%s4 + $0x18] sm:$0xff]
        %v1574 = vld [vmem:[%s866] sm:$0xff]
        %v1575 = vmul.f32 %v1452, %v1463
        %v1576 = vperm.slane %v1573, 0
        %v1577 = vmul.f32 %v1575, %v1576
        %v1578 = vadd.f32 %v1574, %v1577
        %v1579 = vmul.f32 %v1453, %v1465
        %v1580 = vperm.slane %v1573, 1
        %v1581 = vmul.f32 %v1579, %v1580
        %v1582 = vadd.f32 %v1578, %v1581
        %v1583 = vmul.f32 %v1454, %v1466
        %v1584 = vperm.slane %v1573, 2
        %v1585 = vmul.f32 %v1583, %v1584
        %v1586 = vadd.f32 %v1582, %v1585
        %v1587 = vmul.f32 %v1455, %v1460
        %v1588 = vperm.slane %v1573, 3
        %v1589 = vmul.f32 %v1587, %v1588
        %v1590 = vadd.f32 %v1586, %v1589
        %v1591 = vmul.f32 %v1456, %v1467
        %v1592 = vperm.slane %v1573, 4
        %v1593 = vmul.f32 %v1591, %v1592
        %v1594 = vadd.f32 %v1590, %v1593
        %v1595 = vmul.f32 %v1457, %v1461
        %v1596 = vperm.slane %v1573, 5
        %v1597 = vmul.f32 %v1595, %v1596
        %v1598 = vadd.f32 %v1594, %v1597
        %v1599 = vmul.f32 %v1458, %v1462
        %v1600 = vperm.slane %v1573, 6
        %v1601 = vmul.f32 %v1599, %v1600
        %v1602 = vadd.f32 %v1598, %v1601
        %v1603 = vmul.f32 %v1459, %v1464
        %v1604 = vperm.slane %v1573, 7
        %v1605 = vmul.f32 %v1603, %v1604
        %v1606 = vadd.f32 %v1602, %v1605
        %1607 = vst.msk [vmem:[%s866] sm:$0xff] %vm287, %v1606
        %v1608 = vld [vmem:[%s4 + $0x20] sm:$0xff]
        %v1609 = vld [vmem:[%s1187] sm:$0xff]
        %v1610 = vmul.f32 %v1452, %v1464
        %v1611 = vperm.slane %v1608, 0
        %v1612 = vmul.f32 %v1610, %v1611
        %v1613 = vadd.f32 %v1609, %v1612
        %v1614 = vmul.f32 %v1453, %v1462
        %v1615 = vperm.slane %v1608, 1
        %v1616 = vmul.f32 %v1614, %v1615
        %v1617 = vadd.f32 %v1613, %v1616
        %v1618 = vmul.f32 %v1454, %v1461
        %v1619 = vperm.slane %v1608, 2
        %v1620 = vmul.f32 %v1618, %v1619
        %v1621 = vadd.f32 %v1617, %v1620
        %v1622 = vmul.f32 %v1455, %v1467
        %v1623 = vperm.slane %v1608, 3
        %v1624 = vmul.f32 %v1622, %v1623
        %v1625 = vadd.f32 %v1621, %v1624
        %v1626 = vmul.f32 %v1456, %v1460
        %v1627 = vperm.slane %v1608, 4
        %v1628 = vmul.f32 %v1626, %v1627
        %v1629 = vadd.f32 %v1625, %v1628
        %v1630 = vmul.f32 %v1457, %v1466
        %v1631 = vperm.slane %v1608, 5
        %v1632 = vmul.f32 %v1630, %v1631
        %v1633 = vadd.f32 %v1629, %v1632
        %v1634 = vmul.f32 %v1458, %v1465
        %v1635 = vperm.slane %v1608, 6
        %v1636 = vmul.f32 %v1634, %v1635
        %v1637 = vadd.f32 %v1633, %v1636
        %v1638 = vmul.f32 %v1459, %v1463
        %v1639 = vperm.slane %v1608, 7
        %v1640 = vmul.f32 %v1638, %v1639
        %v1641 = vadd.f32 %v1637, %v1640
        %1642 = vst.msk [vmem:[%s1187] sm:$0xff] %vm287, %v1641
        %v1643 = vld [vmem:[%s4 + $0x28] sm:$0xff]
        %v1644 = vld [vmem:[%s1196] sm:$0xff]
        %v1645 = vmul.f32 %v1452, %v1465
        %v1646 = vperm.slane %v1643, 0
        %v1647 = vmul.f32 %v1645, %v1646
        %v1648 = vadd.f32 %v1644, %v1647
        %v1649 = vmul.f32 %v1453, %v1463
        %v1650 = vperm.slane %v1643, 1
        %v1651 = vmul.f32 %v1649, %v1650
        %v1652 = vadd.f32 %v1648, %v1651
        %v1653 = vmul.f32 %v1454, %v1467
        %v1654 = vperm.slane %v1643, 2
        %v1655 = vmul.f32 %v1653, %v1654
        %v1656 = vadd.f32 %v1652, %v1655
        %v1657 = vmul.f32 %v1455, %v1461
        %v1658 = vperm.slane %v1643, 3
        %v1659 = vmul.f32 %v1657, %v1658
        %v1660 = vadd.f32 %v1656, %v1659
        %v1661 = vmul.f32 %v1456, %v1466
        %v1662 = vperm.slane %v1643, 4
        %v1663 = vmul.f32 %v1661, %v1662
        %v1664 = vadd.f32 %v1660, %v1663
        %v1665 = vmul.f32 %v1457, %v1460
        %v1666 = vperm.slane %v1643, 5
        %v1667 = vmul.f32 %v1665, %v1666
        %v1668 = vadd.f32 %v1664, %v1667
        %v1669 = vmul.f32 %v1458, %v1464
        %v1670 = vperm.slane %v1643, 6
        %v1671 = vmul.f32 %v1669, %v1670
        %v1672 = vadd.f32 %v1668, %v1671
        %v1673 = vmul.f32 %v1459, %v1462
        %v1674 = vperm.slane %v1643, 7
        %v1675 = vmul.f32 %v1673, %v1674
        %v1676 = vadd.f32 %v1672, %v1675
        %1677 = vst.msk [vmem:[%s1196] sm:$0xff] %vm287, %v1676
        %v1678 = vld [vmem:[%s4 + $0x30] sm:$0xff]
        %v1679 = vld [vmem:[%s1205] sm:$0xff]
        %v1680 = vmul.f32 %v1452, %v1466
        %v1681 = vperm.slane %v1678, 0
        %v1682 = vmul.f32 %v1680, %v1681
        %v1683 = vadd.f32 %v1679, %v1682
        %v1684 = vmul.f32 %v1453, %v1467
        %v1685 = vperm.slane %v1678, 1
        %v1686 = vmul.f32 %v1684, %v1685
        %v1687 = vadd.f32 %v1683, %v1686
        %v1688 = vmul.f32 %v1454, %v1463
        %v1689 = vperm.slane %v1678, 2
        %v1690 = vmul.f32 %v1688, %v1689
        %v1691 = vadd.f32 %v1687, %v1690
        %v1692 = vmul.f32 %v1455, %v1462
        %v1693 = vperm.slane %v1678, 3
        %v1694 = vmul.f32 %v1692, %v1693
        %v1695 = vadd.f32 %v1691, %v1694
        %v1696 = vmul.f32 %v1456, %v1465
        %v1697 = vperm.slane %v1678, 4
        %v1698 = vmul.f32 %v1696, %v1697
        %v1699 = vadd.f32 %v1695, %v1698
        %v1700 = vmul.f32 %v1457, %v1464
        %v1701 = vperm.slane %v1678, 5
        %v1702 = vmul.f32 %v1700, %v1701
        %v1703 = vadd.f32 %v1699, %v1702
        %v1704 = vmul.f32 %v1458, %v1460
        %v1705 = vperm.slane %v1678, 6
        %v1706 = vmul.f32 %v1704, %v1705
        %v1707 = vadd.f32 %v1703, %v1706
        %v1708 = vmul.f32 %v1459, %v1461
        %v1709 = vperm.slane %v1678, 7
        %v1710 = vmul.f32 %v1708, %v1709
        %v1711 = vadd.f32 %v1707, %v1710
        %1712 = vst.msk [vmem:[%s1205] sm:$0xff] %vm287, %v1711
        %v1713 = vld [vmem:[%s4 + $0x38] sm:$0xff]
        %v1714 = vld [vmem:[%s1450] sm:$0xff]
        %v1715 = vmul.f32 %v1452, %v1467
        %v1716 = vperm.slane %v1713, 0
        %v1717 = vmul.f32 %v1715, %v1716
        %v1718 = vadd.f32 %v1714, %v1717
        %v1719 = vmul.f32 %v1453, %v1466
        %v1720 = vperm.slane %v1713, 1
        %v1721 = vmul.f32 %v1719, %v1720
        %v1722 = vadd.f32 %v1718, %v1721
        %v1723 = vmul.f32 %v1454, %v1465
        %v1724 = vperm.slane %v1713, 2
        %v1725 = vmul.f32 %v1723, %v1724
        %v1726 = vadd.f32 %v1722, %v1725
        %v1727 = vmul.f32 %v1455, %v1464
        %v1728 = vperm.slane %v1713, 3
        %v1729 = vmul.f32 %v1727, %v1728
        %v1730 = vadd.f32 %v1726, %v1729
        %v1731 = vmul.f32 %v1456, %v1463
        %v1732 = vperm.slane %v1713, 4
        %v1733 = vmul.f32 %v1731, %v1732
        %v1734 = vadd.f32 %v1730, %v1733
        %v1735 = vmul.f32 %v1457, %v1462
        %v1736 = vperm.slane %v1713, 5
        %v1737 = vmul.f32 %v1735, %v1736
        %v1738 = vadd.f32 %v1734, %v1737
        %v1739 = vmul.f32 %v1458, %v1461
        %v1740 = vperm.slane %v1713, 6
        %v1741 = vmul.f32 %v1739, %v1740
        %v1742 = vadd.f32 %v1738, %v1741
        %v1743 = vmul.f32 %v1459, %v1460
        %v1744 = vperm.slane %v1713, 7
        %v1745 = vmul.f32 %v1743, %v1744
        %v1746 = vadd.f32 %v1742, %v1745
        %1747 = vst.msk [vmem:[%s1450] sm:$0xff] %vm287, %v1746
        %s1748 = sand.u32 %s134, 1
        %s1749 = sand.u32 %s134, 1
        %s1750 = smul.addr %s1749, 64
        %s1751 = scalar_lea.vmem [#allocation4], %s1750
        // Predicated region
        $region79: #{steerable_geometric_product.1} parent=73 // pred_check
          %p1752 = pneg %p144
        $region80: #{steerable_geometric_product.1} parent=73 // pred_check_branch
          %1754 = sbr.rel (%p1752) target = $region82
        $region81: #{steerable_geometric_product.1} parent=73 // pred_region
          %s1755 = smul.addr %s16, 8
          %s1756 = scalar_lea.vmem %s5, %s1755
          // Predicated region
          $region83: #{steerable_geometric_product.1} parent=81 // pred_check
            _
          $region84: #{steerable_geometric_product.1} parent=81 // pred_check_branch
            %1758 = sbr.rel (0) target = $region86
          $region85: #{steerable_geometric_product.1} parent=81 // pred_region
            // Predicated region
            $region87: #{steerable_geometric_product.1} parent=85 // pred_check
              _
            $region88: #{steerable_geometric_product.1} parent=85 // pred_check_branch
              %1760 = sbr.rel (0) target = $region90
            $region89: #{steerable_geometric_product.1} parent=85 // pred_region
              // Predicated region
              $region102: #{steerable_geometric_product.1} parent=89 // pred_check
                _
              $region103: #{steerable_geometric_product.1} parent=89 // pred_check_branch
                %1790 = sbr.rel (0) target = $region105
              $region104: #{steerable_geometric_product.1} parent=89 // pred_region
                loop: start=0, step=1, limit=1
                $region106: #{steerable_geometric_product.1} parent=104 // loop_pre_header
                  _
                $region107: #{steerable_geometric_product.1} parent=104 // loop_header
                  %s1792 = sphi 0, %s1796
                  %p1793 = scmp.ge.s32.totalorder %s1792, 1
                  %s1797 = sphi %s1751, %s1751
                  %s1798 = sphi %s1756, %s1756
                $region108: #{steerable_geometric_product.1} parent=104 // loop_header_branch
                  %1795 = sbr.rel (%p1793) target = $region112
                $region109: #{steerable_geometric_product.1} parent=104 // loop_body
                  %v1799 = vld [vmem:[%s1797] sm:$0xff]
                  %1800 = vst [vmem:[%s1798] sm:$0xff] %v1799
                  %v1801 = vld [vmem:[%s1797 + $0x8] sm:$0xff]
                  %1802 = vst [vmem:[%s1798 + $0x10] sm:$0xff] %v1801
                  %v1803 = vld [vmem:[%s1797 + $0x10] sm:$0xff]
                  %1804 = vst [vmem:[%s1798 + $0x20] sm:$0xff] %v1803
                  %v1805 = vld [vmem:[%s1797 + $0x18] sm:$0xff]
                  %1806 = vst [vmem:[%s1798 + $0x30] sm:$0xff] %v1805
                  %v1807 = vld [vmem:[%s1797 + $0x20] sm:$0xff]
                  %1808 = vst [vmem:[%s1798 + $0x40] sm:$0xff] %v1807
                  %v1809 = vld [vmem:[%s1797 + $0x28] sm:$0xff]
                  %1810 = vst [vmem:[%s1798 + $0x50] sm:$0xff] %v1809
                  %v1811 = vld [vmem:[%s1797 + $0x30] sm:$0xff]
                  %1812 = vst [vmem:[%s1798 + $0x60] sm:$0xff] %v1811
                  %v1813 = vld [vmem:[%s1797 + $0x38] sm:$0xff]
                  %1814 = vst [vmem:[%s1798 + $0x70] sm:$0xff] %v1813
                $region110: #{steerable_geometric_product.1} parent=104 // loop_footer
                  %s1796 = sadd.s32 1, %s1792
                $region111: #{steerable_geometric_product.1} parent=104 // loop_footer_branch
                  %1791 = sbr.rel target = $region107
                $region112: #{steerable_geometric_product.1} parent=104 // loop_exit
                  _
              $region105: #{steerable_geometric_product.1} parent=89 // pred_fallthru
                _
              // Predicated region
              $region113: #{steerable_geometric_product.1} parent=89 // pred_check
                _
              $region114: #{steerable_geometric_product.1} parent=89 // pred_check_branch
                %1816 = sbr.rel target = $region116
              $region115: #{steerable_geometric_product.1} parent=89 // pred_region
                _
              $region116: #{steerable_geometric_product.1} parent=89 // pred_fallthru
                _
            $region90: #{steerable_geometric_product.1} parent=85 // pred_fallthru
              _
            // Predicated region
            $region91: #{steerable_geometric_product.1} parent=85 // pred_check
              _
            $region92: #{steerable_geometric_product.1} parent=85 // pred_check_branch
              %1762 = sbr.rel target = $region94
            $region93: #{steerable_geometric_product.1} parent=85 // pred_region
              %s1764 = ssub.s32 256, 1
              loop: start=0, step=1, limit=1
              $region95: #{steerable_geometric_product.1} parent=93 // loop_pre_header
                _
              $region96: #{steerable_geometric_product.1} parent=93 // loop_header
                %s1766 = sphi 0, %s1770
                %p1767 = scmp.ge.s32.totalorder %s1766, 1
                %s1771 = sphi %s1751, %s1751
                %s1772 = sphi %s1756, %s1756
              $region97: #{steerable_geometric_product.1} parent=93 // loop_header_branch
                %1769 = sbr.rel (%p1767) target = $region101
              $region98: #{steerable_geometric_product.1} parent=93 // loop_body
                %v1773 = vld [vmem:[%s1771] sm:%s1764]
                %1774 = vst [vmem:[%s1772] sm:%s1764] %v1773
                %v1775 = vld [vmem:[%s1771 + $0x8] sm:%s1764]
                %1776 = vst [vmem:[%s1772 + $0x10] sm:%s1764] %v1775
                %v1777 = vld [vmem:[%s1771 + $0x10] sm:%s1764]
                %1778 = vst [vmem:[%s1772 + $0x20] sm:%s1764] %v1777
                %v1779 = vld [vmem:[%s1771 + $0x18] sm:%s1764]
                %1780 = vst [vmem:[%s1772 + $0x30] sm:%s1764] %v1779
                %v1781 = vld [vmem:[%s1771 + $0x20] sm:%s1764]
                %1782 = vst [vmem:[%s1772 + $0x40] sm:%s1764] %v1781
                %v1783 = vld [vmem:[%s1771 + $0x28] sm:%s1764]
                %1784 = vst [vmem:[%s1772 + $0x50] sm:%s1764] %v1783
                %v1785 = vld [vmem:[%s1771 + $0x30] sm:%s1764]
                %1786 = vst [vmem:[%s1772 + $0x60] sm:%s1764] %v1785
                %v1787 = vld [vmem:[%s1771 + $0x38] sm:%s1764]
                %1788 = vst [vmem:[%s1772 + $0x70] sm:%s1764] %v1787
              $region99: #{steerable_geometric_product.1} parent=93 // loop_footer
                %s1770 = sadd.s32 1, %s1766
              $region100: #{steerable_geometric_product.1} parent=93 // loop_footer_branch
                %1765 = sbr.rel target = $region96
              $region101: #{steerable_geometric_product.1} parent=93 // loop_exit
                _
            $region94: #{steerable_geometric_product.1} parent=85 // pred_fallthru
              _
          $region86: #{steerable_geometric_product.1} parent=81 // pred_fallthru
            _
          %1817 = vnop
        $region82: #{steerable_geometric_product.1} parent=73 // pred_fallthru
          _
      $region74: #{steerable_geometric_product.1} parent=5 // pred_fallthru
        _
      %p1818 = scmp.le.s32.totalorder 2, %s11
      // Predicated region
      $region117: #{steerable_geometric_product.1} parent=5 // pred_check
        %p1819 = pneg %p1818
      $region118: #{steerable_geometric_product.1} parent=5 // pred_check_branch
        %1821 = sbr.rel (%p1819) target = $region120
      $region119: #{steerable_geometric_product.1} parent=5 // pred_region
        %s1822 = ssub.s32 %s11, 2
        // Predicated region
        $region121: #{steerable_geometric_product.1} parent=119 // pred_check
          %p1823 = pneg %p150
        $region122: #{steerable_geometric_product.1} parent=119 // pred_check_branch
          %1825 = sbr.rel (%p1823) target = $region124
        $region123: #{steerable_geometric_product.1} parent=119 // pred_region
          %s1826 = sand.u32 %s135, 1
          %s1827 = sand.u32 %s135, 1
          %s1828 = smul.addr %s1827, 64
          %s1829 = scalar_lea.vmem [#allocation4], %s1828
        $region124: #{steerable_geometric_product.1} parent=119 // pred_fallthru
          _
      $region120: #{steerable_geometric_product.1} parent=5 // pred_fallthru
        _
    $region6: #{steerable_geometric_product.1} parent=1 // loop_footer
      %s15 = sadd.s32 1, %s11
    $region7: #{steerable_geometric_product.1} parent=1 // loop_footer_branch
      %10 = sbr.rel target = $region3
    $region8: #{steerable_geometric_product.1} parent=1 // loop_exit
      _

</llo_original>
